<compile_context>
chip_gen: v7x
topology: tpu7x:2x2x1
jax: 0.10.0
libtpu: 0.0.40
codegen_flags: <defaults>
</compile_context>

<pallas_src>
import functools
import math

import jax
import jax.numpy as jnp
import numpy as np
from jax.experimental import pallas as pl
from jax.experimental.pallas import tpu as pltpu


def _block_kernel(
    x_ref,                    # (Bt, L, D)
    ln1_g_ref, ln1_b_ref,     # (1, D)
    wqkv_ref, bqkv_ref,       # (D, 3D), (1, 3D)
    wo_ref, bo_ref,           # (D, D),  (1, D)
    ln2_g_ref, ln2_b_ref,     # (1, D)
    wfc_ref, bfc_ref,         # (D, 4D), (1, 4D)
    wpr_ref, bpr_ref,         # (4D, D), (1, D)
    y_ref,                    # (Bt, L, D)
    *rest,                    # [attn_ref (Bt, L, L)] if need_weights
    n_head: int,
    need_weights: bool,
):
    if need_weights:
        (attn_ref,) = rest

    eps = 1e-5
    f32 = jnp.float32
    Bt, L, D = x_ref.shape
    hd = D // n_head
    scale = 1.0 / math.sqrt(hd)
    cdtype = wqkv_ref.dtype           # MXU-operand dtype follows the weights

    # Collapse (batch_tile, seq) -> rows so projections / MLP are tall matmuls.
    x = x_ref[...].reshape(Bt * L, D)
    x32 = x.astype(f32)

    def layer_norm(v32, g_ref, b_ref):
        mu = jnp.mean(v32, axis=-1, keepdims=True)
        var = jnp.mean((v32 - mu) ** 2, axis=-1, keepdims=True)
        out = (v32 - mu) * jax.lax.rsqrt(var + eps)
        return out * g_ref[...].astype(f32) + b_ref[...].astype(f32)

    # --- ln_1 (fp32 math, cast back to compute dtype for the MXU) ---
    xn = layer_norm(x32, ln1_g_ref, ln1_b_ref).astype(cdtype)

    # --- fused QKV projection: one (Bt*L, D) @ (D, 3D) matmul, ONE downcast ---
    qkv = (jnp.dot(xn, wqkv_ref[...], preferred_element_type=f32)
           + bqkv_ref[...].astype(f32)).astype(cdtype)           # (Bt*L, 3D)

    # Fold 1/sqrt(hd) into q (cheaper than scaling each (L, L) score matrix).
    q3 = (qkv[:, 0:D] * scale).reshape(Bt, L, D)
    k3 = qkv[:, D:2 * D].reshape(Bt, L, D)
    v3 = qkv[:, 2 * D:3 * D].reshape(Bt, L, D)

    # --- per-head attention, batched over the batch tile with 3-D einsums ---
    # TODO(synk): attn_mask / key_padding_mask (None in the default forward)
    #             are not implemented (vision / mask-free path only).
    if need_weights:
        w_sum = jnp.zeros((Bt, L, L), f32)
    o_heads = []
    for h in range(n_head):
        c0 = h * hd
        qh = q3[:, :, c0:c0 + hd]
        kh = k3[:, :, c0:c0 + hd]
        vh = v3[:, :, c0:c0 + hd]
        s = jnp.einsum('bld,bmd->blm', qh, kh,
                       preferred_element_type=f32)               # (Bt, L, L)
        s = s - jnp.max(s, axis=-1, keepdims=True)
        e = jnp.exp(s)
        denom = jnp.sum(e, axis=-1, keepdims=True)
        if need_weights:
            p = e / denom                       # exact: weights row-sum to 1
            w_sum = w_sum + p
        else:
            p = e * pl.reciprocal(denom, approx=True)   # EUP slot, fast path
        oh = jnp.einsum('blm,bmd->bld', p.astype(cdtype), vh,
                        preferred_element_type=f32)              # (Bt, L, hd)
        o_heads.append(oh.astype(cdtype))

    # --- single full-K output projection over all rows / all heads ---
    o = jnp.concatenate(o_heads, axis=-1).reshape(Bt * L, D)
    attn_out = jnp.dot(o, wo_ref[...], preferred_element_type=f32) \
        + bo_ref[...].astype(f32)

    # --- first residual (fp32) ---
    x1 = x32 + attn_out

    # --- ln_2 + MLP (c_fc -> QuickGELU -> c_proj) ---
    x2n = layer_norm(x1, ln2_g_ref, ln2_b_ref).astype(cdtype)
    hmid = jnp.dot(x2n, wfc_ref[...], preferred_element_type=f32) \
        + bfc_ref[...].astype(f32)
    hmid = hmid * jax.nn.sigmoid(1.702 * hmid)            # QuickGELU (fp32)
    mlp = jnp.dot(hmid.astype(cdtype), wpr_ref[...], preferred_element_type=f32) \
        + bpr_ref[...].astype(f32)

    # --- second residual ---
    y_ref[...] = (x1 + mlp).reshape(Bt, L, D).astype(y_ref.dtype)
    if need_weights:
        attn_ref[...] = (w_sum * (1.0 / n_head)).astype(attn_ref.dtype)


def _pick_tiling(N, L, D, x_itemsize, w_itemsize, need_weights):
    """Choose (b_tile, vmem_limit_bytes) from the chip's actual VMEM budget."""
    try:
        vmem_cap = int(pltpu.get_tpu_info().vmem_capacity_bytes)
    except Exception:
        vmem_cap = 64 * 1024 * 1024          # conservative (v7x per-core)
    vmem_limit = min(int(vmem_cap * 0.9), vmem_cap - (2 << 20))
    budget = int(vmem_cap * 0.75)            # headroom for compiler temporaries

    # Resident (ideally single-buffered) weights + biases.
    weight_bytes = (12 * D * D + 14 * D) * w_itemsize

    # Rough per-batch-row activation footprint per grid step.
    c = w_itemsize
    row = (4 * L * D * x_itemsize            # x in / y out (double-buffered)
           + 3 * L * D * 4                   # x32, x1, attn_out (fp32)
           + 3 * L * D * c                   # qkv (compute dtype)
           + 4 * L * D * (4 + c)             # MLP hidden (fp32 + cdtype copy)
           + L * D * (4 + c)                 # head outputs + concat
           + 4 * L * L * 4)                  # score / prob temporaries
    if need_weights:
        row += 2 * L * L * x_itemsize + L * L * 4

    b_tile = 1
    for cand in (16, 8, 4, 2, 1):
        if N % cand == 0 and weight_bytes + cand * row <= budget:
            b_tile = cand
            break
    # Keep >= 2 grid steps when possible so "parallel" can shard across cores.
    while b_tile > 1 and N // b_tile < 2:
        b_tile //= 2
    return b_tile, vmem_limit


def residual_attention_block(x_lnd, params, n_head, *, need_weights=True,
                             b_tile=None, param_dtype=None):
    """x_lnd: (L, N, D) like PyTorch nn.MultiheadAttention (batch_first=False).

    params = (ln1_g, ln1_b, wqkv, bqkv, wo, bo, ln2_g, ln2_b, wfc, bfc, wpr, bpr)
    with weight matrices in "x @ W" layout (i.e. PyTorch weights transposed).
    Returns (y (L, N, D), attn_weights (N, L, L)) if need_weights else y."""
    L, N, D = x_lnd.shape
    x = jnp.transpose(x_lnd, (1, 0, 2))   # (N, L, D) for the kernel

    (ln1_g, ln1_b, wqkv, bqkv, wo, bo,
     ln2_g, ln2_b, wfc, bfc, wpr, bpr) = params

    if param_dtype is not None:
        # e.g. jnp.bfloat16: halves weight VMEM residency and runs the MXU at
        # its native rate; fp32 accumulation is kept inside the kernel.
        wqkv, wo, wfc, wpr = (w.astype(param_dtype) for w in (wqkv, wo, wfc, wpr))

    x_isz = jnp.dtype(x.dtype).itemsize
    w_isz = jnp.dtype(wqkv.dtype).itemsize
    bt_auto, vmem_limit = _pick_tiling(N, L, D, x_isz, w_isz, need_weights)
    if b_tile is None:
        b_tile = bt_auto
    assert N % b_tile == 0, (N, b_tile)

    kernel = functools.partial(_block_kernel, n_head=n_head,
                               need_weights=need_weights)

    y_spec = pl.BlockSpec((b_tile, L, D), lambda i: (i, 0, 0))
    if need_weights:
        out_shape = (jax.ShapeDtypeStruct((N, L, D), x.dtype),
                     jax.ShapeDtypeStruct((N, L, L), x.dtype))
        out_specs = (y_spec, pl.BlockSpec((b_tile, L, L), lambda i: (i, 0, 0)))
    else:
        out_shape = jax.ShapeDtypeStruct((N, L, D), x.dtype)
        out_specs = y_spec

    def build(single_buffer_weights):
        if single_buffer_weights:
            # Constant-index weights/biases never change across grid steps:
            # request a single VMEM buffer instead of the default double buffer.
            def wspec(shape):
                return pl.BlockSpec(shape, lambda i: (0,) * len(shape),
                                    pipeline_mode=pl.Buffered(1))
        else:
            def wspec(shape):
                return pl.BlockSpec(shape, lambda i: (0,) * len(shape))
        return pl.pallas_call(
            kernel,
            out_shape=out_shape,
            grid_spec=pltpu.PrefetchScalarGridSpec(
                num_scalar_prefetch=0,
                grid=(N // b_tile,),
                in_specs=[
                    pl.BlockSpec((b_tile, L, D), lambda i: (i, 0, 0)),
                    wspec((1, D)), wspec((1, D)),
                    wspec((D, 3 * D)), wspec((1, 3 * D)),
                    wspec((D, D)), wspec((1, D)),
                    wspec((1, D)), wspec((1, D)),
                    wspec((D, 4 * D)), wspec((1, 4 * D)),
                    wspec((4 * D, D)), wspec((1, D)),
                ],
                out_specs=out_specs,
            ),
            compiler_params=pltpu.CompilerParams(
                dimension_semantics=("parallel",),
                vmem_limit_bytes=vmem_limit,
            ),
        )

    args = (x, ln1_g, ln1_b, wqkv, bqkv, wo, bo, ln2_g, ln2_b, wfc, bfc, wpr, bpr)
    try:
        outs = build(True)(*args)
    except Exception:
        # pipeline_mode=pl.Buffered(1) unsupported on this jax build: fall back
        # to the (previously validated) default double-buffered weight specs.
        outs = build(False)(*args)

    if need_weights:
        y, attn_w = outs
        return jnp.transpose(y, (1, 0, 2)), attn_w
    return jnp.transpose(outs, (1, 0, 2))


# ----------------------------- reference (pure JAX) -----------------------------
def _reference(x_lnd, params, n_head):
    (ln1_g, ln1_b, wqkv, bqkv, wo, bo,
     ln2_g, ln2_b, wfc, bfc, wpr, bpr) = params
    L, N, D = x_lnd.shape
    hd = D // n_head
    eps = 1e-5

    def ln(v, g, b):
        mu = jnp.mean(v, -1, keepdims=True)
        var = jnp.mean((v - mu) ** 2, -1, keepdims=True)
        return (v - mu) / jnp.sqrt(var + eps) * g[0] + b[0]

    x = jnp.transpose(x_lnd, (1, 0, 2))                 # (N, L, D)
    xn = ln(x, ln1_g, ln1_b)
    qkv = xn @ wqkv + bqkv[0]                           # (N, L, 3D)
    q, k, v = qkv[..., :D], qkv[..., D:2 * D], qkv[..., 2 * D:]

    def split(t):  # (N, L, D) -> (N, H, L, hd)
        return jnp.transpose(t.reshape(N, L, n_head, hd), (0, 2, 1, 3))

    qh, kh, vh = split(q), split(k), split(v)
    s = jnp.einsum("nhld,nhmd->nhlm", qh / jnp.sqrt(hd), kh)
    p = jax.nn.softmax(s, axis=-1)
    o = jnp.einsum("nhlm,nhmd->nhld", p, vh)
    o = jnp.transpose(o, (0, 2, 1, 3)).reshape(N, L, D)
    attn_out = o @ wo + bo[0]
    x1 = x + attn_out
    h = ln(x1, ln2_g, ln2_b) @ wfc + bfc[0]
    h = h * jax.nn.sigmoid(1.702 * h)
    y = x1 + h @ wpr + bpr[0]
    return jnp.transpose(y, (1, 0, 2)), jnp.mean(p, axis=1)


if __name__ == "__main__":
    # small shapes: seq L=8, batch N=2, d_model D=32, n_head=4
    L, N, D, H = 8, 2, 32, 4
    key = jax.random.PRNGKey(0)
    ks = jax.random.split(key, 16)

    def nrm(k, shape, s=0.1):
        return (s * jax.random.normal(k, shape)).astype(jnp.float32)

    x = nrm(ks[0], (L, N, D), 1.0)

    params = (
        jnp.ones((1, D), jnp.float32),            # ln1 gamma
        jnp.zeros((1, D), jnp.float32),           # ln1 beta
        nrm(ks[1], (D, 3 * D)),                   # in-proj weight (D, 3D), cols = [q|k|v]
        nrm(ks[2], (1, 3 * D)),                   # in-proj bias
        nrm(ks[3], (D, D)),                       # out-proj weight
        nrm(ks[4], (1, D)),                       # out-proj bias
        jnp.ones((1, D), jnp.float32),            # ln2 gamma
        jnp.zeros((1, D), jnp.float32),           # ln2 beta
        nrm(ks[5], (D, 4 * D)),                   # mlp c_fc weight
        nrm(ks[6], (1, 4 * D)),                   # mlp c_fc bias
        nrm(ks[7], (4 * D, D)),                   # mlp c_proj weight
        nrm(ks[8], (1, D)),                       # mlp c_proj bias
    )

    y, attn_w = residual_attention_block(x, params, H)
    jax.block_until_ready((y, attn_w))

    y_ref, attn_ref = _reference(x, params, H)
    # need_weights path uses the exact softmax normalization -> tight tolerance.
    assert np.allclose(np.asarray(y), np.asarray(y_ref), atol=1e-4, rtol=1e-4)
    assert np.allclose(np.asarray(attn_w), np.asarray(attn_ref), atol=1e-4, rtol=1e-4)

    # no-weights fast path (skips the (N, L, L) writeback, approx reciprocal)
    y2 = residual_attention_block(x, params, H, need_weights=False)
    jax.block_until_ready(y2)
    assert np.allclose(np.asarray(y2), np.asarray(y_ref), atol=2e-3, rtol=2e-3)

    print("KERNEL_OK")
</pallas_src>

<mosaic_0001>
module attributes {stable_mosaic.version = 11 : i64} {
  func.func @_block_kernel(%arg0: i32, %arg1: memref<1x8x32xf32, #tpu.memory_space<vmem>>, %arg2: memref<1x32xf32, #tpu.memory_space<vmem>>, %arg3: memref<1x32xf32, #tpu.memory_space<vmem>>, %arg4: memref<32x96xf32, #tpu.memory_space<vmem>>, %arg5: memref<1x96xf32, #tpu.memory_space<vmem>>, %arg6: memref<32x32xf32, #tpu.memory_space<vmem>>, %arg7: memref<1x32xf32, #tpu.memory_space<vmem>>, %arg8: memref<1x32xf32, #tpu.memory_space<vmem>>, %arg9: memref<1x32xf32, #tpu.memory_space<vmem>>, %arg10: memref<32x128xf32, #tpu.memory_space<vmem>>, %arg11: memref<1x128xf32, #tpu.memory_space<vmem>>, %arg12: memref<128x32xf32, #tpu.memory_space<vmem>>, %arg13: memref<1x32xf32, #tpu.memory_space<vmem>>, %arg14: memref<1x8x32xf32, #tpu.memory_space<vmem>>, %arg15: memref<1x8x8xf32, #tpu.memory_space<vmem>>) attributes {dimension_semantics = [#tpu.dimension_semantics<parallel>], iteration_bounds = array<i64: 2>, scalar_prefetch = 0 : i64, scratch_operands = 0 : i64, tpu.core_type = #tpu.core_type<tc>, window_params = [{transform_indices = @transform_0, window_bounds = array<i64: 1, 8, 32>}, {pipeline_mode = #tpu.pipeline_mode<synchronous>, transform_indices = @transform_1, window_bounds = array<i64: 1, 32>}, {pipeline_mode = #tpu.pipeline_mode<synchronous>, transform_indices = @transform_2, window_bounds = array<i64: 1, 32>}, {pipeline_mode = #tpu.pipeline_mode<synchronous>, transform_indices = @transform_3, window_bounds = array<i64: 32, 96>}, {pipeline_mode = #tpu.pipeline_mode<synchronous>, transform_indices = @transform_4, window_bounds = array<i64: 1, 96>}, {pipeline_mode = #tpu.pipeline_mode<synchronous>, transform_indices = @transform_5, window_bounds = array<i64: 32, 32>}, {pipeline_mode = #tpu.pipeline_mode<synchronous>, transform_indices = @transform_6, window_bounds = array<i64: 1, 32>}, {pipeline_mode = #tpu.pipeline_mode<synchronous>, transform_indices = @transform_7, window_bounds = array<i64: 1, 32>}, {pipeline_mode = #tpu.pipeline_mode<synchronous>, transform_indices = @transform_8, window_bounds = array<i64: 1, 32>}, {pipeline_mode = #tpu.pipeline_mode<synchronous>, transform_indices = @transform_9, window_bounds = array<i64: 32, 128>}, {pipeline_mode = #tpu.pipeline_mode<synchronous>, transform_indices = @transform_10, window_bounds = array<i64: 1, 128>}, {pipeline_mode = #tpu.pipeline_mode<synchronous>, transform_indices = @transform_11, window_bounds = array<i64: 128, 32>}, {pipeline_mode = #tpu.pipeline_mode<synchronous>, transform_indices = @transform_12, window_bounds = array<i64: 1, 32>}, {transform_indices = @transform_13, window_bounds = array<i64: 1, 8, 32>}, {transform_indices = @transform_14, window_bounds = array<i64: 1, 8, 8>}]} {
    %c0 = arith.constant 0 : index
    %c0_0 = arith.constant 0 : index
    %c0_1 = arith.constant 0 : index
    %0 = vector.load %arg1[%c0, %c0_0, %c0_1] : memref<1x8x32xf32, #tpu.memory_space<vmem>>, vector<1x8x32xf32>
    %1 = vector.shape_cast %0 : vector<1x8x32xf32> to vector<8x32xf32>
    %cst = arith.constant dense<0.000000e+00> : vector<8xf32>
    %2 = vector.multi_reduction <add>, %1, %cst [1] : vector<8x32xf32> to vector<8xf32>
    %3 = vector.shape_cast %2 : vector<8xf32> to vector<8x1xf32>
    %cst_2 = arith.constant 3.200000e+01 : f32
    %4 = vector.broadcast %cst_2 : f32 to vector<8x1xf32>
    %5 = arith.divf %3, %4 : vector<8x1xf32>
    %6 = vector.broadcast %5 : vector<8x1xf32> to vector<8x32xf32>
    %7 = arith.subf %1, %6 : vector<8x32xf32>
    %8 = arith.mulf %7, %7 : vector<8x32xf32>
    %cst_3 = arith.constant dense<0.000000e+00> : vector<8xf32>
    %9 = vector.multi_reduction <add>, %8, %cst_3 [1] : vector<8x32xf32> to vector<8xf32>
    %10 = vector.shape_cast %9 : vector<8xf32> to vector<8x1xf32>
    %cst_4 = arith.constant 3.200000e+01 : f32
    %11 = vector.broadcast %cst_4 : f32 to vector<8x1xf32>
    %12 = arith.divf %10, %11 : vector<8x1xf32>
    %13 = vector.broadcast %5 : vector<8x1xf32> to vector<8x32xf32>
    %14 = arith.subf %1, %13 : vector<8x32xf32>
    %cst_5 = arith.constant 9.99999974E-6 : f32
    %15 = vector.broadcast %cst_5 : f32 to vector<8x1xf32>
    %16 = arith.addf %12, %15 : vector<8x1xf32>
    %17 = math.rsqrt %16 : vector<8x1xf32>
    %18 = vector.broadcast %17 : vector<8x1xf32> to vector<8x32xf32>
    %19 = arith.mulf %14, %18 : vector<8x32xf32>
    %c0_6 = arith.constant 0 : index
    %c0_7 = arith.constant 0 : index
    %20 = vector.load %arg2[%c0_6, %c0_7] : memref<1x32xf32, #tpu.memory_space<vmem>>, vector<1x32xf32>
    %21 = vector.broadcast %20 : vector<1x32xf32> to vector<8x32xf32>
    %22 = arith.mulf %19, %21 : vector<8x32xf32>
    %c0_8 = arith.constant 0 : index
    %c0_9 = arith.constant 0 : index
    %23 = vector.load %arg3[%c0_8, %c0_9] : memref<1x32xf32, #tpu.memory_space<vmem>>, vector<1x32xf32>
    %24 = vector.broadcast %23 : vector<1x32xf32> to vector<8x32xf32>
    %25 = arith.addf %22, %24 : vector<8x32xf32>
    %c0_10 = arith.constant 0 : index
    %c0_11 = arith.constant 0 : index
    %26 = vector.load %arg4[%c0_10, %c0_11] : memref<32x96xf32, #tpu.memory_space<vmem>>, vector<32x96xf32>
    %cst_12 = arith.constant dense<0.000000e+00> : vector<8x96xf32>
    %27 = tpu.matmul %25, %26, %cst_12 {dimension_numbers = #tpu.dot_dimension_numbers<[1], [0], [0], [1], [0, 0, 1, 1], [], []>} : vector<8x32xf32>, vector<32x96xf32>, vector<8x96xf32> -> vector<8x96xf32>
    %c0_13 = arith.constant 0 : index
    %c0_14 = arith.constant 0 : index
    %28 = vector.load %arg5[%c0_13, %c0_14] : memref<1x96xf32, #tpu.memory_space<vmem>>, vector<1x96xf32>
    %29 = vector.broadcast %28 : vector<1x96xf32> to vector<8x96xf32>
    %30 = arith.addf %27, %29 : vector<8x96xf32>
    %31 = vector.extract_strided_slice %30 {offsets = [0, 0], sizes = [8, 32], strides = [1, 1]} : vector<8x96xf32> to vector<8x32xf32>
    %cst_15 = arith.constant 0.353553385 : f32
    %32 = vector.broadcast %cst_15 : f32 to vector<8x32xf32>
    %33 = arith.mulf %31, %32 : vector<8x32xf32>
    %34 = vector.shape_cast %33 : vector<8x32xf32> to vector<1x8x32xf32>
    %35 = vector.extract_strided_slice %30 {offsets = [0, 32], sizes = [8, 32], strides = [1, 1]} : vector<8x96xf32> to vector<8x32xf32>
    %36 = vector.shape_cast %35 : vector<8x32xf32> to vector<1x8x32xf32>
    %37 = vector.extract_strided_slice %30 {offsets = [0, 64], sizes = [8, 32], strides = [1, 1]} : vector<8x96xf32> to vector<8x32xf32>
    %38 = vector.shape_cast %37 : vector<8x32xf32> to vector<1x8x32xf32>
    %cst_16 = arith.constant 0.000000e+00 : f32
    %39 = vector.broadcast %cst_16 : f32 to vector<1x8x8xf32>
    %40 = vector.extract_strided_slice %34 {offsets = [0, 0, 0], sizes = [1, 8, 8], strides = [1, 1, 1]} : vector<1x8x32xf32> to vector<1x8x8xf32>
    %41 = vector.extract_strided_slice %36 {offsets = [0, 0, 0], sizes = [1, 8, 8], strides = [1, 1, 1]} : vector<1x8x32xf32> to vector<1x8x8xf32>
    %42 = vector.extract_strided_slice %38 {offsets = [0, 0, 0], sizes = [1, 8, 8], strides = [1, 1, 1]} : vector<1x8x32xf32> to vector<1x8x8xf32>
    "tpu.trace_start"() <{level = 10 : i32, message = "bld,bmd->blm"}> : () -> ()
    %cst_17 = arith.constant dense<0.000000e+00> : vector<1x8x8xf32>
    %43 = tpu.matmul %40, %41, %cst_17 {dimension_numbers = #tpu.dot_dimension_numbers<[2], [2], [1], [1], [0, 0, 0, 1, 1, 1], [0], [0]>} : vector<1x8x8xf32>, vector<1x8x8xf32>, vector<1x8x8xf32> -> vector<1x8x8xf32>
    "tpu.trace_stop"() : () -> ()
    %cst_18 = arith.constant dense<0xFF800000> : vector<1x8xf32>
    %44 = vector.multi_reduction <maximumf>, %43, %cst_18 [2] : vector<1x8x8xf32> to vector<1x8xf32>
    %45 = vector.shape_cast %44 : vector<1x8xf32> to vector<1x8x1xf32>
    %46 = vector.broadcast %45 : vector<1x8x1xf32> to vector<1x8x8xf32>
    %47 = arith.subf %43, %46 : vector<1x8x8xf32>
    %48 = math.exp %47 : vector<1x8x8xf32>
    %cst_19 = arith.constant dense<0.000000e+00> : vector<1x8xf32>
    %49 = vector.multi_reduction <add>, %48, %cst_19 [2] : vector<1x8x8xf32> to vector<1x8xf32>
    %50 = vector.shape_cast %49 : vector<1x8xf32> to vector<1x8x1xf32>
    %51 = vector.broadcast %50 : vector<1x8x1xf32> to vector<1x8x8xf32>
    %52 = arith.divf %48, %51 : vector<1x8x8xf32>
    %53 = arith.addf %39, %52 : vector<1x8x8xf32>
    "tpu.trace_start"() <{level = 10 : i32, message = "blm,bmd->bld"}> : () -> ()
    %cst_20 = arith.constant dense<0.000000e+00> : vector<1x8x8xf32>
    %54 = tpu.matmul %52, %42, %cst_20 {dimension_numbers = #tpu.dot_dimension_numbers<[2], [1], [1], [2], [0, 0, 0, 1, 1, 2], [0], [0]>} : vector<1x8x8xf32>, vector<1x8x8xf32>, vector<1x8x8xf32> -> vector<1x8x8xf32>
    "tpu.trace_stop"() : () -> ()
    %55 = vector.extract_strided_slice %34 {offsets = [0, 0, 8], sizes = [1, 8, 8], strides = [1, 1, 1]} : vector<1x8x32xf32> to vector<1x8x8xf32>
    %56 = vector.extract_strided_slice %36 {offsets = [0, 0, 8], sizes = [1, 8, 8], strides = [1, 1, 1]} : vector<1x8x32xf32> to vector<1x8x8xf32>
    %57 = vector.extract_strided_slice %38 {offsets = [0, 0, 8], sizes = [1, 8, 8], strides = [1, 1, 1]} : vector<1x8x32xf32> to vector<1x8x8xf32>
    "tpu.trace_start"() <{level = 10 : i32, message = "bld,bmd->blm"}> : () -> ()
    %cst_21 = arith.constant dense<0.000000e+00> : vector<1x8x8xf32>
    %58 = tpu.matmul %55, %56, %cst_21 {dimension_numbers = #tpu.dot_dimension_numbers<[2], [2], [1], [1], [0, 0, 0, 1, 1, 1], [0], [0]>} : vector<1x8x8xf32>, vector<1x8x8xf32>, vector<1x8x8xf32> -> vector<1x8x8xf32>
    "tpu.trace_stop"() : () -> ()
    %cst_22 = arith.constant dense<0xFF800000> : vector<1x8xf32>
    %59 = vector.multi_reduction <maximumf>, %58, %cst_22 [2] : vector<1x8x8xf32> to vector<1x8xf32>
    %60 = vector.shape_cast %59 : vector<1x8xf32> to vector<1x8x1xf32>
    %61 = vector.broadcast %60 : vector<1x8x1xf32> to vector<1x8x8xf32>
    %62 = arith.subf %58, %61 : vector<1x8x8xf32>
    %63 = math.exp %62 : vector<1x8x8xf32>
    %cst_23 = arith.constant dense<0.000000e+00> : vector<1x8xf32>
    %64 = vector.multi_reduction <add>, %63, %cst_23 [2] : vector<1x8x8xf32> to vector<1x8xf32>
    %65 = vector.shape_cast %64 : vector<1x8xf32> to vector<1x8x1xf32>
    %66 = vector.broadcast %65 : vector<1x8x1xf32> to vector<1x8x8xf32>
    %67 = arith.divf %63, %66 : vector<1x8x8xf32>
    %68 = arith.addf %53, %67 : vector<1x8x8xf32>
    "tpu.trace_start"() <{level = 10 : i32, message = "blm,bmd->bld"}> : () -> ()
    %cst_24 = arith.constant dense<0.000000e+00> : vector<1x8x8xf32>
    %69 = tpu.matmul %67, %57, %cst_24 {dimension_numbers = #tpu.dot_dimension_numbers<[2], [1], [1], [2], [0, 0, 0, 1, 1, 2], [0], [0]>} : vector<1x8x8xf32>, vector<1x8x8xf32>, vector<1x8x8xf32> -> vector<1x8x8xf32>
    "tpu.trace_stop"() : () -> ()
    %70 = vector.extract_strided_slice %34 {offsets = [0, 0, 16], sizes = [1, 8, 8], strides = [1, 1, 1]} : vector<1x8x32xf32> to vector<1x8x8xf32>
    %71 = vector.extract_strided_slice %36 {offsets = [0, 0, 16], sizes = [1, 8, 8], strides = [1, 1, 1]} : vector<1x8x32xf32> to vector<1x8x8xf32>
    %72 = vector.extract_strided_slice %38 {offsets = [0, 0, 16], sizes = [1, 8, 8], strides = [1, 1, 1]} : vector<1x8x32xf32> to vector<1x8x8xf32>
    "tpu.trace_start"() <{level = 10 : i32, message = "bld,bmd->blm"}> : () -> ()
    %cst_25 = arith.constant dense<0.000000e+00> : vector<1x8x8xf32>
    %73 = tpu.matmul %70, %71, %cst_25 {dimension_numbers = #tpu.dot_dimension_numbers<[2], [2], [1], [1], [0, 0, 0, 1, 1, 1], [0], [0]>} : vector<1x8x8xf32>, vector<1x8x8xf32>, vector<1x8x8xf32> -> vector<1x8x8xf32>
    "tpu.trace_stop"() : () -> ()
    %cst_26 = arith.constant dense<0xFF800000> : vector<1x8xf32>
    %74 = vector.multi_reduction <maximumf>, %73, %cst_26 [2] : vector<1x8x8xf32> to vector<1x8xf32>
    %75 = vector.shape_cast %74 : vector<1x8xf32> to vector<1x8x1xf32>
    %76 = vector.broadcast %75 : vector<1x8x1xf32> to vector<1x8x8xf32>
    %77 = arith.subf %73, %76 : vector<1x8x8xf32>
    %78 = math.exp %77 : vector<1x8x8xf32>
    %cst_27 = arith.constant dense<0.000000e+00> : vector<1x8xf32>
    %79 = vector.multi_reduction <add>, %78, %cst_27 [2] : vector<1x8x8xf32> to vector<1x8xf32>
    %80 = vector.shape_cast %79 : vector<1x8xf32> to vector<1x8x1xf32>
    %81 = vector.broadcast %80 : vector<1x8x1xf32> to vector<1x8x8xf32>
    %82 = arith.divf %78, %81 : vector<1x8x8xf32>
    %83 = arith.addf %68, %82 : vector<1x8x8xf32>
    "tpu.trace_start"() <{level = 10 : i32, message = "blm,bmd->bld"}> : () -> ()
    %cst_28 = arith.constant dense<0.000000e+00> : vector<1x8x8xf32>
    %84 = tpu.matmul %82, %72, %cst_28 {dimension_numbers = #tpu.dot_dimension_numbers<[2], [1], [1], [2], [0, 0, 0, 1, 1, 2], [0], [0]>} : vector<1x8x8xf32>, vector<1x8x8xf32>, vector<1x8x8xf32> -> vector<1x8x8xf32>
    "tpu.trace_stop"() : () -> ()
    %85 = vector.extract_strided_slice %34 {offsets = [0, 0, 24], sizes = [1, 8, 8], strides = [1, 1, 1]} : vector<1x8x32xf32> to vector<1x8x8xf32>
    %86 = vector.extract_strided_slice %36 {offsets = [0, 0, 24], sizes = [1, 8, 8], strides = [1, 1, 1]} : vector<1x8x32xf32> to vector<1x8x8xf32>
    %87 = vector.extract_strided_slice %38 {offsets = [0, 0, 24], sizes = [1, 8, 8], strides = [1, 1, 1]} : vector<1x8x32xf32> to vector<1x8x8xf32>
    "tpu.trace_start"() <{level = 10 : i32, message = "bld,bmd->blm"}> : () -> ()
    %cst_29 = arith.constant dense<0.000000e+00> : vector<1x8x8xf32>
    %88 = tpu.matmul %85, %86, %cst_29 {dimension_numbers = #tpu.dot_dimension_numbers<[2], [2], [1], [1], [0, 0, 0, 1, 1, 1], [0], [0]>} : vector<1x8x8xf32>, vector<1x8x8xf32>, vector<1x8x8xf32> -> vector<1x8x8xf32>
    "tpu.trace_stop"() : () -> ()
    %cst_30 = arith.constant dense<0xFF800000> : vector<1x8xf32>
    %89 = vector.multi_reduction <maximumf>, %88, %cst_30 [2] : vector<1x8x8xf32> to vector<1x8xf32>
    %90 = vector.shape_cast %89 : vector<1x8xf32> to vector<1x8x1xf32>
    %91 = vector.broadcast %90 : vector<1x8x1xf32> to vector<1x8x8xf32>
    %92 = arith.subf %88, %91 : vector<1x8x8xf32>
    %93 = math.exp %92 : vector<1x8x8xf32>
    %cst_31 = arith.constant dense<0.000000e+00> : vector<1x8xf32>
    %94 = vector.multi_reduction <add>, %93, %cst_31 [2] : vector<1x8x8xf32> to vector<1x8xf32>
    %95 = vector.shape_cast %94 : vector<1x8xf32> to vector<1x8x1xf32>
    %96 = vector.broadcast %95 : vector<1x8x1xf32> to vector<1x8x8xf32>
    %97 = arith.divf %93, %96 : vector<1x8x8xf32>
    %98 = arith.addf %83, %97 : vector<1x8x8xf32>
    "tpu.trace_start"() <{level = 10 : i32, message = "blm,bmd->bld"}> : () -> ()
    %cst_32 = arith.constant dense<0.000000e+00> : vector<1x8x8xf32>
    %99 = tpu.matmul %97, %87, %cst_32 {dimension_numbers = #tpu.dot_dimension_numbers<[2], [1], [1], [2], [0, 0, 0, 1, 1, 2], [0], [0]>} : vector<1x8x8xf32>, vector<1x8x8xf32>, vector<1x8x8xf32> -> vector<1x8x8xf32>
    "tpu.trace_stop"() : () -> ()
    %100 = tpu.concatenate %54, %69, %84, %99 in 2 : vector<1x8x8xf32>, vector<1x8x8xf32>, vector<1x8x8xf32>, vector<1x8x8xf32> -> vector<1x8x32xf32>
    %101 = vector.shape_cast %100 : vector<1x8x32xf32> to vector<8x32xf32>
    %c0_33 = arith.constant 0 : index
    %c0_34 = arith.constant 0 : index
    %102 = vector.load %arg6[%c0_33, %c0_34] : memref<32x32xf32, #tpu.memory_space<vmem>>, vector<32x32xf32>
    %cst_35 = arith.constant dense<0.000000e+00> : vector<8x32xf32>
    %103 = tpu.matmul %101, %102, %cst_35 {dimension_numbers = #tpu.dot_dimension_numbers<[1], [0], [0], [1], [0, 0, 1, 1], [], []>} : vector<8x32xf32>, vector<32x32xf32>, vector<8x32xf32> -> vector<8x32xf32>
    %c0_36 = arith.constant 0 : index
    %c0_37 = arith.constant 0 : index
    %104 = vector.load %arg7[%c0_36, %c0_37] : memref<1x32xf32, #tpu.memory_space<vmem>>, vector<1x32xf32>
    %105 = vector.broadcast %104 : vector<1x32xf32> to vector<8x32xf32>
    %106 = arith.addf %103, %105 : vector<8x32xf32>
    %107 = arith.addf %1, %106 : vector<8x32xf32>
    %cst_38 = arith.constant dense<0.000000e+00> : vector<8xf32>
    %108 = vector.multi_reduction <add>, %107, %cst_38 [1] : vector<8x32xf32> to vector<8xf32>
    %109 = vector.shape_cast %108 : vector<8xf32> to vector<8x1xf32>
    %cst_39 = arith.constant 3.200000e+01 : f32
    %110 = vector.broadcast %cst_39 : f32 to vector<8x1xf32>
    %111 = arith.divf %109, %110 : vector<8x1xf32>
    %112 = vector.broadcast %111 : vector<8x1xf32> to vector<8x32xf32>
    %113 = arith.subf %107, %112 : vector<8x32xf32>
    %114 = arith.mulf %113, %113 : vector<8x32xf32>
    %cst_40 = arith.constant dense<0.000000e+00> : vector<8xf32>
    %115 = vector.multi_reduction <add>, %114, %cst_40 [1] : vector<8x32xf32> to vector<8xf32>
    %116 = vector.shape_cast %115 : vector<8xf32> to vector<8x1xf32>
    %cst_41 = arith.constant 3.200000e+01 : f32
    %117 = vector.broadcast %cst_41 : f32 to vector<8x1xf32>
    %118 = arith.divf %116, %117 : vector<8x1xf32>
    %119 = vector.broadcast %111 : vector<8x1xf32> to vector<8x32xf32>
    %120 = arith.subf %107, %119 : vector<8x32xf32>
    %cst_42 = arith.constant 9.99999974E-6 : f32
    %121 = vector.broadcast %cst_42 : f32 to vector<8x1xf32>
    %122 = arith.addf %118, %121 : vector<8x1xf32>
    %123 = math.rsqrt %122 : vector<8x1xf32>
    %124 = vector.broadcast %123 : vector<8x1xf32> to vector<8x32xf32>
    %125 = arith.mulf %120, %124 : vector<8x32xf32>
    %c0_43 = arith.constant 0 : index
    %c0_44 = arith.constant 0 : index
    %126 = vector.load %arg8[%c0_43, %c0_44] : memref<1x32xf32, #tpu.memory_space<vmem>>, vector<1x32xf32>
    %127 = vector.broadcast %126 : vector<1x32xf32> to vector<8x32xf32>
    %128 = arith.mulf %125, %127 : vector<8x32xf32>
    %c0_45 = arith.constant 0 : index
    %c0_46 = arith.constant 0 : index
    %129 = vector.load %arg9[%c0_45, %c0_46] : memref<1x32xf32, #tpu.memory_space<vmem>>, vector<1x32xf32>
    %130 = vector.broadcast %129 : vector<1x32xf32> to vector<8x32xf32>
    %131 = arith.addf %128, %130 : vector<8x32xf32>
    %c0_47 = arith.constant 0 : index
    %c0_48 = arith.constant 0 : index
    %132 = vector.load %arg10[%c0_47, %c0_48] : memref<32x128xf32, #tpu.memory_space<vmem>>, vector<32x128xf32>
    %cst_49 = arith.constant dense<0.000000e+00> : vector<8x128xf32>
    %133 = tpu.matmul %131, %132, %cst_49 {dimension_numbers = #tpu.dot_dimension_numbers<[1], [0], [0], [1], [0, 0, 1, 1], [], []>} : vector<8x32xf32>, vector<32x128xf32>, vector<8x128xf32> -> vector<8x128xf32>
    %c0_50 = arith.constant 0 : index
    %c0_51 = arith.constant 0 : index
    %134 = vector.load %arg11[%c0_50, %c0_51] : memref<1x128xf32, #tpu.memory_space<vmem>>, vector<1x128xf32>
    %135 = vector.broadcast %134 : vector<1x128xf32> to vector<8x128xf32>
    %136 = arith.addf %133, %135 : vector<8x128xf32>
    %cst_52 = arith.constant 1.702000e+00 : f32
    %137 = vector.broadcast %cst_52 : f32 to vector<8x128xf32>
    %138 = arith.mulf %137, %136 : vector<8x128xf32>
    %139 = arith.negf %138 : vector<8x128xf32>
    %140 = math.exp %139 : vector<8x128xf32>
    %cst_53 = arith.constant 1.000000e+00 : f32
    %141 = vector.broadcast %cst_53 : f32 to vector<8x128xf32>
    %142 = arith.addf %141, %140 : vector<8x128xf32>
    %143 = arith.divf %141, %142 : vector<8x128xf32>
    %144 = arith.mulf %136, %143 : vector<8x128xf32>
    %c0_54 = arith.constant 0 : index
    %c0_55 = arith.constant 0 : index
    %145 = vector.load %arg12[%c0_54, %c0_55] : memref<128x32xf32, #tpu.memory_space<vmem>>, vector<128x32xf32>
    %cst_56 = arith.constant dense<0.000000e+00> : vector<8x32xf32>
    %146 = tpu.matmul %144, %145, %cst_56 {dimension_numbers = #tpu.dot_dimension_numbers<[1], [0], [0], [1], [0, 0, 1, 1], [], []>} : vector<8x128xf32>, vector<128x32xf32>, vector<8x32xf32> -> vector<8x32xf32>
    %c0_57 = arith.constant 0 : index
    %c0_58 = arith.constant 0 : index
    %147 = vector.load %arg13[%c0_57, %c0_58] : memref<1x32xf32, #tpu.memory_space<vmem>>, vector<1x32xf32>
    %148 = vector.broadcast %147 : vector<1x32xf32> to vector<8x32xf32>
    %149 = arith.addf %146, %148 : vector<8x32xf32>
    %150 = arith.addf %107, %149 : vector<8x32xf32>
    %151 = vector.shape_cast %150 : vector<8x32xf32> to vector<1x8x32xf32>
    %c0_59 = arith.constant 0 : index
    %c0_60 = arith.constant 0 : index
    %c0_61 = arith.constant 0 : index
    %152 = vector.load %arg14[%c0_59, %c0_60, %c0_61] : memref<1x8x32xf32, #tpu.memory_space<vmem>>, vector<1x8x32xf32>
    tpu.vector_store %arg14[%c0_59, %c0_60, %c0_61], %151 {strides = array<i32>} : memref<1x8x32xf32, #tpu.memory_space<vmem>>, vector<1x8x32xf32>,
    %cst_62 = arith.constant 2.500000e-01 : f32
    %153 = vector.broadcast %cst_62 : f32 to vector<1x8x8xf32>
    %154 = arith.mulf %98, %153 : vector<1x8x8xf32>
    %c0_63 = arith.constant 0 : index
    %c0_64 = arith.constant 0 : index
    %c0_65 = arith.constant 0 : index
    %155 = vector.load %arg15[%c0_63, %c0_64, %c0_65] : memref<1x8x8xf32, #tpu.memory_space<vmem>>, vector<1x8x8xf32>
    tpu.vector_store %arg15[%c0_63, %c0_64, %c0_65], %154 {strides = array<i32>} : memref<1x8x8xf32, #tpu.memory_space<vmem>>, vector<1x8x8xf32>,
    return
  }
  func.func @transform_0(%arg0: i32) -> (i32, i32, i32) {
    %c0_i32 = arith.constant 0 : i32
    %c0_i32_0 = arith.constant 0 : i32
    %c0_i32_1 = arith.constant 0 : i32
    return %arg0, %c0_i32, %c0_i32_0 : i32, i32, i32
  }
  func.func @transform_1(%arg0: i32) -> (i32, i32) {
    %c0_i32 = arith.constant 0 : i32
    %c0_i32_0 = arith.constant 0 : i32
    %c0_i32_1 = arith.constant 0 : i32
    return %c0_i32, %c0_i32_0 : i32, i32
  }
  func.func @transform_2(%arg0: i32) -> (i32, i32) {
    %c0_i32 = arith.constant 0 : i32
    %c0_i32_0 = arith.constant 0 : i32
    %c0_i32_1 = arith.constant 0 : i32
    return %c0_i32, %c0_i32_0 : i32, i32
  }
  func.func @transform_3(%arg0: i32) -> (i32, i32) {
    %c0_i32 = arith.constant 0 : i32
    %c0_i32_0 = arith.constant 0 : i32
    %c0_i32_1 = arith.constant 0 : i32
    return %c0_i32, %c0_i32_0 : i32, i32
  }
  func.func @transform_4(%arg0: i32) -> (i32, i32) {
    %c0_i32 = arith.constant 0 : i32
    %c0_i32_0 = arith.constant 0 : i32
    %c0_i32_1 = arith.constant 0 : i32
    return %c0_i32, %c0_i32_0 : i32, i32
  }
  func.func @transform_5(%arg0: i32) -> (i32, i32) {
    %c0_i32 = arith.constant 0 : i32
    %c0_i32_0 = arith.constant 0 : i32
    %c0_i32_1 = arith.constant 0 : i32
    return %c0_i32, %c0_i32_0 : i32, i32
  }
  func.func @transform_6(%arg0: i32) -> (i32, i32) {
    %c0_i32 = arith.constant 0 : i32
    %c0_i32_0 = arith.constant 0 : i32
    %c0_i32_1 = arith.constant 0 : i32
    return %c0_i32, %c0_i32_0 : i32, i32
  }
  func.func @transform_7(%arg0: i32) -> (i32, i32) {
    %c0_i32 = arith.constant 0 : i32
    %c0_i32_0 = arith.constant 0 : i32
    %c0_i32_1 = arith.constant 0 : i32
    return %c0_i32, %c0_i32_0 : i32, i32
  }
  func.func @transform_8(%arg0: i32) -> (i32, i32) {
    %c0_i32 = arith.constant 0 : i32
    %c0_i32_0 = arith.constant 0 : i32
    %c0_i32_1 = arith.constant 0 : i32
    return %c0_i32, %c0_i32_0 : i32, i32
  }
  func.func @transform_9(%arg0: i32) -> (i32, i32) {
    %c0_i32 = arith.constant 0 : i32
    %c0_i32_0 = arith.constant 0 : i32
    %c0_i32_1 = arith.constant 0 : i32
    return %c0_i32, %c0_i32_0 : i32, i32
  }
  func.func @transform_10(%arg0: i32) -> (i32, i32) {
    %c0_i32 = arith.constant 0 : i32
    %c0_i32_0 = arith.constant 0 : i32
    %c0_i32_1 = arith.constant 0 : i32
    return %c0_i32, %c0_i32_0 : i32, i32
  }
  func.func @transform_11(%arg0: i32) -> (i32, i32) {
    %c0_i32 = arith.constant 0 : i32
    %c0_i32_0 = arith.constant 0 : i32
    %c0_i32_1 = arith.constant 0 : i32
    return %c0_i32, %c0_i32_0 : i32, i32
  }
  func.func @transform_12(%arg0: i32) -> (i32, i32) {
    %c0_i32 = arith.constant 0 : i32
    %c0_i32_0 = arith.constant 0 : i32
    %c0_i32_1 = arith.constant 0 : i32
    return %c0_i32, %c0_i32_0 : i32, i32
  }
  func.func @transform_13(%arg0: i32) -> (i32, i32, i32) {
    %c0_i32 = arith.constant 0 : i32
    %c0_i32_0 = arith.constant 0 : i32
    %c0_i32_1 = arith.constant 0 : i32
    return %arg0, %c0_i32, %c0_i32_0 : i32, i32, i32
  }
  func.func @transform_14(%arg0: i32) -> (i32, i32, i32) {
    %c0_i32 = arith.constant 0 : i32
    %c0_i32_0 = arith.constant 0 : i32
    %c0_i32_1 = arith.constant 0 : i32
    return %arg0, %c0_i32, %c0_i32_0 : i32, i32, i32
  }
}

module attributes {stable_mosaic.version = 11 : i64} {
  func.func @_block_kernel(%arg0: i32, %arg1: memref<1x8x32xf32, #tpu.memory_space<vmem>>, %arg2: memref<1x32xf32, #tpu.memory_space<vmem>>, %arg3: memref<1x32xf32, #tpu.memory_space<vmem>>, %arg4: memref<32x96xf32, #tpu.memory_space<vmem>>, %arg5: memref<1x96xf32, #tpu.memory_space<vmem>>, %arg6: memref<32x32xf32, #tpu.memory_space<vmem>>, %arg7: memref<1x32xf32, #tpu.memory_space<vmem>>, %arg8: memref<1x32xf32, #tpu.memory_space<vmem>>, %arg9: memref<1x32xf32, #tpu.memory_space<vmem>>, %arg10: memref<32x128xf32, #tpu.memory_space<vmem>>, %arg11: memref<1x128xf32, #tpu.memory_space<vmem>>, %arg12: memref<128x32xf32, #tpu.memory_space<vmem>>, %arg13: memref<1x32xf32, #tpu.memory_space<vmem>>, %arg14: memref<1x8x32xf32, #tpu.memory_space<vmem>>, %arg15: memref<1x8x8xf32, #tpu.memory_space<vmem>>) attributes {dimension_semantics = [#tpu.dimension_semantics<parallel>], iteration_bounds = array<i64: 2>, scalar_prefetch = 0 : i64, scratch_operands = 0 : i64, tpu.core_type = #tpu.core_type<tc>, window_params = [{transform_indices = @transform_0, window_bounds = array<i64: 1, 8, 32>}, {pipeline_mode = #tpu.pipeline_mode<synchronous>, transform_indices = @transform_1, window_bounds = array<i64: 1, 32>}, {pipeline_mode = #tpu.pipeline_mode<synchronous>, transform_indices = @transform_2, window_bounds = array<i64: 1, 32>}, {pipeline_mode = #tpu.pipeline_mode<synchronous>, transform_indices = @transform_3, window_bounds = array<i64: 32, 96>}, {pipeline_mode = #tpu.pipeline_mode<synchronous>, transform_indices = @transform_4, window_bounds = array<i64: 1, 96>}, {pipeline_mode = #tpu.pipeline_mode<synchronous>, transform_indices = @transform_5, window_bounds = array<i64: 32, 32>}, {pipeline_mode = #tpu.pipeline_mode<synchronous>, transform_indices = @transform_6, window_bounds = array<i64: 1, 32>}, {pipeline_mode = #tpu.pipeline_mode<synchronous>, transform_indices = @transform_7, window_bounds = array<i64: 1, 32>}, {pipeline_mode = #tpu.pipeline_mode<synchronous>, transform_indices = @transform_8, window_bounds = array<i64: 1, 32>}, {pipeline_mode = #tpu.pipeline_mode<synchronous>, transform_indices = @transform_9, window_bounds = array<i64: 32, 128>}, {pipeline_mode = #tpu.pipeline_mode<synchronous>, transform_indices = @transform_10, window_bounds = array<i64: 1, 128>}, {pipeline_mode = #tpu.pipeline_mode<synchronous>, transform_indices = @transform_11, window_bounds = array<i64: 128, 32>}, {pipeline_mode = #tpu.pipeline_mode<synchronous>, transform_indices = @transform_12, window_bounds = array<i64: 1, 32>}, {transform_indices = @transform_13, window_bounds = array<i64: 1, 8, 32>}, {transform_indices = @transform_14, window_bounds = array<i64: 1, 8, 8>}]} {
    %c0 = arith.constant 0 : index
    %c0_0 = arith.constant 0 : index
    %c0_1 = arith.constant 0 : index
    %0 = vector.load %arg1[%c0, %c0_0, %c0_1] : memref<1x8x32xf32, #tpu.memory_space<vmem>>, vector<1x8x32xf32>
    %1 = vector.shape_cast %0 : vector<1x8x32xf32> to vector<8x32xf32>
    %cst = arith.constant dense<0.000000e+00> : vector<8xf32>
    %2 = vector.multi_reduction <add>, %1, %cst [1] : vector<8x32xf32> to vector<8xf32>
    %3 = vector.shape_cast %2 : vector<8xf32> to vector<8x1xf32>
    %cst_2 = arith.constant 3.200000e+01 : f32
    %4 = vector.broadcast %cst_2 : f32 to vector<8x1xf32>
    %5 = arith.divf %3, %4 : vector<8x1xf32>
    %6 = vector.broadcast %5 : vector<8x1xf32> to vector<8x32xf32>
    %7 = arith.subf %1, %6 : vector<8x32xf32>
    %8 = arith.mulf %7, %7 : vector<8x32xf32>
    %cst_3 = arith.constant dense<0.000000e+00> : vector<8xf32>
    %9 = vector.multi_reduction <add>, %8, %cst_3 [1] : vector<8x32xf32> to vector<8xf32>
    %10 = vector.shape_cast %9 : vector<8xf32> to vector<8x1xf32>
    %cst_4 = arith.constant 3.200000e+01 : f32
    %11 = vector.broadcast %cst_4 : f32 to vector<8x1xf32>
    %12 = arith.divf %10, %11 : vector<8x1xf32>
    %13 = vector.broadcast %5 : vector<8x1xf32> to vector<8x32xf32>
    %14 = arith.subf %1, %13 : vector<8x32xf32>
    %cst_5 = arith.constant 9.99999974E-6 : f32
    %15 = vector.broadcast %cst_5 : f32 to vector<8x1xf32>
    %16 = arith.addf %12, %15 : vector<8x1xf32>
    %17 = math.rsqrt %16 : vector<8x1xf32>
    %18 = vector.broadcast %17 : vector<8x1xf32> to vector<8x32xf32>
    %19 = arith.mulf %14, %18 : vector<8x32xf32>
    %c0_6 = arith.constant 0 : index
    %c0_7 = arith.constant 0 : index
    %20 = vector.load %arg2[%c0_6, %c0_7] : memref<1x32xf32, #tpu.memory_space<vmem>>, vector<1x32xf32>
    %21 = vector.broadcast %20 : vector<1x32xf32> to vector<8x32xf32>
    %22 = arith.mulf %19, %21 : vector<8x32xf32>
    %c0_8 = arith.constant 0 : index
    %c0_9 = arith.constant 0 : index
    %23 = vector.load %arg3[%c0_8, %c0_9] : memref<1x32xf32, #tpu.memory_space<vmem>>, vector<1x32xf32>
    %24 = vector.broadcast %23 : vector<1x32xf32> to vector<8x32xf32>
    %25 = arith.addf %22, %24 : vector<8x32xf32>
    %c0_10 = arith.constant 0 : index
    %c0_11 = arith.constant 0 : index
    %26 = vector.load %arg4[%c0_10, %c0_11] : memref<32x96xf32, #tpu.memory_space<vmem>>, vector<32x96xf32>
    %cst_12 = arith.constant dense<0.000000e+00> : vector<8x96xf32>
    %27 = tpu.matmul %25, %26, %cst_12 {dimension_numbers = #tpu.dot_dimension_numbers<[1], [0], [0], [1], [0, 0, 1, 1], [], []>} : vector<8x32xf32>, vector<32x96xf32>, vector<8x96xf32> -> vector<8x96xf32>
    %c0_13 = arith.constant 0 : index
    %c0_14 = arith.constant 0 : index
    %28 = vector.load %arg5[%c0_13, %c0_14] : memref<1x96xf32, #tpu.memory_space<vmem>>, vector<1x96xf32>
    %29 = vector.broadcast %28 : vector<1x96xf32> to vector<8x96xf32>
    %30 = arith.addf %27, %29 : vector<8x96xf32>
    %31 = vector.extract_strided_slice %30 {offsets = [0, 0], sizes = [8, 32], strides = [1, 1]} : vector<8x96xf32> to vector<8x32xf32>
    %cst_15 = arith.constant 0.353553385 : f32
    %32 = vector.broadcast %cst_15 : f32 to vector<8x32xf32>
    %33 = arith.mulf %31, %32 : vector<8x32xf32>
    %34 = vector.shape_cast %33 : vector<8x32xf32> to vector<1x8x32xf32>
    %35 = vector.extract_strided_slice %30 {offsets = [0, 32], sizes = [8, 32], strides = [1, 1]} : vector<8x96xf32> to vector<8x32xf32>
    %36 = vector.shape_cast %35 : vector<8x32xf32> to vector<1x8x32xf32>
    %37 = vector.extract_strided_slice %30 {offsets = [0, 64], sizes = [8, 32], strides = [1, 1]} : vector<8x96xf32> to vector<8x32xf32>
    %38 = vector.shape_cast %37 : vector<8x32xf32> to vector<1x8x32xf32>
    %cst_16 = arith.constant 0.000000e+00 : f32
    %39 = vector.broadcast %cst_16 : f32 to vector<1x8x8xf32>
    %40 = vector.extract_strided_slice %34 {offsets = [0, 0, 0], sizes = [1, 8, 8], strides = [1, 1, 1]} : vector<1x8x32xf32> to vector<1x8x8xf32>
    %41 = vector.extract_strided_slice %36 {offsets = [0, 0, 0], sizes = [1, 8, 8], strides = [1, 1, 1]} : vector<1x8x32xf32> to vector<1x8x8xf32>
    %42 = vector.extract_strided_slice %38 {offsets = [0, 0, 0], sizes = [1, 8, 8], strides = [1, 1, 1]} : vector<1x8x32xf32> to vector<1x8x8xf32>
    "tpu.trace_start"() <{level = 10 : i32, message = "bld,bmd->blm"}> : () -> ()
    %cst_17 = arith.constant dense<0.000000e+00> : vector<1x8x8xf32>
    %43 = tpu.matmul %40, %41, %cst_17 {dimension_numbers = #tpu.dot_dimension_numbers<[2], [2], [1], [1], [0, 0, 0, 1, 1, 1], [0], [0]>} : vector<1x8x8xf32>, vector<1x8x8xf32>, vector<1x8x8xf32> -> vector<1x8x8xf32>
    "tpu.trace_stop"() : () -> ()
    %cst_18 = arith.constant dense<0xFF800000> : vector<1x8xf32>
    %44 = vector.multi_reduction <maximumf>, %43, %cst_18 [2] : vector<1x8x8xf32> to vector<1x8xf32>
    %45 = vector.shape_cast %44 : vector<1x8xf32> to vector<1x8x1xf32>
    %46 = vector.broadcast %45 : vector<1x8x1xf32> to vector<1x8x8xf32>
    %47 = arith.subf %43, %46 : vector<1x8x8xf32>
    %48 = math.exp %47 : vector<1x8x8xf32>
    %cst_19 = arith.constant dense<0.000000e+00> : vector<1x8xf32>
    %49 = vector.multi_reduction <add>, %48, %cst_19 [2] : vector<1x8x8xf32> to vector<1x8xf32>
    %50 = vector.shape_cast %49 : vector<1x8xf32> to vector<1x8x1xf32>
    %51 = vector.broadcast %50 : vector<1x8x1xf32> to vector<1x8x8xf32>
    %52 = arith.divf %48, %51 : vector<1x8x8xf32>
    %53 = arith.addf %39, %52 : vector<1x8x8xf32>
    "tpu.trace_start"() <{level = 10 : i32, message = "blm,bmd->bld"}> : () -> ()
    %cst_20 = arith.constant dense<0.000000e+00> : vector<1x8x8xf32>
    %54 = tpu.matmul %52, %42, %cst_20 {dimension_numbers = #tpu.dot_dimension_numbers<[2], [1], [1], [2], [0, 0, 0, 1, 1, 2], [0], [0]>} : vector<1x8x8xf32>, vector<1x8x8xf32>, vector<1x8x8xf32> -> vector<1x8x8xf32>
    "tpu.trace_stop"() : () -> ()
    %55 = vector.extract_strided_slice %34 {offsets = [0, 0, 8], sizes = [1, 8, 8], strides = [1, 1, 1]} : vector<1x8x32xf32> to vector<1x8x8xf32>
    %56 = vector.extract_strided_slice %36 {offsets = [0, 0, 8], sizes = [1, 8, 8], strides = [1, 1, 1]} : vector<1x8x32xf32> to vector<1x8x8xf32>
    %57 = vector.extract_strided_slice %38 {offsets = [0, 0, 8], sizes = [1, 8, 8], strides = [1, 1, 1]} : vector<1x8x32xf32> to vector<1x8x8xf32>
    "tpu.trace_start"() <{level = 10 : i32, message = "bld,bmd->blm"}> : () -> ()
    %cst_21 = arith.constant dense<0.000000e+00> : vector<1x8x8xf32>
    %58 = tpu.matmul %55, %56, %cst_21 {dimension_numbers = #tpu.dot_dimension_numbers<[2], [2], [1], [1], [0, 0, 0, 1, 1, 1], [0], [0]>} : vector<1x8x8xf32>, vector<1x8x8xf32>, vector<1x8x8xf32> -> vector<1x8x8xf32>
    "tpu.trace_stop"() : () -> ()
    %cst_22 = arith.constant dense<0xFF800000> : vector<1x8xf32>
    %59 = vector.multi_reduction <maximumf>, %58, %cst_22 [2] : vector<1x8x8xf32> to vector<1x8xf32>
    %60 = vector.shape_cast %59 : vector<1x8xf32> to vector<1x8x1xf32>
    %61 = vector.broadcast %60 : vector<1x8x1xf32> to vector<1x8x8xf32>
    %62 = arith.subf %58, %61 : vector<1x8x8xf32>
    %63 = math.exp %62 : vector<1x8x8xf32>
    %cst_23 = arith.constant dense<0.000000e+00> : vector<1x8xf32>
    %64 = vector.multi_reduction <add>, %63, %cst_23 [2] : vector<1x8x8xf32> to vector<1x8xf32>
    %65 = vector.shape_cast %64 : vector<1x8xf32> to vector<1x8x1xf32>
    %66 = vector.broadcast %65 : vector<1x8x1xf32> to vector<1x8x8xf32>
    %67 = arith.divf %63, %66 : vector<1x8x8xf32>
    %68 = arith.addf %53, %67 : vector<1x8x8xf32>
    "tpu.trace_start"() <{level = 10 : i32, message = "blm,bmd->bld"}> : () -> ()
    %cst_24 = arith.constant dense<0.000000e+00> : vector<1x8x8xf32>
    %69 = tpu.matmul %67, %57, %cst_24 {dimension_numbers = #tpu.dot_dimension_numbers<[2], [1], [1], [2], [0, 0, 0, 1, 1, 2], [0], [0]>} : vector<1x8x8xf32>, vector<1x8x8xf32>, vector<1x8x8xf32> -> vector<1x8x8xf32>
    "tpu.trace_stop"() : () -> ()
    %70 = vector.extract_strided_slice %34 {offsets = [0, 0, 16], sizes = [1, 8, 8], strides = [1, 1, 1]} : vector<1x8x32xf32> to vector<1x8x8xf32>
    %71 = vector.extract_strided_slice %36 {offsets = [0, 0, 16], sizes = [1, 8, 8], strides = [1, 1, 1]} : vector<1x8x32xf32> to vector<1x8x8xf32>
    %72 = vector.extract_strided_slice %38 {offsets = [0, 0, 16], sizes = [1, 8, 8], strides = [1, 1, 1]} : vector<1x8x32xf32> to vector<1x8x8xf32>
    "tpu.trace_start"() <{level = 10 : i32, message = "bld,bmd->blm"}> : () -> ()
    %cst_25 = arith.constant dense<0.000000e+00> : vector<1x8x8xf32>
    %73 = tpu.matmul %70, %71, %cst_25 {dimension_numbers = #tpu.dot_dimension_numbers<[2], [2], [1], [1], [0, 0, 0, 1, 1, 1], [0], [0]>} : vector<1x8x8xf32>, vector<1x8x8xf32>, vector<1x8x8xf32> -> vector<1x8x8xf32>
    "tpu.trace_stop"() : () -> ()
    %cst_26 = arith.constant dense<0xFF800000> : vector<1x8xf32>
    %74 = vector.multi_reduction <maximumf>, %73, %cst_26 [2] : vector<1x8x8xf32> to vector<1x8xf32>
    %75 = vector.shape_cast %74 : vector<1x8xf32> to vector<1x8x1xf32>
    %76 = vector.broadcast %75 : vector<1x8x1xf32> to vector<1x8x8xf32>
    %77 = arith.subf %73, %76 : vector<1x8x8xf32>
    %78 = math.exp %77 : vector<1x8x8xf32>
    %cst_27 = arith.constant dense<0.000000e+00> : vector<1x8xf32>
    %79 = vector.multi_reduction <add>, %78, %cst_27 [2] : vector<1x8x8xf32> to vector<1x8xf32>
    %80 = vector.shape_cast %79 : vector<1x8xf32> to vector<1x8x1xf32>
    %81 = vector.broadcast %80 : vector<1x8x1xf32> to vector<1x8x8xf32>
    %82 = arith.divf %78, %81 : vector<1x8x8xf32>
    %83 = arith.addf %68, %82 : vector<1x8x8xf32>
    "tpu.trace_start"() <{level = 10 : i32, message = "blm,bmd->bld"}> : () -> ()
    %cst_28 = arith.constant dense<0.000000e+00> : vector<1x8x8xf32>
    %84 = tpu.matmul %82, %72, %cst_28 {dimension_numbers = #tpu.dot_dimension_numbers<[2], [1], [1], [2], [0, 0, 0, 1, 1, 2], [0], [0]>} : vector<1x8x8xf32>, vector<1x8x8xf32>, vector<1x8x8xf32> -> vector<1x8x8xf32>
    "tpu.trace_stop"() : () -> ()
    %85 = vector.extract_strided_slice %34 {offsets = [0, 0, 24], sizes = [1, 8, 8], strides = [1, 1, 1]} : vector<1x8x32xf32> to vector<1x8x8xf32>
    %86 = vector.extract_strided_slice %36 {offsets = [0, 0, 24], sizes = [1, 8, 8], strides = [1, 1, 1]} : vector<1x8x32xf32> to vector<1x8x8xf32>
    %87 = vector.extract_strided_slice %38 {offsets = [0, 0, 24], sizes = [1, 8, 8], strides = [1, 1, 1]} : vector<1x8x32xf32> to vector<1x8x8xf32>
    "tpu.trace_start"() <{level = 10 : i32, message = "bld,bmd->blm"}> : () -> ()
    %cst_29 = arith.constant dense<0.000000e+00> : vector<1x8x8xf32>
    %88 = tpu.matmul %85, %86, %cst_29 {dimension_numbers = #tpu.dot_dimension_numbers<[2], [2], [1], [1], [0, 0, 0, 1, 1, 1], [0], [0]>} : vector<1x8x8xf32>, vector<1x8x8xf32>, vector<1x8x8xf32> -> vector<1x8x8xf32>
    "tpu.trace_stop"() : () -> ()
    %cst_30 = arith.constant dense<0xFF800000> : vector<1x8xf32>
    %89 = vector.multi_reduction <maximumf>, %88, %cst_30 [2] : vector<1x8x8xf32> to vector<1x8xf32>
    %90 = vector.shape_cast %89 : vector<1x8xf32> to vector<1x8x1xf32>
    %91 = vector.broadcast %90 : vector<1x8x1xf32> to vector<1x8x8xf32>
    %92 = arith.subf %88, %91 : vector<1x8x8xf32>
    %93 = math.exp %92 : vector<1x8x8xf32>
    %cst_31 = arith.constant dense<0.000000e+00> : vector<1x8xf32>
    %94 = vector.multi_reduction <add>, %93, %cst_31 [2] : vector<1x8x8xf32> to vector<1x8xf32>
    %95 = vector.shape_cast %94 : vector<1x8xf32> to vector<1x8x1xf32>
    %96 = vector.broadcast %95 : vector<1x8x1xf32> to vector<1x8x8xf32>
    %97 = arith.divf %93, %96 : vector<1x8x8xf32>
    %98 = arith.addf %83, %97 : vector<1x8x8xf32>
    "tpu.trace_start"() <{level = 10 : i32, message = "blm,bmd->bld"}> : () -> ()
    %cst_32 = arith.constant dense<0.000000e+00> : vector<1x8x8xf32>
    %99 = tpu.matmul %97, %87, %cst_32 {dimension_numbers = #tpu.dot_dimension_numbers<[2], [1], [1], [2], [0, 0, 0, 1, 1, 2], [0], [0]>} : vector<1x8x8xf32>, vector<1x8x8xf32>, vector<1x8x8xf32> -> vector<1x8x8xf32>
    "tpu.trace_stop"() : () -> ()
    %100 = tpu.concatenate %54, %69, %84, %99 in 2 : vector<1x8x8xf32>, vector<1x8x8xf32>, vector<1x8x8xf32>, vector<1x8x8xf32> -> vector<1x8x32xf32>
    %101 = vector.shape_cast %100 : vector<1x8x32xf32> to vector<8x32xf32>
    %c0_33 = arith.constant 0 : index
    %c0_34 = arith.constant 0 : index
    %102 = vector.load %arg6[%c0_33, %c0_34] : memref<32x32xf32, #tpu.memory_space<vmem>>, vector<32x32xf32>
    %cst_35 = arith.constant dense<0.000000e+00> : vector<8x32xf32>
    %103 = tpu.matmul %101, %102, %cst_35 {dimension_numbers = #tpu.dot_dimension_numbers<[1], [0], [0], [1], [0, 0, 1, 1], [], []>} : vector<8x32xf32>, vector<32x32xf32>, vector<8x32xf32> -> vector<8x32xf32>
    %c0_36 = arith.constant 0 : index
    %c0_37 = arith.constant 0 : index
    %104 = vector.load %arg7[%c0_36, %c0_37] : memref<1x32xf32, #tpu.memory_space<vmem>>, vector<1x32xf32>
    %105 = vector.broadcast %104 : vector<1x32xf32> to vector<8x32xf32>
    %106 = arith.addf %103, %105 : vector<8x32xf32>
    %107 = arith.addf %1, %106 : vector<8x32xf32>
    %cst_38 = arith.constant dense<0.000000e+00> : vector<8xf32>
    %108 = vector.multi_reduction <add>, %107, %cst_38 [1] : vector<8x32xf32> to vector<8xf32>
    %109 = vector.shape_cast %108 : vector<8xf32> to vector<8x1xf32>
    %cst_39 = arith.constant 3.200000e+01 : f32
    %110 = vector.broadcast %cst_39 : f32 to vector<8x1xf32>
    %111 = arith.divf %109, %110 : vector<8x1xf32>
    %112 = vector.broadcast %111 : vector<8x1xf32> to vector<8x32xf32>
    %113 = arith.subf %107, %112 : vector<8x32xf32>
    %114 = arith.mulf %113, %113 : vector<8x32xf32>
    %cst_40 = arith.constant dense<0.000000e+00> : vector<8xf32>
    %115 = vector.multi_reduction <add>, %114, %cst_40 [1] : vector<8x32xf32> to vector<8xf32>
    %116 = vector.shape_cast %115 : vector<8xf32> to vector<8x1xf32>
    %cst_41 = arith.constant 3.200000e+01 : f32
    %117 = vector.broadcast %cst_41 : f32 to vector<8x1xf32>
    %118 = arith.divf %116, %117 : vector<8x1xf32>
    %119 = vector.broadcast %111 : vector<8x1xf32> to vector<8x32xf32>
    %120 = arith.subf %107, %119 : vector<8x32xf32>
    %cst_42 = arith.constant 9.99999974E-6 : f32
    %121 = vector.broadcast %cst_42 : f32 to vector<8x1xf32>
    %122 = arith.addf %118, %121 : vector<8x1xf32>
    %123 = math.rsqrt %122 : vector<8x1xf32>
    %124 = vector.broadcast %123 : vector<8x1xf32> to vector<8x32xf32>
    %125 = arith.mulf %120, %124 : vector<8x32xf32>
    %c0_43 = arith.constant 0 : index
    %c0_44 = arith.constant 0 : index
    %126 = vector.load %arg8[%c0_43, %c0_44] : memref<1x32xf32, #tpu.memory_space<vmem>>, vector<1x32xf32>
    %127 = vector.broadcast %126 : vector<1x32xf32> to vector<8x32xf32>
    %128 = arith.mulf %125, %127 : vector<8x32xf32>
    %c0_45 = arith.constant 0 : index
    %c0_46 = arith.constant 0 : index
    %129 = vector.load %arg9[%c0_45, %c0_46] : memref<1x32xf32, #tpu.memory_space<vmem>>, vector<1x32xf32>
    %130 = vector.broadcast %129 : vector<1x32xf32> to vector<8x32xf32>
    %131 = arith.addf %128, %130 : vector<8x32xf32>
    %c0_47 = arith.constant 0 : index
    %c0_48 = arith.constant 0 : index
    %132 = vector.load %arg10[%c0_47, %c0_48] : memref<32x128xf32, #tpu.memory_space<vmem>>, vector<32x128xf32>
    %cst_49 = arith.constant dense<0.000000e+00> : vector<8x128xf32>
    %133 = tpu.matmul %131, %132, %cst_49 {dimension_numbers = #tpu.dot_dimension_numbers<[1], [0], [0], [1], [0, 0, 1, 1], [], []>} : vector<8x32xf32>, vector<32x128xf32>, vector<8x128xf32> -> vector<8x128xf32>
    %c0_50 = arith.constant 0 : index
    %c0_51 = arith.constant 0 : index
    %134 = vector.load %arg11[%c0_50, %c0_51] : memref<1x128xf32, #tpu.memory_space<vmem>>, vector<1x128xf32>
    %135 = vector.broadcast %134 : vector<1x128xf32> to vector<8x128xf32>
    %136 = arith.addf %133, %135 : vector<8x128xf32>
    %cst_52 = arith.constant 1.702000e+00 : f32
    %137 = vector.broadcast %cst_52 : f32 to vector<8x128xf32>
    %138 = arith.mulf %137, %136 : vector<8x128xf32>
    %139 = arith.negf %138 : vector<8x128xf32>
    %140 = math.exp %139 : vector<8x128xf32>
    %cst_53 = arith.constant 1.000000e+00 : f32
    %141 = vector.broadcast %cst_53 : f32 to vector<8x128xf32>
    %142 = arith.addf %141, %140 : vector<8x128xf32>
    %143 = arith.divf %141, %142 : vector<8x128xf32>
    %144 = arith.mulf %136, %143 : vector<8x128xf32>
    %c0_54 = arith.constant 0 : index
    %c0_55 = arith.constant 0 : index
    %145 = vector.load %arg12[%c0_54, %c0_55] : memref<128x32xf32, #tpu.memory_space<vmem>>, vector<128x32xf32>
    %cst_56 = arith.constant dense<0.000000e+00> : vector<8x32xf32>
    %146 = tpu.matmul %144, %145, %cst_56 {dimension_numbers = #tpu.dot_dimension_numbers<[1], [0], [0], [1], [0, 0, 1, 1], [], []>} : vector<8x128xf32>, vector<128x32xf32>, vector<8x32xf32> -> vector<8x32xf32>
    %c0_57 = arith.constant 0 : index
    %c0_58 = arith.constant 0 : index
    %147 = vector.load %arg13[%c0_57, %c0_58] : memref<1x32xf32, #tpu.memory_space<vmem>>, vector<1x32xf32>
    %148 = vector.broadcast %147 : vector<1x32xf32> to vector<8x32xf32>
    %149 = arith.addf %146, %148 : vector<8x32xf32>
    %150 = arith.addf %107, %149 : vector<8x32xf32>
    %151 = vector.shape_cast %150 : vector<8x32xf32> to vector<1x8x32xf32>
    %c0_59 = arith.constant 0 : index
    %c0_60 = arith.constant 0 : index
    %c0_61 = arith.constant 0 : index
    %152 = vector.load %arg14[%c0_59, %c0_60, %c0_61] : memref<1x8x32xf32, #tpu.memory_space<vmem>>, vector<1x8x32xf32>
    tpu.vector_store %arg14[%c0_59, %c0_60, %c0_61], %151 {strides = array<i32>} : memref<1x8x32xf32, #tpu.memory_space<vmem>>, vector<1x8x32xf32>,
    %cst_62 = arith.constant 2.500000e-01 : f32
    %153 = vector.broadcast %cst_62 : f32 to vector<1x8x8xf32>
    %154 = arith.mulf %98, %153 : vector<1x8x8xf32>
    %c0_63 = arith.constant 0 : index
    %c0_64 = arith.constant 0 : index
    %c0_65 = arith.constant 0 : index
    %155 = vector.load %arg15[%c0_63, %c0_64, %c0_65] : memref<1x8x8xf32, #tpu.memory_space<vmem>>, vector<1x8x8xf32>
    tpu.vector_store %arg15[%c0_63, %c0_64, %c0_65], %154 {strides = array<i32>} : memref<1x8x8xf32, #tpu.memory_space<vmem>>, vector<1x8x8xf32>,
    return
  }
  func.func @transform_0(%arg0: i32) -> (i32, i32, i32) {
    %c0_i32 = arith.constant 0 : i32
    %c0_i32_0 = arith.constant 0 : i32
    %c0_i32_1 = arith.constant 0 : i32
    return %arg0, %c0_i32, %c0_i32_0 : i32, i32, i32
  }
  func.func @transform_1(%arg0: i32) -> (i32, i32) {
    %c0_i32 = arith.constant 0 : i32
    %c0_i32_0 = arith.constant 0 : i32
    %c0_i32_1 = arith.constant 0 : i32
    return %c0_i32, %c0_i32_0 : i32, i32
  }
  func.func @transform_2(%arg0: i32) -> (i32, i32) {
    %c0_i32 = arith.constant 0 : i32
    %c0_i32_0 = arith.constant 0 : i32
    %c0_i32_1 = arith.constant 0 : i32
    return %c0_i32, %c0_i32_0 : i32, i32
  }
  func.func @transform_3(%arg0: i32) -> (i32, i32) {
    %c0_i32 = arith.constant 0 : i32
    %c0_i32_0 = arith.constant 0 : i32
    %c0_i32_1 = arith.constant 0 : i32
    return %c0_i32, %c0_i32_0 : i32, i32
  }
  func.func @transform_4(%arg0: i32) -> (i32, i32) {
    %c0_i32 = arith.constant 0 : i32
    %c0_i32_0 = arith.constant 0 : i32
    %c0_i32_1 = arith.constant 0 : i32
    return %c0_i32, %c0_i32_0 : i32, i32
  }
  func.func @transform_5(%arg0: i32) -> (i32, i32) {
    %c0_i32 = arith.constant 0 : i32
    %c0_i32_0 = arith.constant 0 : i32
    %c0_i32_1 = arith.constant 0 : i32
    return %c0_i32, %c0_i32_0 : i32, i32
  }
  func.func @transform_6(%arg0: i32) -> (i32, i32) {
    %c0_i32 = arith.constant 0 : i32
    %c0_i32_0 = arith.constant 0 : i32
    %c0_i32_1 = arith.constant 0 : i32
    return %c0_i32, %c0_i32_0 : i32, i32
  }
  func.func @transform_7(%arg0: i32) -> (i32, i32) {
    %c0_i32 = arith.constant 0 : i32
    %c0_i32_0 = arith.constant 0 : i32
    %c0_i32_1 = arith.constant 0 : i32
    return %c0_i32, %c0_i32_0 : i32, i32
  }
  func.func @transform_8(%arg0: i32) -> (i32, i32) {
    %c0_i32 = arith.constant 0 : i32
    %c0_i32_0 = arith.constant 0 : i32
    %c0_i32_1 = arith.constant 0 : i32
    return %c0_i32, %c0_i32_0 : i32, i32
  }
  func.func @transform_9(%arg0: i32) -> (i32, i32) {
    %c0_i32 = arith.constant 0 : i32
    %c0_i32_0 = arith.constant 0 : i32
    %c0_i32_1 = arith.constant 0 : i32
    return %c0_i32, %c0_i32_0 : i32, i32
  }
  func.func @transform_10(%arg0: i32) -> (i32, i32) {
    %c0_i32 = arith.constant 0 : i32
    %c0_i32_0 = arith.constant 0 : i32
    %c0_i32_1 = arith.constant 0 : i32
    return %c0_i32, %c0_i32_0 : i32, i32
  }
  func.func @transform_11(%arg0: i32) -> (i32, i32) {
    %c0_i32 = arith.constant 0 : i32
    %c0_i32_0 = arith.constant 0 : i32
    %c0_i32_1 = arith.constant 0 : i32
    return %c0_i32, %c0_i32_0 : i32, i32
  }
  func.func @transform_12(%arg0: i32) -> (i32, i32) {
    %c0_i32 = arith.constant 0 : i32
    %c0_i32_0 = arith.constant 0 : i32
    %c0_i32_1 = arith.constant 0 : i32
    return %c0_i32, %c0_i32_0 : i32, i32
  }
  func.func @transform_13(%arg0: i32) -> (i32, i32, i32) {
    %c0_i32 = arith.constant 0 : i32
    %c0_i32_0 = arith.constant 0 : i32
    %c0_i32_1 = arith.constant 0 : i32
    return %arg0, %c0_i32, %c0_i32_0 : i32, i32, i32
  }
  func.func @transform_14(%arg0: i32) -> (i32, i32, i32) {
    %c0_i32 = arith.constant 0 : i32
    %c0_i32_0 = arith.constant 0 : i32
    %c0_i32_1 = arith.constant 0 : i32
    return %arg0, %c0_i32, %c0_i32_0 : i32, i32, i32
  }
}

</mosaic_0001>

<llo_original>
// kernel: tpu_custom_call.1
$region0: #{tpu_custom_call.1}
  #allocation0 [shape = 'u32[]', space=smem, size = 0x4, offset = 0x4, fixed_abs, tag = 'smem constant byte address 0x4 - core index']
  #allocation1 [shape = 'u32[144,128]{1,0:T(1,128)}', space=vmem, size = 0x12000, scoped, tag = 'internal scratch']
  %s0 = inlined_call_operand.vmem [shape: f32[2,8,32], index: 0, kind: input, shape index: {}]
  %s1 = inlined_call_operand.vmem [shape: f32[1,32], index: 1, kind: input, shape index: {}]
  %s2 = inlined_call_operand.vmem [shape: f32[1,32], index: 2, kind: input, shape index: {}]
  %s3 = inlined_call_operand.vmem [shape: f32[32,96], index: 3, kind: input, shape index: {}]
  %s4 = inlined_call_operand.vmem [shape: f32[1,96], index: 4, kind: input, shape index: {}]
  %s5 = inlined_call_operand.vmem [shape: f32[32,32], index: 5, kind: input, shape index: {}]
  %s6 = inlined_call_operand.vmem [shape: f32[1,32], index: 6, kind: input, shape index: {}]
  %s7 = inlined_call_operand.vmem [shape: f32[1,32], index: 7, kind: input, shape index: {}]
  %s8 = inlined_call_operand.vmem [shape: f32[1,32], index: 8, kind: input, shape index: {}]
  %s9 = inlined_call_operand.vmem [shape: f32[32,128], index: 9, kind: input, shape index: {}]
  %s10 = inlined_call_operand.vmem [shape: f32[1,128], index: 10, kind: input, shape index: {}]
  %s11 = inlined_call_operand.vmem [shape: f32[128,32], index: 11, kind: input, shape index: {}]
  %s12 = inlined_call_operand.vmem [shape: f32[1,32], index: 12, kind: input, shape index: {}]
  %s13 = inlined_call_operand.hbm [shape: f32[2,8,32], index: 13, kind: output, shape index: {0}]
  %s14 = inlined_call_operand.hbm [shape: f32[2,8,8], index: 14, kind: output, shape index: {1}]
  %15 = xla_tuple %s13, %s14
  %s16 = sld [smem:[#allocation0]]
  $region93: #{tpu_custom_call.1} parent=0
    _
  %s18 = ssub.s32 1, %s16
  %s19 = scalar_select 0, %s18, %s16
  $region1: #{tpu_custom_call.1} parent=0
    #allocation2 [shape = 'u8[8192]{0}', space=vmem, size = 0x2000, scoped, tag = 'output window, operand 0']
    #allocation3 [shape = 's32[2]{0}', space=sflag, size = 0x8, scoped, tag = 'scoped memory for tpu_custom_call.1']
    #allocation4 [shape = 'u8[8192]{0}', space=vmem, size = 0x2000, scoped, tag = 'output window, operand 1']
    #allocation5 [shape = 's32[2]{0}', space=sflag, size = 0x8, scoped, tag = 'scoped memory for tpu_custom_call.1']
    %20 = vsyncpa [#allocation3], 0
    %s21 = scalar_lea.sflag [#allocation3], 1
    %22 = vsyncpa %s21, 0
    %23 = vsyncpa [#allocation5], 0
    %s24 = scalar_lea.sflag [#allocation5], 1
    %25 = vsyncpa %s24, 0
    loop: start=0, step=1, limit=4
    $region2: #{tpu_custom_call.1} parent=1 // loop_pre_header
      _
    $region3: #{tpu_custom_call.1} parent=1 // loop_header
      %s27 = sphi 0, %s31
      %p28 = scmp.ge.s32.totalorder %s27, 4
      %s37 = sphi 0, %s39
      %s40 = sphi 0, %s37
      %s41 = sphi 0, %s40
      %s57 = sphi 0, %s41
      %s61 = sphi 0, %s61
      %s63 = sphi 0, %s61
      %s64 = sphi 0, %s63
      %s78 = sphi 0, %s64
      %s82 = sphi 0, %s82
      %s84 = sphi 0, %s82
      %s85 = sphi 0, %s84
      %s99 = sphi 0, %s85
      %s103 = sphi 0, %s103
      %s105 = sphi 0, %s103
      %s106 = sphi 0, %s105
      %s120 = sphi 0, %s106
      %s124 = sphi 0, %s124
      %s126 = sphi 0, %s124
      %s127 = sphi 0, %s126
      %s141 = sphi 0, %s127
      %s145 = sphi 0, %s145
      %s147 = sphi 0, %s145
      %s148 = sphi 0, %s147
      %s162 = sphi 0, %s148
      %s166 = sphi 0, %s166
      %s168 = sphi 0, %s166
      %s169 = sphi 0, %s168
      %s183 = sphi 0, %s169
      %s187 = sphi 0, %s187
      %s189 = sphi 0, %s187
      %s190 = sphi 0, %s189
      %s204 = sphi 0, %s190
      %s208 = sphi 0, %s208
      %s210 = sphi 0, %s208
      %s211 = sphi 0, %s210
      %s225 = sphi 0, %s211
      %s229 = sphi 0, %s229
      %s231 = sphi 0, %s229
      %s232 = sphi 0, %s231
      %s246 = sphi 0, %s232
      %s250 = sphi 0, %s250
      %s252 = sphi 0, %s250
      %s253 = sphi 0, %s252
      %s267 = sphi 0, %s253
      %s271 = sphi 0, %s271
      %s273 = sphi 0, %s271
      %s274 = sphi 0, %s273
      %s288 = sphi 0, %s274
      %s292 = sphi 0, %s292
      %s294 = sphi 0, %s292
      %s295 = sphi 0, %s294
      %s309 = sphi 0, %s295
      %s315 = sphi 0, %s317
      %s318 = sphi 0, %s315
      %s319 = sphi 0, %s318
      %s335 = sphi 0, %s319
      %s341 = sphi 0, %s343
      %s344 = sphi 0, %s341
      %s345 = sphi 0, %s344
      %s361 = sphi 0, %s345
    $region4: #{tpu_custom_call.1} parent=1 // loop_header_branch
      %30 = sbr.rel (%p28) target = $region8
    $region5: #{tpu_custom_call.1} parent=1 // loop_body
      %s32 = ssub.s32 %s27, 1
      %s33 = ssub.s32 %s27, 2
      %s34 = sadd.s32 %s27, 1
      %s35 = ssub.s32 %s27, %s34
      %p36 = scmp.eq.s32.totalorder %s35, 0
      %s38 = sadd.s32 %s37, 1
      %s39 = scalar_select %p36, %s37, %s38
      %p42 = pneg %p36
      %p43 = scmp.eq.s32.totalorder %s27, 1
      %p44 = por %p42, %p43
      %p45 = scmp.ne.s32.totalorder %s37, %s40
      %p46 = scmp.eq.s32.totalorder %s27, 0
      %p47 = por %p45, %p46
      %p48 = scmp.ne.s32.totalorder %s37, %s40
      %p49 = scmp.eq.s32.totalorder %s32, 1
      %p50 = por %p48, %p49
      %p51 = scmp.ne.s32.totalorder %s40, %s41
      %p52 = scmp.eq.s32.totalorder %s32, 0
      %p53 = por %p51, %p52
      %p54 = scmp.ne.s32.totalorder %s40, %s41
      %p55 = scmp.eq.s32.totalorder %s33, 1
      %p56 = por %p54, %p55
      %p58 = scmp.ne.s32.totalorder %s41, %s57
      %p59 = scmp.eq.s32.totalorder %s33, 0
      %p60 = por %p58, %p59
      %s62 = sadd.s32 %s61, 1
      %p65 = scmp.eq.s32.totalorder %s27, 1
      %p66 = scmp.ne.s32.totalorder %s61, %s63
      %p67 = scmp.eq.s32.totalorder %s27, 0
      %p68 = por %p66, %p67
      %p69 = scmp.ne.s32.totalorder %s61, %s63
      %p70 = scmp.eq.s32.totalorder %s32, 1
      %p71 = por %p69, %p70
      %p72 = scmp.ne.s32.totalorder %s63, %s64
      %p73 = scmp.eq.s32.totalorder %s32, 0
      %p74 = por %p72, %p73
      %p75 = scmp.ne.s32.totalorder %s63, %s64
      %p76 = scmp.eq.s32.totalorder %s33, 1
      %p77 = por %p75, %p76
      %p79 = scmp.ne.s32.totalorder %s64, %s78
      %p80 = scmp.eq.s32.totalorder %s33, 0
      %p81 = por %p79, %p80
      %s83 = sadd.s32 %s82, 1
      %p86 = scmp.eq.s32.totalorder %s27, 1
      %p87 = scmp.ne.s32.totalorder %s82, %s84
      %p88 = scmp.eq.s32.totalorder %s27, 0
      %p89 = por %p87, %p88
      %p90 = scmp.ne.s32.totalorder %s82, %s84
      %p91 = scmp.eq.s32.totalorder %s32, 1
      %p92 = por %p90, %p91
      %p93 = scmp.ne.s32.totalorder %s84, %s85
      %p94 = scmp.eq.s32.totalorder %s32, 0
      %p95 = por %p93, %p94
      %p96 = scmp.ne.s32.totalorder %s84, %s85
      %p97 = scmp.eq.s32.totalorder %s33, 1
      %p98 = por %p96, %p97
      %p100 = scmp.ne.s32.totalorder %s85, %s99
      %p101 = scmp.eq.s32.totalorder %s33, 0
      %p102 = por %p100, %p101
      %s104 = sadd.s32 %s103, 1
      %p107 = scmp.eq.s32.totalorder %s27, 1
      %p108 = scmp.ne.s32.totalorder %s103, %s105
      %p109 = scmp.eq.s32.totalorder %s27, 0
      %p110 = por %p108, %p109
      %p111 = scmp.ne.s32.totalorder %s103, %s105
      %p112 = scmp.eq.s32.totalorder %s32, 1
      %p113 = por %p111, %p112
      %p114 = scmp.ne.s32.totalorder %s105, %s106
      %p115 = scmp.eq.s32.totalorder %s32, 0
      %p116 = por %p114, %p115
      %p117 = scmp.ne.s32.totalorder %s105, %s106
      %p118 = scmp.eq.s32.totalorder %s33, 1
      %p119 = por %p117, %p118
      %p121 = scmp.ne.s32.totalorder %s106, %s120
      %p122 = scmp.eq.s32.totalorder %s33, 0
      %p123 = por %p121, %p122
      %s125 = sadd.s32 %s124, 1
      %p128 = scmp.eq.s32.totalorder %s27, 1
      %p129 = scmp.ne.s32.totalorder %s124, %s126
      %p130 = scmp.eq.s32.totalorder %s27, 0
      %p131 = por %p129, %p130
      %p132 = scmp.ne.s32.totalorder %s124, %s126
      %p133 = scmp.eq.s32.totalorder %s32, 1
      %p134 = por %p132, %p133
      %p135 = scmp.ne.s32.totalorder %s126, %s127
      %p136 = scmp.eq.s32.totalorder %s32, 0
      %p137 = por %p135, %p136
      %p138 = scmp.ne.s32.totalorder %s126, %s127
      %p139 = scmp.eq.s32.totalorder %s33, 1
      %p140 = por %p138, %p139
      %p142 = scmp.ne.s32.totalorder %s127, %s141
      %p143 = scmp.eq.s32.totalorder %s33, 0
      %p144 = por %p142, %p143
      %s146 = sadd.s32 %s145, 1
      %p149 = scmp.eq.s32.totalorder %s27, 1
      %p150 = scmp.ne.s32.totalorder %s145, %s147
      %p151 = scmp.eq.s32.totalorder %s27, 0
      %p152 = por %p150, %p151
      %p153 = scmp.ne.s32.totalorder %s145, %s147
      %p154 = scmp.eq.s32.totalorder %s32, 1
      %p155 = por %p153, %p154
      %p156 = scmp.ne.s32.totalorder %s147, %s148
      %p157 = scmp.eq.s32.totalorder %s32, 0
      %p158 = por %p156, %p157
      %p159 = scmp.ne.s32.totalorder %s147, %s148
      %p160 = scmp.eq.s32.totalorder %s33, 1
      %p161 = por %p159, %p160
      %p163 = scmp.ne.s32.totalorder %s148, %s162
      %p164 = scmp.eq.s32.totalorder %s33, 0
      %p165 = por %p163, %p164
      %s167 = sadd.s32 %s166, 1
      %p170 = scmp.eq.s32.totalorder %s27, 1
      %p171 = scmp.ne.s32.totalorder %s166, %s168
      %p172 = scmp.eq.s32.totalorder %s27, 0
      %p173 = por %p171, %p172
      %p174 = scmp.ne.s32.totalorder %s166, %s168
      %p175 = scmp.eq.s32.totalorder %s32, 1
      %p176 = por %p174, %p175
      %p177 = scmp.ne.s32.totalorder %s168, %s169
      %p178 = scmp.eq.s32.totalorder %s32, 0
      %p179 = por %p177, %p178
      %p180 = scmp.ne.s32.totalorder %s168, %s169
      %p181 = scmp.eq.s32.totalorder %s33, 1
      %p182 = por %p180, %p181
      %p184 = scmp.ne.s32.totalorder %s169, %s183
      %p185 = scmp.eq.s32.totalorder %s33, 0
      %p186 = por %p184, %p185
      %s188 = sadd.s32 %s187, 1
      %p191 = scmp.eq.s32.totalorder %s27, 1
      %p192 = scmp.ne.s32.totalorder %s187, %s189
      %p193 = scmp.eq.s32.totalorder %s27, 0
      %p194 = por %p192, %p193
      %p195 = scmp.ne.s32.totalorder %s187, %s189
      %p196 = scmp.eq.s32.totalorder %s32, 1
      %p197 = por %p195, %p196
      %p198 = scmp.ne.s32.totalorder %s189, %s190
      %p199 = scmp.eq.s32.totalorder %s32, 0
      %p200 = por %p198, %p199
      %p201 = scmp.ne.s32.totalorder %s189, %s190
      %p202 = scmp.eq.s32.totalorder %s33, 1
      %p203 = por %p201, %p202
      %p205 = scmp.ne.s32.totalorder %s190, %s204
      %p206 = scmp.eq.s32.totalorder %s33, 0
      %p207 = por %p205, %p206
      %s209 = sadd.s32 %s208, 1
      %p212 = scmp.eq.s32.totalorder %s27, 1
      %p213 = scmp.ne.s32.totalorder %s208, %s210
      %p214 = scmp.eq.s32.totalorder %s27, 0
      %p215 = por %p213, %p214
      %p216 = scmp.ne.s32.totalorder %s208, %s210
      %p217 = scmp.eq.s32.totalorder %s32, 1
      %p218 = por %p216, %p217
      %p219 = scmp.ne.s32.totalorder %s210, %s211
      %p220 = scmp.eq.s32.totalorder %s32, 0
      %p221 = por %p219, %p220
      %p222 = scmp.ne.s32.totalorder %s210, %s211
      %p223 = scmp.eq.s32.totalorder %s33, 1
      %p224 = por %p222, %p223
      %p226 = scmp.ne.s32.totalorder %s211, %s225
      %p227 = scmp.eq.s32.totalorder %s33, 0
      %p228 = por %p226, %p227
      %s230 = sadd.s32 %s229, 1
      %p233 = scmp.eq.s32.totalorder %s27, 1
      %p234 = scmp.ne.s32.totalorder %s229, %s231
      %p235 = scmp.eq.s32.totalorder %s27, 0
      %p236 = por %p234, %p235
      %p237 = scmp.ne.s32.totalorder %s229, %s231
      %p238 = scmp.eq.s32.totalorder %s32, 1
      %p239 = por %p237, %p238
      %p240 = scmp.ne.s32.totalorder %s231, %s232
      %p241 = scmp.eq.s32.totalorder %s32, 0
      %p242 = por %p240, %p241
      %p243 = scmp.ne.s32.totalorder %s231, %s232
      %p244 = scmp.eq.s32.totalorder %s33, 1
      %p245 = por %p243, %p244
      %p247 = scmp.ne.s32.totalorder %s232, %s246
      %p248 = scmp.eq.s32.totalorder %s33, 0
      %p249 = por %p247, %p248
      %s251 = sadd.s32 %s250, 1
      %p254 = scmp.eq.s32.totalorder %s27, 1
      %p255 = scmp.ne.s32.totalorder %s250, %s252
      %p256 = scmp.eq.s32.totalorder %s27, 0
      %p257 = por %p255, %p256
      %p258 = scmp.ne.s32.totalorder %s250, %s252
      %p259 = scmp.eq.s32.totalorder %s32, 1
      %p260 = por %p258, %p259
      %p261 = scmp.ne.s32.totalorder %s252, %s253
      %p262 = scmp.eq.s32.totalorder %s32, 0
      %p263 = por %p261, %p262
      %p264 = scmp.ne.s32.totalorder %s252, %s253
      %p265 = scmp.eq.s32.totalorder %s33, 1
      %p266 = por %p264, %p265
      %p268 = scmp.ne.s32.totalorder %s253, %s267
      %p269 = scmp.eq.s32.totalorder %s33, 0
      %p270 = por %p268, %p269
      %s272 = sadd.s32 %s271, 1
      %p275 = scmp.eq.s32.totalorder %s27, 1
      %p276 = scmp.ne.s32.totalorder %s271, %s273
      %p277 = scmp.eq.s32.totalorder %s27, 0
      %p278 = por %p276, %p277
      %p279 = scmp.ne.s32.totalorder %s271, %s273
      %p280 = scmp.eq.s32.totalorder %s32, 1
      %p281 = por %p279, %p280
      %p282 = scmp.ne.s32.totalorder %s273, %s274
      %p283 = scmp.eq.s32.totalorder %s32, 0
      %p284 = por %p282, %p283
      %p285 = scmp.ne.s32.totalorder %s273, %s274
      %p286 = scmp.eq.s32.totalorder %s33, 1
      %p287 = por %p285, %p286
      %p289 = scmp.ne.s32.totalorder %s274, %s288
      %p290 = scmp.eq.s32.totalorder %s33, 0
      %p291 = por %p289, %p290
      %s293 = sadd.s32 %s292, 1
      %p296 = scmp.eq.s32.totalorder %s27, 1
      %p297 = scmp.ne.s32.totalorder %s292, %s294
      %p298 = scmp.eq.s32.totalorder %s27, 0
      %p299 = por %p297, %p298
      %p300 = scmp.ne.s32.totalorder %s292, %s294
      %p301 = scmp.eq.s32.totalorder %s32, 1
      %p302 = por %p300, %p301
      %p303 = scmp.ne.s32.totalorder %s294, %s295
      %p304 = scmp.eq.s32.totalorder %s32, 0
      %p305 = por %p303, %p304
      %p306 = scmp.ne.s32.totalorder %s294, %s295
      %p307 = scmp.eq.s32.totalorder %s33, 1
      %p308 = por %p306, %p307
      %p310 = scmp.ne.s32.totalorder %s295, %s309
      %p311 = scmp.eq.s32.totalorder %s33, 0
      %p312 = por %p310, %p311
      %s313 = ssub.s32 %s27, %s34
      %p314 = scmp.eq.s32.totalorder %s313, 0
      %s316 = sadd.s32 %s315, 1
      %s317 = scalar_select %p314, %s315, %s316
      %p320 = pneg %p314
      %p321 = scmp.eq.s32.totalorder %s27, 1
      %p322 = por %p320, %p321
      %p323 = scmp.ne.s32.totalorder %s315, %s318
      %p324 = scmp.eq.s32.totalorder %s27, 0
      %p325 = por %p323, %p324
      %p326 = scmp.ne.s32.totalorder %s315, %s318
      %p327 = scmp.eq.s32.totalorder %s32, 1
      %p328 = por %p326, %p327
      %p329 = scmp.ne.s32.totalorder %s318, %s319
      %p330 = scmp.eq.s32.totalorder %s32, 0
      %p331 = por %p329, %p330
      %p332 = scmp.ne.s32.totalorder %s318, %s319
      %p333 = scmp.eq.s32.totalorder %s33, 1
      %p334 = por %p332, %p333
      %p336 = scmp.ne.s32.totalorder %s319, %s335
      %p337 = scmp.eq.s32.totalorder %s33, 0
      %p338 = por %p336, %p337
      %s339 = ssub.s32 %s27, %s34
      %p340 = scmp.eq.s32.totalorder %s339, 0
      %s342 = sadd.s32 %s341, 1
      %s343 = scalar_select %p340, %s341, %s342
      %p346 = pneg %p340
      %p347 = scmp.eq.s32.totalorder %s27, 1
      %p348 = por %p346, %p347
      %p349 = scmp.ne.s32.totalorder %s341, %s344
      %p350 = scmp.eq.s32.totalorder %s27, 0
      %p351 = por %p349, %p350
      %p352 = scmp.ne.s32.totalorder %s341, %s344
      %p353 = scmp.eq.s32.totalorder %s32, 1
      %p354 = por %p352, %p353
      %p355 = scmp.ne.s32.totalorder %s344, %s345
      %p356 = scmp.eq.s32.totalorder %s32, 0
      %p357 = por %p355, %p356
      %p358 = scmp.ne.s32.totalorder %s344, %s345
      %p359 = scmp.eq.s32.totalorder %s33, 1
      %p360 = por %p358, %p359
      %p362 = scmp.ne.s32.totalorder %s345, %s361
      %p363 = scmp.eq.s32.totalorder %s33, 0
      %p364 = por %p362, %p363
      %p365 = scmp.le.s32.totalorder 1, %s27
      %p366 = scmp.lt.s32.totalorder %s27, 3
      %p367 = pnand %p365, %p366
      %p368 = pneg %p367
      // Predicated region
      $region9: #{tpu_custom_call.1} parent=5 // pred_check
        _
      $region10: #{tpu_custom_call.1} parent=5 // pred_check_branch
        %370 = sbr.rel (%p367) target = $region12
      $region11: #{tpu_custom_call.1} parent=5 // pred_region
        %s371 = ssub.s32 %s27, 1
        // Predicated region
        $region13: #{tpu_custom_call.1} parent=11 // pred_check
          %p372 = pneg %p74
        $region14: #{tpu_custom_call.1} parent=11 // pred_check_branch
          %374 = sbr.rel (%p372) target = $region16
        $region15: #{tpu_custom_call.1} parent=11 // pred_region
          _
        $region16: #{tpu_custom_call.1} parent=11 // pred_fallthru
          _
        // Predicated region
        $region17: #{tpu_custom_call.1} parent=11 // pred_check
          %p375 = pneg %p95
        $region18: #{tpu_custom_call.1} parent=11 // pred_check_branch
          %377 = sbr.rel (%p375) target = $region20
        $region19: #{tpu_custom_call.1} parent=11 // pred_region
          _
        $region20: #{tpu_custom_call.1} parent=11 // pred_fallthru
          _
        // Predicated region
        $region21: #{tpu_custom_call.1} parent=11 // pred_check
          %p378 = pneg %p116
        $region22: #{tpu_custom_call.1} parent=11 // pred_check_branch
          %380 = sbr.rel (%p378) target = $region24
        $region23: #{tpu_custom_call.1} parent=11 // pred_region
          _
        $region24: #{tpu_custom_call.1} parent=11 // pred_fallthru
          _
        // Predicated region
        $region25: #{tpu_custom_call.1} parent=11 // pred_check
          %p381 = pneg %p137
        $region26: #{tpu_custom_call.1} parent=11 // pred_check_branch
          %383 = sbr.rel (%p381) target = $region28
        $region27: #{tpu_custom_call.1} parent=11 // pred_region
          _
        $region28: #{tpu_custom_call.1} parent=11 // pred_fallthru
          _
        // Predicated region
        $region29: #{tpu_custom_call.1} parent=11 // pred_check
          %p384 = pneg %p158
        $region30: #{tpu_custom_call.1} parent=11 // pred_check_branch
          %386 = sbr.rel (%p384) target = $region32
        $region31: #{tpu_custom_call.1} parent=11 // pred_region
          _
        $region32: #{tpu_custom_call.1} parent=11 // pred_fallthru
          _
        // Predicated region
        $region33: #{tpu_custom_call.1} parent=11 // pred_check
          %p387 = pneg %p179
        $region34: #{tpu_custom_call.1} parent=11 // pred_check_branch
          %389 = sbr.rel (%p387) target = $region36
        $region35: #{tpu_custom_call.1} parent=11 // pred_region
          _
        $region36: #{tpu_custom_call.1} parent=11 // pred_fallthru
          _
        // Predicated region
        $region37: #{tpu_custom_call.1} parent=11 // pred_check
          %p390 = pneg %p200
        $region38: #{tpu_custom_call.1} parent=11 // pred_check_branch
          %392 = sbr.rel (%p390) target = $region40
        $region39: #{tpu_custom_call.1} parent=11 // pred_region
          _
        $region40: #{tpu_custom_call.1} parent=11 // pred_fallthru
          _
        // Predicated region
        $region41: #{tpu_custom_call.1} parent=11 // pred_check
          %p393 = pneg %p221
        $region42: #{tpu_custom_call.1} parent=11 // pred_check_branch
          %395 = sbr.rel (%p393) target = $region44
        $region43: #{tpu_custom_call.1} parent=11 // pred_region
          _
        $region44: #{tpu_custom_call.1} parent=11 // pred_fallthru
          _
        // Predicated region
        $region45: #{tpu_custom_call.1} parent=11 // pred_check
          %p396 = pneg %p242
        $region46: #{tpu_custom_call.1} parent=11 // pred_check_branch
          %398 = sbr.rel (%p396) target = $region48
        $region47: #{tpu_custom_call.1} parent=11 // pred_region
          _
        $region48: #{tpu_custom_call.1} parent=11 // pred_fallthru
          _
        // Predicated region
        $region49: #{tpu_custom_call.1} parent=11 // pred_check
          %p399 = pneg %p263
        $region50: #{tpu_custom_call.1} parent=11 // pred_check_branch
          %401 = sbr.rel (%p399) target = $region52
        $region51: #{tpu_custom_call.1} parent=11 // pred_region
          _
        $region52: #{tpu_custom_call.1} parent=11 // pred_fallthru
          _
        // Predicated region
        $region53: #{tpu_custom_call.1} parent=11 // pred_check
          %p402 = pneg %p284
        $region54: #{tpu_custom_call.1} parent=11 // pred_check_branch
          %404 = sbr.rel (%p402) target = $region56
        $region55: #{tpu_custom_call.1} parent=11 // pred_region
          _
        $region56: #{tpu_custom_call.1} parent=11 // pred_fallthru
          _
        // Predicated region
        $region57: #{tpu_custom_call.1} parent=11 // pred_check
          %p405 = pneg %p305
        $region58: #{tpu_custom_call.1} parent=11 // pred_check_branch
          %407 = sbr.rel (%p405) target = $region60
        $region59: #{tpu_custom_call.1} parent=11 // pred_region
          _
        $region60: #{tpu_custom_call.1} parent=11 // pred_fallthru
          _
      $region12: #{tpu_custom_call.1} parent=5 // pred_fallthru
        _
      %p408 = scmp.lt.s32.totalorder %s27, 2
      // Predicated region
      $region61: #{tpu_custom_call.1} parent=5 // pred_check
        %p409 = pneg %p408
      $region62: #{tpu_custom_call.1} parent=5 // pred_check_branch
        %411 = sbr.rel (%p409) target = $region64
      $region63: #{tpu_custom_call.1} parent=5 // pred_region
        // Predicated region
        $region65: #{tpu_custom_call.1} parent=63 // pred_check
          %p412 = pneg %p47
        $region66: #{tpu_custom_call.1} parent=63 // pred_check_branch
          %414 = sbr.rel (%p412) target = $region68
        $region67: #{tpu_custom_call.1} parent=63 // pred_region
          %p415 = scmp.lt.s32.totalorder %s27, 1
          %s416 = scalar_select %p415, %s27, 1
          %s417 = smul.addr %s416, 8
          %s418 = scalar_lea.vmem %s0, %s417
        $region68: #{tpu_custom_call.1} parent=63 // pred_fallthru
          _
      $region64: #{tpu_custom_call.1} parent=5 // pred_fallthru
        _
      %p419 = scmp.le.s32.totalorder 1, %s27
      %p420 = scmp.lt.s32.totalorder %s27, 3
      %p421 = pnand %p419, %p420
      %p422 = pneg %p421
      // Predicated region
      $region69: #{tpu_custom_call.1} parent=5 // pred_check
        _
      $region70: #{tpu_custom_call.1} parent=5 // pred_check_branch
        %424 = sbr.rel (%p421) target = $region72
      $region71: #{tpu_custom_call.1} parent=5 // pred_region
        %s425 = ssub.s32 %s27, 1
        %p426 = scmp.lt.s32.totalorder %s32, 1
        %s427 = scalar_select %p426, %s32, 1
        %s428 = smul.addr %s427, 8
        %s429 = scalar_lea.vmem %s0, %s428
        %p430 = pneg %p53
        %p431 = pneg %p50
        %p432 = pneg %p74
        %p433 = pneg %p71
        %p434 = pneg %p95
        %p435 = pneg %p92
        %p436 = pneg %p116
        %p437 = pneg %p113
        %p438 = pneg %p137
        %p439 = pneg %p134
        %p440 = pneg %p158
        %p441 = pneg %p155
        %p442 = pneg %p179
        %p443 = pneg %p176
        %p444 = pneg %p200
        %p445 = pneg %p197
        %p446 = pneg %p221
        %p447 = pneg %p218
        %p448 = pneg %p242
        %p449 = pneg %p239
        %p450 = pneg %p263
        %p451 = pneg %p260
        %p452 = pneg %p284
        %p453 = pneg %p281
        %p454 = pneg %p305
        %p455 = pneg %p302
        %p456 = pneg %p331
        %p457 = pneg %p328
        %s458 = sand.u32 %s318, 1
        %s459 = scalar_lea.sflag [#allocation3], %s458
        %s460 = sand.u32 %s318, 1
        %s461 = smul.addr %s460, 8
        %s462 = scalar_lea.vmem [#allocation2], %s461
        %p463 = pneg %p357
        %p464 = pneg %p354
        %s465 = sand.u32 %s344, 1
        %s466 = scalar_lea.sflag [#allocation5], %s465
        %s467 = sand.u32 %s344, 1
        %s468 = smul.addr %s467, 8
        %s469 = scalar_lea.vmem [#allocation4], %s468
        %p470 = scmp.lt.s32.totalorder %s32, 1
        %s471 = scalar_select %p470, %s32, 1
        %s472 = smul.addr %s471, 8
        %s473 = scalar_lea.vmem %s0, %s472
        %v474 = vld [vmem:[%s473] sm:$0xff]
        %vm475 = vcmask 261120
        %v476 = vsel %vm475, %v474, 0.0
        %477 = vadd.xlane.f32.xlu0 %v476
        %v478 = vpop.xlane.xlu0 %477
        %v479 = vrcp.pop 32.0
        %v480 = vmul.f32 %v478, %v479
        %v481 = vsub.f32 %v474, %v480
        %v482 = vmul.f32 %v481, %v481
        %v483 = vsel %vm475, %v482, 0.0
        %484 = vadd.xlane.f32.xlu0 %v483
        %v485 = vpop.xlane.xlu0 %484
        %v486 = vmul.f32 %v485, %v479
        %v487 = vadd.f32 %v486, 1e-05
        %v488 = vrsqrt.pop %v487
        %v489 = vmul.f32 %v481, %v488
        %v490 = vld [vmem:[%s1] sm:$0x1]
        %v492 = vlaneseq
        %v493 = vshrl.u32 %v492, 7
        %v494 = vsub.s32 0, %v493
        %v495 = vrot.slane %v490, %v494
        %v497 = vmul.f32 %v489, %v495
        %v498 = vld [vmem:[%s2] sm:$0x1]
        %v500 = vlaneseq
        %v501 = vshrl.u32 %v500, 7
        %v502 = vsub.s32 0, %v501
        %v503 = vrot.slane %v498, %v502
        %v505 = vadd.f32 %v497, %v503
        %v506 = vld [vmem:[%s3] sm:$0xff]
        %v507 = vld [vmem:[%s3 + $0x8] sm:$0xff]
        %v508 = vld [vmem:[%s3 + $0x10] sm:$0xff]
        %v509 = vld [vmem:[%s3 + $0x18] sm:$0xff]
        %v510 = vld [vmem:[%s4] sm:$0x1]
        %v512 = vlaneseq
        %v513 = vshrl.u32 %v512, 7
        %v514 = vsub.s32 0, %v513
        %v515 = vrot.slane %v510, %v514
        %v518 = vsel %vm475, %v505, 0
        %520 = vmatprep.subr.mxu0 0.0
        %521 = vmatpush1.msra.mxu0 %v506
        %522 = vmatprep.subr.mxu0 0.0
        %523 = vmatpush1.msra.mxu0 %v507
        %524 = vmatprep.subr.mxu0 0.0
        %525 = vmatpush1.msra.mxu0 %v508
        %526 = vmatprep.subr.mxu0 0.0
        %527 = vmatpush1.msra.mxu0 %v509
        %528 = vmatprep.subr.mxu0 0.0
        %529 = vmatpush1.msra.mxu0 0.0
        %530 = vmatprep.subr.mxu0 0.0
        %531 = vmatpush1.msra.mxu0 0.0
        %532 = vmatprep.subr.mxu0 0.0
        %533 = vmatpush1.msra.mxu0 0.0
        %534 = vmatprep.subr.mxu0 0.0
        %535 = vmatpush1.msra.mxu0 0.0
        %536 = vmatprep.subr.mxu0 0.0
        %537 = vmatpush1.msra.mxu0 0.0
        %538 = vmatprep.subr.mxu0 0.0
        %539 = vmatpush1.msra.mxu0 0.0
        %540 = vmatprep.subr.mxu0 0.0
        %541 = vmatpush1.msra.mxu0 0.0
        %542 = vmatprep.subr.mxu0 0.0
        %543 = vmatpush1.msra.mxu0 0.0
        %544 = vmatprep.subr.mxu0 0.0
        %545 = vmatpush1.msra.mxu0 0.0
        %546 = vmatprep.subr.mxu0 0.0
        %547 = vmatpush1.msra.mxu0 0.0
        %548 = vmatprep.subr.mxu0 0.0
        %549 = vmatpush1.msra.mxu0 0.0
        %550 = vmatprep.subr.mxu0 0.0
        %551 = vmatpush1.msra.mxu0 0.0
        %552 = vmatprep.subr.mxu0 0.0
        %553 = vmatpush1.msra.mxu0 0.0
        %554 = vmatprep.subr.mxu0 0.0
        %555 = vmatpush1.msra.mxu0 0.0
        %556 = vmatprep.subr.mxu0 0.0
        %557 = vmatpush1.msra.mxu0 0.0
        %558 = vmatprep.subr.mxu0 0.0
        %559 = vmatpush1.msra.mxu0 0.0
        %560 = vmatprep.subr.mxu0 0.0
        %561 = vmatpush1.msra.mxu0 0.0
        %562 = vmatprep.subr.mxu0 0.0
        %563 = vmatpush1.msra.mxu0 0.0
        %564 = vmatprep.subr.mxu0 0.0
        %565 = vmatpush1.msra.mxu0 0.0
        %566 = vmatprep.subr.mxu0 0.0
        %567 = vmatpush1.msra.mxu0 0.0
        %568 = vmatprep.subr.mxu0 0.0
        %569 = vmatpush1.msra.mxu0 0.0
        %570 = vmatprep.subr.mxu0 0.0
        %571 = vmatpush1.msra.mxu0 0.0
        %572 = vmatprep.subr.mxu0 0.0
        %573 = vmatpush1.msra.mxu0 0.0
        %574 = vmatprep.subr.mxu0 0.0
        %575 = vmatpush1.msra.mxu0 0.0
        %576 = vmatprep.subr.mxu0 0.0
        %577 = vmatpush1.msra.mxu0 0.0
        %578 = vmatprep.subr.mxu0 0.0
        %579 = vmatpush1.msra.mxu0 0.0
        %580 = vmatprep.subr.mxu0 0.0
        %581 = vmatpush1.msra.mxu0 0.0
        %582 = vmatprep.subr.mxu0 0.0
        %583 = vmatpush1.msra.mxu0 0.0
        %584 = vmatprep.mubr.f32.mxu0 0.0
        %585 = vmatmul.mubr.f32.gmra.mrb[0].mxu0 %v518
        %v586 = vpop.f32.mrb[0].mxu0
        %v587 = vadd.f32 %v515, %v586
        %v588 = vpop.f32.mrb[0].mxu0
        %589 = vdwg.mxu0
        %v590 = vmul.f32 %v587, 0.35355338
        %592 = vrot.lane.b32.xlu0 %v587, 96
        %v593 = vpop.permute.xlu0 %592
        %vm594 = vcmask 64512
        %v596 = vsel %vm594, %v590, 0
        %v598 = vsel %vm594, %v593, 0
        %600 = vmatprep.subr.mxu0 0.0
        %601 = vmatpush1.xpose.msra.mxu0 %v598
        %602 = vmatprep.subr.mxu0 0.0
        %603 = vmatpush1.xpose.msra.mxu0 0.0
        %604 = vmatprep.subr.mxu0 0.0
        %605 = vmatpush1.xpose.msra.mxu0 0.0
        %606 = vmatprep.subr.mxu0 0.0
        %607 = vmatpush1.xpose.msra.mxu0 0.0
        %608 = vmatprep.subr.mxu0 0.0
        %609 = vmatpush1.xpose.msra.mxu0 0.0
        %610 = vmatprep.subr.mxu0 0.0
        %611 = vmatpush1.xpose.msra.mxu0 0.0
        %612 = vmatprep.subr.mxu0 0.0
        %613 = vmatpush1.xpose.msra.mxu0 0.0
        %614 = vmatprep.subr.mxu0 0.0
        %615 = vmatpush1.xpose.msra.mxu0 0.0
        %616 = vmatprep.subr.mxu0 0.0
        %617 = vmatpush1.xpose.msra.mxu0 0.0
        %618 = vmatprep.subr.mxu0 0.0
        %619 = vmatpush1.xpose.msra.mxu0 0.0
        %620 = vmatprep.subr.mxu0 0.0
        %621 = vmatpush1.xpose.msra.mxu0 0.0
        %622 = vmatprep.subr.mxu0 0.0
        %623 = vmatpush1.xpose.msra.mxu0 0.0
        %624 = vmatprep.subr.mxu0 0.0
        %625 = vmatpush1.xpose.msra.mxu0 0.0
        %626 = vmatprep.subr.mxu0 0.0
        %627 = vmatpush1.xpose.msra.mxu0 0.0
        %628 = vmatprep.subr.mxu0 0.0
        %629 = vmatpush1.xpose.msra.mxu0 0.0
        %630 = vmatprep.subr.mxu0 0.0
        %631 = vmatpush1.xpose.msra.mxu0 0.0
        %632 = vmatprep.subr.mxu0 0.0
        %633 = vmatpush1.xpose.msra.mxu0 0.0
        %634 = vmatprep.subr.mxu0 0.0
        %635 = vmatpush1.xpose.msra.mxu0 0.0
        %636 = vmatprep.subr.mxu0 0.0
        %637 = vmatpush1.xpose.msra.mxu0 0.0
        %638 = vmatprep.subr.mxu0 0.0
        %639 = vmatpush1.xpose.msra.mxu0 0.0
        %640 = vmatprep.subr.mxu0 0.0
        %641 = vmatpush1.xpose.msra.mxu0 0.0
        %642 = vmatprep.subr.mxu0 0.0
        %643 = vmatpush1.xpose.msra.mxu0 0.0
        %644 = vmatprep.subr.mxu0 0.0
        %645 = vmatpush1.xpose.msra.mxu0 0.0
        %646 = vmatprep.subr.mxu0 0.0
        %647 = vmatpush1.xpose.msra.mxu0 0.0
        %648 = vmatprep.subr.mxu0 0.0
        %649 = vmatpush1.xpose.msra.mxu0 0.0
        %650 = vmatprep.subr.mxu0 0.0
        %651 = vmatpush1.xpose.msra.mxu0 0.0
        %652 = vmatprep.subr.mxu0 0.0
        %653 = vmatpush1.xpose.msra.mxu0 0.0
        %654 = vmatprep.subr.mxu0 0.0
        %655 = vmatpush1.xpose.msra.mxu0 0.0
        %656 = vmatprep.subr.mxu0 0.0
        %657 = vmatpush1.xpose.msra.mxu0 0.0
        %658 = vmatprep.subr.mxu0 0.0
        %659 = vmatpush1.xpose.msra.mxu0 0.0
        %660 = vmatprep.subr.mxu0 0.0
        %661 = vmatpush1.xpose.msra.mxu0 0.0
        %662 = vmatprep.subr.mxu0 0.0
        %663 = vmatpush1.xpose.msra.mxu0 0.0
        %664 = vmatprep.mubr.f32.mxu0 0.0
        %665 = vmatmul.mubr.f32.gmra.mrb[0].mxu0 %v596
        %v666 = vpop.f32.mrb[0].mxu0
        %v667 = vadd.f32 0.0, %v666
        %v668 = vpop.f32.mrb[0].mxu0
        %669 = vdwg.mxu0
        %v670 = vsel %vm594, %v667, -inf
        %671 = vmax.xlane.f32.xlu0 %v670
        %v672 = vpop.xlane.xlu0 %671
        %v673 = vsub.f32 %v667, %v672
        %v674 = vmul.f32 %v673, 1.442695
        %v675 = vpow.pop %v674
        %v676 = vsel %vm594, %v675, 0.0
        %677 = vadd.xlane.f32.xlu0 %v676
        %v678 = vpop.xlane.xlu0 %677
        %v679 = vrcp.pop %v678
        %v680 = vmul.f32 %v675, %v679
        %v681 = vadd.f32 %v680, 0.0
        %682 = vrot.lane.b32.xlu0 %v587, 64
        %v683 = vpop.permute.xlu0 %682
        %v686 = vsel %vm594, %v680, 0
        %688 = vmatprep.subr.mxu0 0.0
        %689 = vmatpush1.msra.mxu0 %v683
        %690 = vmatprep.subr.mxu0 0.0
        %691 = vmatpush1.msra.mxu0 0.0
        %692 = vmatprep.subr.mxu0 0.0
        %693 = vmatpush1.msra.mxu0 0.0
        %694 = vmatprep.subr.mxu0 0.0
        %695 = vmatpush1.msra.mxu0 0.0
        %696 = vmatprep.subr.mxu0 0.0
        %697 = vmatpush1.msra.mxu0 0.0
        %698 = vmatprep.subr.mxu0 0.0
        %699 = vmatpush1.msra.mxu0 0.0
        %700 = vmatprep.subr.mxu0 0.0
        %701 = vmatpush1.msra.mxu0 0.0
        %702 = vmatprep.subr.mxu0 0.0
        %703 = vmatpush1.msra.mxu0 0.0
        %704 = vmatprep.subr.mxu0 0.0
        %705 = vmatpush1.msra.mxu0 0.0
        %706 = vmatprep.subr.mxu0 0.0
        %707 = vmatpush1.msra.mxu0 0.0
        %708 = vmatprep.subr.mxu0 0.0
        %709 = vmatpush1.msra.mxu0 0.0
        %710 = vmatprep.subr.mxu0 0.0
        %711 = vmatpush1.msra.mxu0 0.0
        %712 = vmatprep.subr.mxu0 0.0
        %713 = vmatpush1.msra.mxu0 0.0
        %714 = vmatprep.subr.mxu0 0.0
        %715 = vmatpush1.msra.mxu0 0.0
        %716 = vmatprep.subr.mxu0 0.0
        %717 = vmatpush1.msra.mxu0 0.0
        %718 = vmatprep.subr.mxu0 0.0
        %719 = vmatpush1.msra.mxu0 0.0
        %720 = vmatprep.subr.mxu0 0.0
        %721 = vmatpush1.msra.mxu0 0.0
        %722 = vmatprep.subr.mxu0 0.0
        %723 = vmatpush1.msra.mxu0 0.0
        %724 = vmatprep.subr.mxu0 0.0
        %725 = vmatpush1.msra.mxu0 0.0
        %726 = vmatprep.subr.mxu0 0.0
        %727 = vmatpush1.msra.mxu0 0.0
        %728 = vmatprep.subr.mxu0 0.0
        %729 = vmatpush1.msra.mxu0 0.0
        %730 = vmatprep.subr.mxu0 0.0
        %731 = vmatpush1.msra.mxu0 0.0
        %732 = vmatprep.subr.mxu0 0.0
        %733 = vmatpush1.msra.mxu0 0.0
        %734 = vmatprep.subr.mxu0 0.0
        %735 = vmatpush1.msra.mxu0 0.0
        %736 = vmatprep.subr.mxu0 0.0
        %737 = vmatpush1.msra.mxu0 0.0
        %738 = vmatprep.subr.mxu0 0.0
        %739 = vmatpush1.msra.mxu0 0.0
        %740 = vmatprep.subr.mxu0 0.0
        %741 = vmatpush1.msra.mxu0 0.0
        %742 = vmatprep.subr.mxu0 0.0
        %743 = vmatpush1.msra.mxu0 0.0
        %744 = vmatprep.subr.mxu0 0.0
        %745 = vmatpush1.msra.mxu0 0.0
        %746 = vmatprep.subr.mxu0 0.0
        %747 = vmatpush1.msra.mxu0 0.0
        %748 = vmatprep.subr.mxu0 0.0
        %749 = vmatpush1.msra.mxu0 0.0
        %750 = vmatprep.subr.mxu0 0.0
        %751 = vmatpush1.msra.mxu0 0.0
        %752 = vmatprep.mubr.f32.mxu0 0.0
        %753 = vmatmul.mubr.f32.gmra.mrb[0].mxu0 %v686
        %v754 = vpop.f32.mrb[0].mxu0
        %v755 = vadd.f32 0.0, %v754
        %v756 = vpop.f32.mrb[0].mxu0
        %757 = vdwg.mxu0
        %758 = vrot.lane.b32.xlu0 %v590, 120
        %v759 = vpop.permute.xlu0 %758
        %760 = vrot.lane.b32.xlu0 %v587, 88
        %v761 = vpop.permute.xlu0 %760
        %v762 = vsel %vm594, %v759, 0
        %v764 = vsel %vm594, %v761, 0
        %766 = vmatprep.subr.mxu0 0.0
        %767 = vmatpush1.xpose.msra.mxu0 %v764
        %768 = vmatprep.subr.mxu0 0.0
        %769 = vmatpush1.xpose.msra.mxu0 0.0
        %770 = vmatprep.subr.mxu0 0.0
        %771 = vmatpush1.xpose.msra.mxu0 0.0
        %772 = vmatprep.subr.mxu0 0.0
        %773 = vmatpush1.xpose.msra.mxu0 0.0
        %774 = vmatprep.subr.mxu0 0.0
        %775 = vmatpush1.xpose.msra.mxu0 0.0
        %776 = vmatprep.subr.mxu0 0.0
        %777 = vmatpush1.xpose.msra.mxu0 0.0
        %778 = vmatprep.subr.mxu0 0.0
        %779 = vmatpush1.xpose.msra.mxu0 0.0
        %780 = vmatprep.subr.mxu0 0.0
        %781 = vmatpush1.xpose.msra.mxu0 0.0
        %782 = vmatprep.subr.mxu0 0.0
        %783 = vmatpush1.xpose.msra.mxu0 0.0
        %784 = vmatprep.subr.mxu0 0.0
        %785 = vmatpush1.xpose.msra.mxu0 0.0
        %786 = vmatprep.subr.mxu0 0.0
        %787 = vmatpush1.xpose.msra.mxu0 0.0
        %788 = vmatprep.subr.mxu0 0.0
        %789 = vmatpush1.xpose.msra.mxu0 0.0
        %790 = vmatprep.subr.mxu0 0.0
        %791 = vmatpush1.xpose.msra.mxu0 0.0
        %792 = vmatprep.subr.mxu0 0.0
        %793 = vmatpush1.xpose.msra.mxu0 0.0
        %794 = vmatprep.subr.mxu0 0.0
        %795 = vmatpush1.xpose.msra.mxu0 0.0
        %796 = vmatprep.subr.mxu0 0.0
        %797 = vmatpush1.xpose.msra.mxu0 0.0
        %798 = vmatprep.subr.mxu0 0.0
        %799 = vmatpush1.xpose.msra.mxu0 0.0
        %800 = vmatprep.subr.mxu0 0.0
        %801 = vmatpush1.xpose.msra.mxu0 0.0
        %802 = vmatprep.subr.mxu0 0.0
        %803 = vmatpush1.xpose.msra.mxu0 0.0
        %804 = vmatprep.subr.mxu0 0.0
        %805 = vmatpush1.xpose.msra.mxu0 0.0
        %806 = vmatprep.subr.mxu0 0.0
        %807 = vmatpush1.xpose.msra.mxu0 0.0
        %808 = vmatprep.subr.mxu0 0.0
        %809 = vmatpush1.xpose.msra.mxu0 0.0
        %810 = vmatprep.subr.mxu0 0.0
        %811 = vmatpush1.xpose.msra.mxu0 0.0
        %812 = vmatprep.subr.mxu0 0.0
        %813 = vmatpush1.xpose.msra.mxu0 0.0
        %814 = vmatprep.subr.mxu0 0.0
        %815 = vmatpush1.xpose.msra.mxu0 0.0
        %816 = vmatprep.subr.mxu0 0.0
        %817 = vmatpush1.xpose.msra.mxu0 0.0
        %818 = vmatprep.subr.mxu0 0.0
        %819 = vmatpush1.xpose.msra.mxu0 0.0
        %820 = vmatprep.subr.mxu0 0.0
        %821 = vmatpush1.xpose.msra.mxu0 0.0
        %822 = vmatprep.subr.mxu0 0.0
        %823 = vmatpush1.xpose.msra.mxu0 0.0
        %824 = vmatprep.subr.mxu0 0.0
        %825 = vmatpush1.xpose.msra.mxu0 0.0
        %826 = vmatprep.subr.mxu0 0.0
        %827 = vmatpush1.xpose.msra.mxu0 0.0
        %828 = vmatprep.subr.mxu0 0.0
        %829 = vmatpush1.xpose.msra.mxu0 0.0
        %830 = vmatprep.mubr.f32.mxu0 0.0
        %831 = vmatmul.mubr.f32.gmra.mrb[0].mxu0 %v762
        %v832 = vpop.f32.mrb[0].mxu0
        %v833 = vadd.f32 0.0, %v832
        %v834 = vpop.f32.mrb[0].mxu0
        %835 = vdwg.mxu0
        %v836 = vsel %vm594, %v833, -inf
        %837 = vmax.xlane.f32.xlu0 %v836
        %v838 = vpop.xlane.xlu0 %837
        %v839 = vsub.f32 %v833, %v838
        %v840 = vmul.f32 %v839, 1.442695
        %v841 = vpow.pop %v840
        %v842 = vsel %vm594, %v841, 0.0
        %843 = vadd.xlane.f32.xlu0 %v842
        %v844 = vpop.xlane.xlu0 %843
        %v845 = vrcp.pop %v844
        %v846 = vmul.f32 %v841, %v845
        %v847 = vadd.f32 %v681, %v846
        %848 = vrot.lane.b32.xlu0 %v587, 56
        %v849 = vpop.permute.xlu0 %848
        %v852 = vsel %vm594, %v846, 0
        %854 = vmatprep.subr.mxu0 0.0
        %855 = vmatpush1.msra.mxu0 %v849
        %856 = vmatprep.subr.mxu0 0.0
        %857 = vmatpush1.msra.mxu0 0.0
        %858 = vmatprep.subr.mxu0 0.0
        %859 = vmatpush1.msra.mxu0 0.0
        %860 = vmatprep.subr.mxu0 0.0
        %861 = vmatpush1.msra.mxu0 0.0
        %862 = vmatprep.subr.mxu0 0.0
        %863 = vmatpush1.msra.mxu0 0.0
        %864 = vmatprep.subr.mxu0 0.0
        %865 = vmatpush1.msra.mxu0 0.0
        %866 = vmatprep.subr.mxu0 0.0
        %867 = vmatpush1.msra.mxu0 0.0
        %868 = vmatprep.subr.mxu0 0.0
        %869 = vmatpush1.msra.mxu0 0.0
        %870 = vmatprep.subr.mxu0 0.0
        %871 = vmatpush1.msra.mxu0 0.0
        %872 = vmatprep.subr.mxu0 0.0
        %873 = vmatpush1.msra.mxu0 0.0
        %874 = vmatprep.subr.mxu0 0.0
        %875 = vmatpush1.msra.mxu0 0.0
        %876 = vmatprep.subr.mxu0 0.0
        %877 = vmatpush1.msra.mxu0 0.0
        %878 = vmatprep.subr.mxu0 0.0
        %879 = vmatpush1.msra.mxu0 0.0
        %880 = vmatprep.subr.mxu0 0.0
        %881 = vmatpush1.msra.mxu0 0.0
        %882 = vmatprep.subr.mxu0 0.0
        %883 = vmatpush1.msra.mxu0 0.0
        %884 = vmatprep.subr.mxu0 0.0
        %885 = vmatpush1.msra.mxu0 0.0
        %886 = vmatprep.subr.mxu0 0.0
        %887 = vmatpush1.msra.mxu0 0.0
        %888 = vmatprep.subr.mxu0 0.0
        %889 = vmatpush1.msra.mxu0 0.0
        %890 = vmatprep.subr.mxu0 0.0
        %891 = vmatpush1.msra.mxu0 0.0
        %892 = vmatprep.subr.mxu0 0.0
        %893 = vmatpush1.msra.mxu0 0.0
        %894 = vmatprep.subr.mxu0 0.0
        %895 = vmatpush1.msra.mxu0 0.0
        %896 = vmatprep.subr.mxu0 0.0
        %897 = vmatpush1.msra.mxu0 0.0
        %898 = vmatprep.subr.mxu0 0.0
        %899 = vmatpush1.msra.mxu0 0.0
        %900 = vmatprep.subr.mxu0 0.0
        %901 = vmatpush1.msra.mxu0 0.0
        %902 = vmatprep.subr.mxu0 0.0
        %903 = vmatpush1.msra.mxu0 0.0
        %904 = vmatprep.subr.mxu0 0.0
        %905 = vmatpush1.msra.mxu0 0.0
        %906 = vmatprep.subr.mxu0 0.0
        %907 = vmatpush1.msra.mxu0 0.0
        %908 = vmatprep.subr.mxu0 0.0
        %909 = vmatpush1.msra.mxu0 0.0
        %910 = vmatprep.subr.mxu0 0.0
        %911 = vmatpush1.msra.mxu0 0.0
        %912 = vmatprep.subr.mxu0 0.0
        %913 = vmatpush1.msra.mxu0 0.0
        %914 = vmatprep.subr.mxu0 0.0
        %915 = vmatpush1.msra.mxu0 0.0
        %916 = vmatprep.subr.mxu0 0.0
        %917 = vmatpush1.msra.mxu0 0.0
        %918 = vmatprep.mubr.f32.mxu0 0.0
        %919 = vmatmul.mubr.f32.gmra.mrb[0].mxu0 %v852
        %v920 = vpop.f32.mrb[0].mxu0
        %v921 = vadd.f32 0.0, %v920
        %v922 = vpop.f32.mrb[0].mxu0
        %923 = vdwg.mxu0
        %924 = vrot.lane.b32.xlu0 %v590, 112
        %v925 = vpop.permute.xlu0 %924
        %926 = vrot.lane.b32.xlu0 %v587, 80
        %v927 = vpop.permute.xlu0 %926
        %v928 = vsel %vm594, %v925, 0
        %v930 = vsel %vm594, %v927, 0
        %932 = vmatprep.subr.mxu0 0.0
        %933 = vmatpush1.xpose.msra.mxu0 %v930
        %934 = vmatprep.subr.mxu0 0.0
        %935 = vmatpush1.xpose.msra.mxu0 0.0
        %936 = vmatprep.subr.mxu0 0.0
        %937 = vmatpush1.xpose.msra.mxu0 0.0
        %938 = vmatprep.subr.mxu0 0.0
        %939 = vmatpush1.xpose.msra.mxu0 0.0
        %940 = vmatprep.subr.mxu0 0.0
        %941 = vmatpush1.xpose.msra.mxu0 0.0
        %942 = vmatprep.subr.mxu0 0.0
        %943 = vmatpush1.xpose.msra.mxu0 0.0
        %944 = vmatprep.subr.mxu0 0.0
        %945 = vmatpush1.xpose.msra.mxu0 0.0
        %946 = vmatprep.subr.mxu0 0.0
        %947 = vmatpush1.xpose.msra.mxu0 0.0
        %948 = vmatprep.subr.mxu0 0.0
        %949 = vmatpush1.xpose.msra.mxu0 0.0
        %950 = vmatprep.subr.mxu0 0.0
        %951 = vmatpush1.xpose.msra.mxu0 0.0
        %952 = vmatprep.subr.mxu0 0.0
        %953 = vmatpush1.xpose.msra.mxu0 0.0
        %954 = vmatprep.subr.mxu0 0.0
        %955 = vmatpush1.xpose.msra.mxu0 0.0
        %956 = vmatprep.subr.mxu0 0.0
        %957 = vmatpush1.xpose.msra.mxu0 0.0
        %958 = vmatprep.subr.mxu0 0.0
        %959 = vmatpush1.xpose.msra.mxu0 0.0
        %960 = vmatprep.subr.mxu0 0.0
        %961 = vmatpush1.xpose.msra.mxu0 0.0
        %962 = vmatprep.subr.mxu0 0.0
        %963 = vmatpush1.xpose.msra.mxu0 0.0
        %964 = vmatprep.subr.mxu0 0.0
        %965 = vmatpush1.xpose.msra.mxu0 0.0
        %966 = vmatprep.subr.mxu0 0.0
        %967 = vmatpush1.xpose.msra.mxu0 0.0
        %968 = vmatprep.subr.mxu0 0.0
        %969 = vmatpush1.xpose.msra.mxu0 0.0
        %970 = vmatprep.subr.mxu0 0.0
        %971 = vmatpush1.xpose.msra.mxu0 0.0
        %972 = vmatprep.subr.mxu0 0.0
        %973 = vmatpush1.xpose.msra.mxu0 0.0
        %974 = vmatprep.subr.mxu0 0.0
        %975 = vmatpush1.xpose.msra.mxu0 0.0
        %976 = vmatprep.subr.mxu0 0.0
        %977 = vmatpush1.xpose.msra.mxu0 0.0
        %978 = vmatprep.subr.mxu0 0.0
        %979 = vmatpush1.xpose.msra.mxu0 0.0
        %980 = vmatprep.subr.mxu0 0.0
        %981 = vmatpush1.xpose.msra.mxu0 0.0
        %982 = vmatprep.subr.mxu0 0.0
        %983 = vmatpush1.xpose.msra.mxu0 0.0
        %984 = vmatprep.subr.mxu0 0.0
        %985 = vmatpush1.xpose.msra.mxu0 0.0
        %986 = vmatprep.subr.mxu0 0.0
        %987 = vmatpush1.xpose.msra.mxu0 0.0
        %988 = vmatprep.subr.mxu0 0.0
        %989 = vmatpush1.xpose.msra.mxu0 0.0
        %990 = vmatprep.subr.mxu0 0.0
        %991 = vmatpush1.xpose.msra.mxu0 0.0
        %992 = vmatprep.subr.mxu0 0.0
        %993 = vmatpush1.xpose.msra.mxu0 0.0
        %994 = vmatprep.subr.mxu0 0.0
        %995 = vmatpush1.xpose.msra.mxu0 0.0
        %996 = vmatprep.mubr.f32.mxu0 0.0
        %997 = vmatmul.mubr.f32.gmra.mrb[0].mxu0 %v928
        %v998 = vpop.f32.mrb[0].mxu0
        %v999 = vadd.f32 0.0, %v998
        %v1000 = vpop.f32.mrb[0].mxu0
        %1001 = vdwg.mxu0
        %v1002 = vsel %vm594, %v999, -inf
        %1003 = vmax.xlane.f32.xlu0 %v1002
        %v1004 = vpop.xlane.xlu0 %1003
        %v1005 = vsub.f32 %v999, %v1004
        %v1006 = vmul.f32 %v1005, 1.442695
        %v1007 = vpow.pop %v1006
        %v1008 = vsel %vm594, %v1007, 0.0
        %1009 = vadd.xlane.f32.xlu0 %v1008
        %v1010 = vpop.xlane.xlu0 %1009
        %v1011 = vrcp.pop %v1010
        %v1012 = vmul.f32 %v1007, %v1011
        %v1013 = vadd.f32 %v847, %v1012
        %1014 = vrot.lane.b32.xlu0 %v587, 48
        %v1015 = vpop.permute.xlu0 %1014
        %v1018 = vsel %vm594, %v1012, 0
        %1020 = vmatprep.subr.mxu0 0.0
        %1021 = vmatpush1.msra.mxu0 %v1015
        %1022 = vmatprep.subr.mxu0 0.0
        %1023 = vmatpush1.msra.mxu0 0.0
        %1024 = vmatprep.subr.mxu0 0.0
        %1025 = vmatpush1.msra.mxu0 0.0
        %1026 = vmatprep.subr.mxu0 0.0
        %1027 = vmatpush1.msra.mxu0 0.0
        %1028 = vmatprep.subr.mxu0 0.0
        %1029 = vmatpush1.msra.mxu0 0.0
        %1030 = vmatprep.subr.mxu0 0.0
        %1031 = vmatpush1.msra.mxu0 0.0
        %1032 = vmatprep.subr.mxu0 0.0
        %1033 = vmatpush1.msra.mxu0 0.0
        %1034 = vmatprep.subr.mxu0 0.0
        %1035 = vmatpush1.msra.mxu0 0.0
        %1036 = vmatprep.subr.mxu0 0.0
        %1037 = vmatpush1.msra.mxu0 0.0
        %1038 = vmatprep.subr.mxu0 0.0
        %1039 = vmatpush1.msra.mxu0 0.0
        %1040 = vmatprep.subr.mxu0 0.0
        %1041 = vmatpush1.msra.mxu0 0.0
        %1042 = vmatprep.subr.mxu0 0.0
        %1043 = vmatpush1.msra.mxu0 0.0
        %1044 = vmatprep.subr.mxu0 0.0
        %1045 = vmatpush1.msra.mxu0 0.0
        %1046 = vmatprep.subr.mxu0 0.0
        %1047 = vmatpush1.msra.mxu0 0.0
        %1048 = vmatprep.subr.mxu0 0.0
        %1049 = vmatpush1.msra.mxu0 0.0
        %1050 = vmatprep.subr.mxu0 0.0
        %1051 = vmatpush1.msra.mxu0 0.0
        %1052 = vmatprep.subr.mxu0 0.0
        %1053 = vmatpush1.msra.mxu0 0.0
        %1054 = vmatprep.subr.mxu0 0.0
        %1055 = vmatpush1.msra.mxu0 0.0
        %1056 = vmatprep.subr.mxu0 0.0
        %1057 = vmatpush1.msra.mxu0 0.0
        %1058 = vmatprep.subr.mxu0 0.0
        %1059 = vmatpush1.msra.mxu0 0.0
        %1060 = vmatprep.subr.mxu0 0.0
        %1061 = vmatpush1.msra.mxu0 0.0
        %1062 = vmatprep.subr.mxu0 0.0
        %1063 = vmatpush1.msra.mxu0 0.0
        %1064 = vmatprep.subr.mxu0 0.0
        %1065 = vmatpush1.msra.mxu0 0.0
        %1066 = vmatprep.subr.mxu0 0.0
        %1067 = vmatpush1.msra.mxu0 0.0
        %1068 = vmatprep.subr.mxu0 0.0
        %1069 = vmatpush1.msra.mxu0 0.0
        %1070 = vmatprep.subr.mxu0 0.0
        %1071 = vmatpush1.msra.mxu0 0.0
        %1072 = vmatprep.subr.mxu0 0.0
        %1073 = vmatpush1.msra.mxu0 0.0
        %1074 = vmatprep.subr.mxu0 0.0
        %1075 = vmatpush1.msra.mxu0 0.0
        %1076 = vmatprep.subr.mxu0 0.0
        %1077 = vmatpush1.msra.mxu0 0.0
        %1078 = vmatprep.subr.mxu0 0.0
        %1079 = vmatpush1.msra.mxu0 0.0
        %1080 = vmatprep.subr.mxu0 0.0
        %1081 = vmatpush1.msra.mxu0 0.0
        %1082 = vmatprep.subr.mxu0 0.0
        %1083 = vmatpush1.msra.mxu0 0.0
        %1084 = vmatprep.mubr.f32.mxu0 0.0
        %1085 = vmatmul.mubr.f32.gmra.mrb[0].mxu0 %v1018
        %v1086 = vpop.f32.mrb[0].mxu0
        %v1087 = vadd.f32 0.0, %v1086
        %v1088 = vpop.f32.mrb[0].mxu0
        %1089 = vdwg.mxu0
        %1090 = vrot.lane.b32.xlu0 %v590, 104
        %v1091 = vpop.permute.xlu0 %1090
        %1092 = vrot.lane.b32.xlu0 %v587, 72
        %v1093 = vpop.permute.xlu0 %1092
        %v1094 = vsel %vm594, %v1091, 0
        %v1096 = vsel %vm594, %v1093, 0
        %1098 = vmatprep.subr.mxu0 0.0
        %1099 = vmatpush1.xpose.msra.mxu0 %v1096
        %1100 = vmatprep.subr.mxu0 0.0
        %1101 = vmatpush1.xpose.msra.mxu0 0.0
        %1102 = vmatprep.subr.mxu0 0.0
        %1103 = vmatpush1.xpose.msra.mxu0 0.0
        %1104 = vmatprep.subr.mxu0 0.0
        %1105 = vmatpush1.xpose.msra.mxu0 0.0
        %1106 = vmatprep.subr.mxu0 0.0
        %1107 = vmatpush1.xpose.msra.mxu0 0.0
        %1108 = vmatprep.subr.mxu0 0.0
        %1109 = vmatpush1.xpose.msra.mxu0 0.0
        %1110 = vmatprep.subr.mxu0 0.0
        %1111 = vmatpush1.xpose.msra.mxu0 0.0
        %1112 = vmatprep.subr.mxu0 0.0
        %1113 = vmatpush1.xpose.msra.mxu0 0.0
        %1114 = vmatprep.subr.mxu0 0.0
        %1115 = vmatpush1.xpose.msra.mxu0 0.0
        %1116 = vmatprep.subr.mxu0 0.0
        %1117 = vmatpush1.xpose.msra.mxu0 0.0
        %1118 = vmatprep.subr.mxu0 0.0
        %1119 = vmatpush1.xpose.msra.mxu0 0.0
        %1120 = vmatprep.subr.mxu0 0.0
        %1121 = vmatpush1.xpose.msra.mxu0 0.0
        %1122 = vmatprep.subr.mxu0 0.0
        %1123 = vmatpush1.xpose.msra.mxu0 0.0
        %1124 = vmatprep.subr.mxu0 0.0
        %1125 = vmatpush1.xpose.msra.mxu0 0.0
        %1126 = vmatprep.subr.mxu0 0.0
        %1127 = vmatpush1.xpose.msra.mxu0 0.0
        %1128 = vmatprep.subr.mxu0 0.0
        %1129 = vmatpush1.xpose.msra.mxu0 0.0
        %1130 = vmatprep.subr.mxu0 0.0
        %1131 = vmatpush1.xpose.msra.mxu0 0.0
        %1132 = vmatprep.subr.mxu0 0.0
        %1133 = vmatpush1.xpose.msra.mxu0 0.0
        %1134 = vmatprep.subr.mxu0 0.0
        %1135 = vmatpush1.xpose.msra.mxu0 0.0
        %1136 = vmatprep.subr.mxu0 0.0
        %1137 = vmatpush1.xpose.msra.mxu0 0.0
        %1138 = vmatprep.subr.mxu0 0.0
        %1139 = vmatpush1.xpose.msra.mxu0 0.0
        %1140 = vmatprep.subr.mxu0 0.0
        %1141 = vmatpush1.xpose.msra.mxu0 0.0
        %1142 = vmatprep.subr.mxu0 0.0
        %1143 = vmatpush1.xpose.msra.mxu0 0.0
        %1144 = vmatprep.subr.mxu0 0.0
        %1145 = vmatpush1.xpose.msra.mxu0 0.0
        %1146 = vmatprep.subr.mxu0 0.0
        %1147 = vmatpush1.xpose.msra.mxu0 0.0
        %1148 = vmatprep.subr.mxu0 0.0
        %1149 = vmatpush1.xpose.msra.mxu0 0.0
        %1150 = vmatprep.subr.mxu0 0.0
        %1151 = vmatpush1.xpose.msra.mxu0 0.0
        %1152 = vmatprep.subr.mxu0 0.0
        %1153 = vmatpush1.xpose.msra.mxu0 0.0
        %1154 = vmatprep.subr.mxu0 0.0
        %1155 = vmatpush1.xpose.msra.mxu0 0.0
        %1156 = vmatprep.subr.mxu0 0.0
        %1157 = vmatpush1.xpose.msra.mxu0 0.0
        %1158 = vmatprep.subr.mxu0 0.0
        %1159 = vmatpush1.xpose.msra.mxu0 0.0
        %1160 = vmatprep.subr.mxu0 0.0
        %1161 = vmatpush1.xpose.msra.mxu0 0.0
        %1162 = vmatprep.mubr.f32.mxu0 0.0
        %1163 = vmatmul.mubr.f32.gmra.mrb[0].mxu0 %v1094
        %v1164 = vpop.f32.mrb[0].mxu0
        %v1165 = vadd.f32 0.0, %v1164
        %v1166 = vpop.f32.mrb[0].mxu0
        %1167 = vdwg.mxu0
        %v1168 = vsel %vm594, %v1165, -inf
        %1169 = vmax.xlane.f32.xlu0 %v1168
        %v1170 = vpop.xlane.xlu0 %1169
        %v1171 = vsub.f32 %v1165, %v1170
        %v1172 = vmul.f32 %v1171, 1.442695
        %v1173 = vpow.pop %v1172
        %v1174 = vsel %vm594, %v1173, 0.0
        %1175 = vadd.xlane.f32.xlu0 %v1174
        %v1176 = vpop.xlane.xlu0 %1175
        %v1177 = vrcp.pop %v1176
        %v1178 = vmul.f32 %v1173, %v1177
        %v1179 = vadd.f32 %v1013, %v1178
        %1180 = vrot.lane.b32.xlu0 %v587, 40
        %v1181 = vpop.permute.xlu0 %1180
        %v1184 = vsel %vm594, %v1178, 0
        %1186 = vmatprep.subr.mxu0 0.0
        %1187 = vmatpush1.msra.mxu0 %v1181
        %1188 = vmatprep.subr.mxu0 0.0
        %1189 = vmatpush1.msra.mxu0 0.0
        %1190 = vmatprep.subr.mxu0 0.0
        %1191 = vmatpush1.msra.mxu0 0.0
        %1192 = vmatprep.subr.mxu0 0.0
        %1193 = vmatpush1.msra.mxu0 0.0
        %1194 = vmatprep.subr.mxu0 0.0
        %1195 = vmatpush1.msra.mxu0 0.0
        %1196 = vmatprep.subr.mxu0 0.0
        %1197 = vmatpush1.msra.mxu0 0.0
        %1198 = vmatprep.subr.mxu0 0.0
        %1199 = vmatpush1.msra.mxu0 0.0
        %1200 = vmatprep.subr.mxu0 0.0
        %1201 = vmatpush1.msra.mxu0 0.0
        %1202 = vmatprep.subr.mxu0 0.0
        %1203 = vmatpush1.msra.mxu0 0.0
        %1204 = vmatprep.subr.mxu0 0.0
        %1205 = vmatpush1.msra.mxu0 0.0
        %1206 = vmatprep.subr.mxu0 0.0
        %1207 = vmatpush1.msra.mxu0 0.0
        %1208 = vmatprep.subr.mxu0 0.0
        %1209 = vmatpush1.msra.mxu0 0.0
        %1210 = vmatprep.subr.mxu0 0.0
        %1211 = vmatpush1.msra.mxu0 0.0
        %1212 = vmatprep.subr.mxu0 0.0
        %1213 = vmatpush1.msra.mxu0 0.0
        %1214 = vmatprep.subr.mxu0 0.0
        %1215 = vmatpush1.msra.mxu0 0.0
        %1216 = vmatprep.subr.mxu0 0.0
        %1217 = vmatpush1.msra.mxu0 0.0
        %1218 = vmatprep.subr.mxu0 0.0
        %1219 = vmatpush1.msra.mxu0 0.0
        %1220 = vmatprep.subr.mxu0 0.0
        %1221 = vmatpush1.msra.mxu0 0.0
        %1222 = vmatprep.subr.mxu0 0.0
        %1223 = vmatpush1.msra.mxu0 0.0
        %1224 = vmatprep.subr.mxu0 0.0
        %1225 = vmatpush1.msra.mxu0 0.0
        %1226 = vmatprep.subr.mxu0 0.0
        %1227 = vmatpush1.msra.mxu0 0.0
        %1228 = vmatprep.subr.mxu0 0.0
        %1229 = vmatpush1.msra.mxu0 0.0
        %1230 = vmatprep.subr.mxu0 0.0
        %1231 = vmatpush1.msra.mxu0 0.0
        %1232 = vmatprep.subr.mxu0 0.0
        %1233 = vmatpush1.msra.mxu0 0.0
        %1234 = vmatprep.subr.mxu0 0.0
        %1235 = vmatpush1.msra.mxu0 0.0
        %1236 = vmatprep.subr.mxu0 0.0
        %1237 = vmatpush1.msra.mxu0 0.0
        %1238 = vmatprep.subr.mxu0 0.0
        %1239 = vmatpush1.msra.mxu0 0.0
        %1240 = vmatprep.subr.mxu0 0.0
        %1241 = vmatpush1.msra.mxu0 0.0
        %1242 = vmatprep.subr.mxu0 0.0
        %1243 = vmatpush1.msra.mxu0 0.0
        %1244 = vmatprep.subr.mxu0 0.0
        %1245 = vmatpush1.msra.mxu0 0.0
        %1246 = vmatprep.subr.mxu0 0.0
        %1247 = vmatpush1.msra.mxu0 0.0
        %1248 = vmatprep.subr.mxu0 0.0
        %1249 = vmatpush1.msra.mxu0 0.0
        %1250 = vmatprep.mubr.f32.mxu0 0.0
        %1251 = vmatmul.mubr.f32.gmra.mrb[0].mxu0 %v1184
        %v1252 = vpop.f32.mrb[0].mxu0
        %v1253 = vadd.f32 0.0, %v1252
        %v1254 = vpop.f32.mrb[0].mxu0
        %1255 = vdwg.mxu0
        %1257 = vrot.lane.b32.xlu0 %v921, 8
        %v1258 = vpop.permute.xlu0 %1257
        %1261 = vrot.lane.b32.xlu0 %v1087, 16
        %v1262 = vpop.permute.xlu0 %1261
        %1265 = vrot.lane.b32.xlu0 %v1253, 24
        %v1266 = vpop.permute.xlu0 %1265
        %v1268 = vsel %vm594, %v755, %v1258
        %vm1269 = vcmask 130048
        %v1270 = vsel %vm1269, %v1268, %v1262
        %vm1271 = vcmask 195584
        %v1272 = vsel %vm1271, %v1270, %v1266
        %v1273 = vld [vmem:[%s5] sm:$0xff]
        %v1274 = vld [vmem:[%s5 + $0x8] sm:$0xff]
        %v1275 = vld [vmem:[%s5 + $0x10] sm:$0xff]
        %v1276 = vld [vmem:[%s5 + $0x18] sm:$0xff]
        %v1277 = vld [vmem:[%s6] sm:$0x1]
        %v1279 = vlaneseq
        %v1280 = vshrl.u32 %v1279, 7
        %v1281 = vsub.s32 0, %v1280
        %v1282 = vrot.slane %v1277, %v1281
        %v1285 = vsel %vm475, %v1272, 0
        %1287 = vmatprep.subr.mxu0 0.0
        %1288 = vmatpush1.msra.mxu0 %v1273
        %1289 = vmatprep.subr.mxu0 0.0
        %1290 = vmatpush1.msra.mxu0 %v1274
        %1291 = vmatprep.subr.mxu0 0.0
        %1292 = vmatpush1.msra.mxu0 %v1275
        %1293 = vmatprep.subr.mxu0 0.0
        %1294 = vmatpush1.msra.mxu0 %v1276
        %1295 = vmatprep.subr.mxu0 0.0
        %1296 = vmatpush1.msra.mxu0 0.0
        %1297 = vmatprep.subr.mxu0 0.0
        %1298 = vmatpush1.msra.mxu0 0.0
        %1299 = vmatprep.subr.mxu0 0.0
        %1300 = vmatpush1.msra.mxu0 0.0
        %1301 = vmatprep.subr.mxu0 0.0
        %1302 = vmatpush1.msra.mxu0 0.0
        %1303 = vmatprep.subr.mxu0 0.0
        %1304 = vmatpush1.msra.mxu0 0.0
        %1305 = vmatprep.subr.mxu0 0.0
        %1306 = vmatpush1.msra.mxu0 0.0
        %1307 = vmatprep.subr.mxu0 0.0
        %1308 = vmatpush1.msra.mxu0 0.0
        %1309 = vmatprep.subr.mxu0 0.0
        %1310 = vmatpush1.msra.mxu0 0.0
        %1311 = vmatprep.subr.mxu0 0.0
        %1312 = vmatpush1.msra.mxu0 0.0
        %1313 = vmatprep.subr.mxu0 0.0
        %1314 = vmatpush1.msra.mxu0 0.0
        %1315 = vmatprep.subr.mxu0 0.0
        %1316 = vmatpush1.msra.mxu0 0.0
        %1317 = vmatprep.subr.mxu0 0.0
        %1318 = vmatpush1.msra.mxu0 0.0
        %1319 = vmatprep.subr.mxu0 0.0
        %1320 = vmatpush1.msra.mxu0 0.0
        %1321 = vmatprep.subr.mxu0 0.0
        %1322 = vmatpush1.msra.mxu0 0.0
        %1323 = vmatprep.subr.mxu0 0.0
        %1324 = vmatpush1.msra.mxu0 0.0
        %1325 = vmatprep.subr.mxu0 0.0
        %1326 = vmatpush1.msra.mxu0 0.0
        %1327 = vmatprep.subr.mxu0 0.0
        %1328 = vmatpush1.msra.mxu0 0.0
        %1329 = vmatprep.subr.mxu0 0.0
        %1330 = vmatpush1.msra.mxu0 0.0
        %1331 = vmatprep.subr.mxu0 0.0
        %1332 = vmatpush1.msra.mxu0 0.0
        %1333 = vmatprep.subr.mxu0 0.0
        %1334 = vmatpush1.msra.mxu0 0.0
        %1335 = vmatprep.subr.mxu0 0.0
        %1336 = vmatpush1.msra.mxu0 0.0
        %1337 = vmatprep.subr.mxu0 0.0
        %1338 = vmatpush1.msra.mxu0 0.0
        %1339 = vmatprep.subr.mxu0 0.0
        %1340 = vmatpush1.msra.mxu0 0.0
        %1341 = vmatprep.subr.mxu0 0.0
        %1342 = vmatpush1.msra.mxu0 0.0
        %1343 = vmatprep.subr.mxu0 0.0
        %1344 = vmatpush1.msra.mxu0 0.0
        %1345 = vmatprep.subr.mxu0 0.0
        %1346 = vmatpush1.msra.mxu0 0.0
        %1347 = vmatprep.subr.mxu0 0.0
        %1348 = vmatpush1.msra.mxu0 0.0
        %1349 = vmatprep.subr.mxu0 0.0
        %1350 = vmatpush1.msra.mxu0 0.0
        %1351 = vmatprep.mubr.f32.mxu0 0.0
        %1352 = vmatmul.mubr.f32.gmra.mrb[0].mxu0 %v1285
        %v1353 = vpop.f32.mrb[0].mxu0
        %v1354 = vadd.f32 %v1282, %v1353
        %v1355 = vpop.f32.mrb[0].mxu0
        %1356 = vdwg.mxu0
        %v1357 = vadd.f32 %v474, %v1354
        %v1358 = vsel %vm475, %v1357, 0.0
        %1359 = vadd.xlane.f32.xlu0 %v1358
        %v1360 = vpop.xlane.xlu0 %1359
        %v1361 = vmul.f32 %v1360, %v479
        %v1362 = vsub.f32 %v1357, %v1361
        %v1363 = vmul.f32 %v1362, %v1362
        %v1364 = vsel %vm475, %v1363, 0.0
        %1365 = vadd.xlane.f32.xlu0 %v1364
        %v1366 = vpop.xlane.xlu0 %1365
        %v1367 = vmul.f32 %v1366, %v479
        %v1368 = vadd.f32 %v1367, 1e-05
        %v1369 = vrsqrt.pop %v1368
        %v1370 = vmul.f32 %v1362, %v1369
        %v1371 = vld [vmem:[%s7] sm:$0x1]
        %v1373 = vlaneseq
        %v1374 = vshrl.u32 %v1373, 7
        %v1375 = vsub.s32 0, %v1374
        %v1376 = vrot.slane %v1371, %v1375
        %v1378 = vmul.f32 %v1370, %v1376
        %v1379 = vld [vmem:[%s8] sm:$0x1]
        %v1381 = vlaneseq
        %v1382 = vshrl.u32 %v1381, 7
        %v1383 = vsub.s32 0, %v1382
        %v1384 = vrot.slane %v1379, %v1383
        %v1386 = vadd.f32 %v1378, %v1384
        %v1387 = vld [vmem:[%s9] sm:$0xff]
        %v1388 = vld [vmem:[%s9 + $0x8] sm:$0xff]
        %v1389 = vld [vmem:[%s9 + $0x10] sm:$0xff]
        %v1390 = vld [vmem:[%s9 + $0x18] sm:$0xff]
        %v1391 = vld [vmem:[%s10] sm:$0x1]
        %v1393 = vlaneseq
        %v1394 = vshrl.u32 %v1393, 7
        %v1395 = vsub.s32 0, %v1394
        %v1396 = vrot.slane %v1391, %v1395
        %v1399 = vsel %vm475, %v1386, 0
        %1401 = vmatprep.subr.mxu0 0.0
        %1402 = vmatpush1.msra.mxu0 %v1387
        %1403 = vmatprep.subr.mxu0 0.0
        %1404 = vmatpush1.msra.mxu0 %v1388
        %1405 = vmatprep.subr.mxu0 0.0
        %1406 = vmatpush1.msra.mxu0 %v1389
        %1407 = vmatprep.subr.mxu0 0.0
        %1408 = vmatpush1.msra.mxu0 %v1390
        %1409 = vmatprep.subr.mxu0 0.0
        %1410 = vmatpush1.msra.mxu0 0.0
        %1411 = vmatprep.subr.mxu0 0.0
        %1412 = vmatpush1.msra.mxu0 0.0
        %1413 = vmatprep.subr.mxu0 0.0
        %1414 = vmatpush1.msra.mxu0 0.0
        %1415 = vmatprep.subr.mxu0 0.0
        %1416 = vmatpush1.msra.mxu0 0.0
        %1417 = vmatprep.subr.mxu0 0.0
        %1418 = vmatpush1.msra.mxu0 0.0
        %1419 = vmatprep.subr.mxu0 0.0
        %1420 = vmatpush1.msra.mxu0 0.0
        %1421 = vmatprep.subr.mxu0 0.0
        %1422 = vmatpush1.msra.mxu0 0.0
        %1423 = vmatprep.subr.mxu0 0.0
        %1424 = vmatpush1.msra.mxu0 0.0
        %1425 = vmatprep.subr.mxu0 0.0
        %1426 = vmatpush1.msra.mxu0 0.0
        %1427 = vmatprep.subr.mxu0 0.0
        %1428 = vmatpush1.msra.mxu0 0.0
        %1429 = vmatprep.subr.mxu0 0.0
        %1430 = vmatpush1.msra.mxu0 0.0
        %1431 = vmatprep.subr.mxu0 0.0
        %1432 = vmatpush1.msra.mxu0 0.0
        %1433 = vmatprep.subr.mxu0 0.0
        %1434 = vmatpush1.msra.mxu0 0.0
        %1435 = vmatprep.subr.mxu0 0.0
        %1436 = vmatpush1.msra.mxu0 0.0
        %1437 = vmatprep.subr.mxu0 0.0
        %1438 = vmatpush1.msra.mxu0 0.0
        %1439 = vmatprep.subr.mxu0 0.0
        %1440 = vmatpush1.msra.mxu0 0.0
        %1441 = vmatprep.subr.mxu0 0.0
        %1442 = vmatpush1.msra.mxu0 0.0
        %1443 = vmatprep.subr.mxu0 0.0
        %1444 = vmatpush1.msra.mxu0 0.0
        %1445 = vmatprep.subr.mxu0 0.0
        %1446 = vmatpush1.msra.mxu0 0.0
        %1447 = vmatprep.subr.mxu0 0.0
        %1448 = vmatpush1.msra.mxu0 0.0
        %1449 = vmatprep.subr.mxu0 0.0
        %1450 = vmatpush1.msra.mxu0 0.0
        %1451 = vmatprep.subr.mxu0 0.0
        %1452 = vmatpush1.msra.mxu0 0.0
        %1453 = vmatprep.subr.mxu0 0.0
        %1454 = vmatpush1.msra.mxu0 0.0
        %1455 = vmatprep.subr.mxu0 0.0
        %1456 = vmatpush1.msra.mxu0 0.0
        %1457 = vmatprep.subr.mxu0 0.0
        %1458 = vmatpush1.msra.mxu0 0.0
        %1459 = vmatprep.subr.mxu0 0.0
        %1460 = vmatpush1.msra.mxu0 0.0
        %1461 = vmatprep.subr.mxu0 0.0
        %1462 = vmatpush1.msra.mxu0 0.0
        %1463 = vmatprep.subr.mxu0 0.0
        %1464 = vmatpush1.msra.mxu0 0.0
        %1465 = vmatprep.mubr.f32.mxu0 0.0
        %1466 = vmatmul.mubr.f32.gmra.mrb[0].mxu0 %v1399
        %v1467 = vpop.f32.mrb[0].mxu0
        %v1468 = vadd.f32 %v1396, %v1467
        %v1469 = vpop.f32.mrb[0].mxu0
        %1470 = vdwg.mxu0
        %v1471 = vmul.f32 %v1468, 1.702
        %v1472 = vxor.u32 %v1471, 2147483648
        %v1473 = vmul.f32 %v1472, 1.442695
        %v1474 = vpow.pop %v1473
        %v1475 = vadd.f32 %v1474, 1.0
        %v1476 = vrcp.pop %v1475
        %v1477 = vmul.f32 1.0, %v1476
        %v1478 = vmul.f32 %v1468, %v1477
        %v1479 = vld [vmem:[%s11] sm:$0xff]
        %v1480 = vld [vmem:[%s11 + $0x8] sm:$0xff]
        %v1481 = vld [vmem:[%s11 + $0x10] sm:$0xff]
        %v1482 = vld [vmem:[%s11 + $0x18] sm:$0xff]
        %v1483 = vld [vmem:[%s11 + $0x20] sm:$0xff]
        %v1484 = vld [vmem:[%s11 + $0x28] sm:$0xff]
        %v1485 = vld [vmem:[%s11 + $0x30] sm:$0xff]
        %v1486 = vld [vmem:[%s11 + $0x38] sm:$0xff]
        %v1487 = vld [vmem:[%s11 + $0x40] sm:$0xff]
        %v1488 = vld [vmem:[%s11 + $0x48] sm:$0xff]
        %v1489 = vld [vmem:[%s11 + $0x50] sm:$0xff]
        %v1490 = vld [vmem:[%s11 + $0x58] sm:$0xff]
        %v1491 = vld [vmem:[%s11 + $0x60] sm:$0xff]
        %v1492 = vld [vmem:[%s11 + $0x68] sm:$0xff]
        %v1493 = vld [vmem:[%s11 + $0x70] sm:$0xff]
        %v1494 = vld [vmem:[%s11 + $0x78] sm:$0xff]
        %v1495 = vld [vmem:[%s12] sm:$0x1]
        %v1497 = vlaneseq
        %v1498 = vshrl.u32 %v1497, 7
        %v1499 = vsub.s32 0, %v1498
        %v1500 = vrot.slane %v1495, %v1499
        %1502 = vmatprep.subr.mxu0 0.0
        %1503 = vmatpush1.msra.mxu0 %v1479
        %1504 = vmatprep.subr.mxu0 0.0
        %1505 = vmatpush1.msra.mxu0 %v1480
        %1506 = vmatprep.subr.mxu0 0.0
        %1507 = vmatpush1.msra.mxu0 %v1481
        %1508 = vmatprep.subr.mxu0 0.0
        %1509 = vmatpush1.msra.mxu0 %v1482
        %1510 = vmatprep.subr.mxu0 0.0
        %1511 = vmatpush1.msra.mxu0 %v1483
        %1512 = vmatprep.subr.mxu0 0.0
        %1513 = vmatpush1.msra.mxu0 %v1484
        %1514 = vmatprep.subr.mxu0 0.0
        %1515 = vmatpush1.msra.mxu0 %v1485
        %1516 = vmatprep.subr.mxu0 0.0
        %1517 = vmatpush1.msra.mxu0 %v1486
        %1518 = vmatprep.subr.mxu0 0.0
        %1519 = vmatpush1.msra.mxu0 %v1487
        %1520 = vmatprep.subr.mxu0 0.0
        %1521 = vmatpush1.msra.mxu0 %v1488
        %1522 = vmatprep.subr.mxu0 0.0
        %1523 = vmatpush1.msra.mxu0 %v1489
        %1524 = vmatprep.subr.mxu0 0.0
        %1525 = vmatpush1.msra.mxu0 %v1490
        %1526 = vmatprep.subr.mxu0 0.0
        %1527 = vmatpush1.msra.mxu0 %v1491
        %1528 = vmatprep.subr.mxu0 0.0
        %1529 = vmatpush1.msra.mxu0 %v1492
        %1530 = vmatprep.subr.mxu0 0.0
        %1531 = vmatpush1.msra.mxu0 %v1493
        %1532 = vmatprep.subr.mxu0 0.0
        %1533 = vmatpush1.msra.mxu0 %v1494
        %1534 = vmatprep.subr.mxu0 0.0
        %1535 = vmatpush1.msra.mxu0 0.0
        %1536 = vmatprep.subr.mxu0 0.0
        %1537 = vmatpush1.msra.mxu0 0.0
        %1538 = vmatprep.subr.mxu0 0.0
        %1539 = vmatpush1.msra.mxu0 0.0
        %1540 = vmatprep.subr.mxu0 0.0
        %1541 = vmatpush1.msra.mxu0 0.0
        %1542 = vmatprep.subr.mxu0 0.0
        %1543 = vmatpush1.msra.mxu0 0.0
        %1544 = vmatprep.subr.mxu0 0.0
        %1545 = vmatpush1.msra.mxu0 0.0
        %1546 = vmatprep.subr.mxu0 0.0
        %1547 = vmatpush1.msra.mxu0 0.0
        %1548 = vmatprep.subr.mxu0 0.0
        %1549 = vmatpush1.msra.mxu0 0.0
        %1550 = vmatprep.subr.mxu0 0.0
        %1551 = vmatpush1.msra.mxu0 0.0
        %1552 = vmatprep.subr.mxu0 0.0
        %1553 = vmatpush1.msra.mxu0 0.0
        %1554 = vmatprep.subr.mxu0 0.0
        %1555 = vmatpush1.msra.mxu0 0.0
        %1556 = vmatprep.subr.mxu0 0.0
        %1557 = vmatpush1.msra.mxu0 0.0
        %1558 = vmatprep.subr.mxu0 0.0
        %1559 = vmatpush1.msra.mxu0 0.0
        %1560 = vmatprep.subr.mxu0 0.0
        %1561 = vmatpush1.msra.mxu0 0.0
        %1562 = vmatprep.subr.mxu0 0.0
        %1563 = vmatpush1.msra.mxu0 0.0
        %1564 = vmatprep.subr.mxu0 0.0
        %1565 = vmatpush1.msra.mxu0 0.0
        %1566 = vmatprep.mubr.f32.mxu0 0.0
        %1567 = vmatmul.mubr.f32.gmra.mrb[0].mxu0 %v1478
        %v1568 = vpop.f32.mrb[0].mxu0
        %v1569 = vadd.f32 %v1500, %v1568
        %v1570 = vpop.f32.mrb[0].mxu0
        %1571 = vdwg.mxu0
        %v1572 = vadd.f32 %v1357, %v1569
        %1573 = vst.msk [vmem:[%s462] sm:$0xff] %vm475, %v1572
        %v1574 = vmul.f32 %v1179, 0.25
        %1575 = vst.msk [vmem:[%s469] sm:$0xff] %vm594, %v1574
        %s1576 = sand.u32 %s318, 1
        %s1577 = scalar_lea.sflag [#allocation3], %s1576
        %s1578 = sand.u32 %s318, 1
        %s1579 = smul.addr %s1578, 8
        %s1580 = scalar_lea.vmem [#allocation2], %s1579
        %s1581 = sand.u32 %s344, 1
        %s1582 = scalar_lea.sflag [#allocation5], %s1581
        %s1583 = sand.u32 %s344, 1
        %s1584 = smul.addr %s1583, 8
        %s1585 = scalar_lea.vmem [#allocation4], %s1584
        // Predicated region
        $region73: #{tpu_custom_call.1} parent=71 // pred_check
          %p1586 = pneg %p328
        $region74: #{tpu_custom_call.1} parent=71 // pred_check_branch
          %1588 = sbr.rel (%p1586) target = $region76
        $region75: #{tpu_custom_call.1} parent=71 // pred_region
          %s1590 = ssub.s32 128, 128
          %1591 = vsyncadd %s1577, %s1590
          %s1592 = smul.addr %s32, 128
          %s1593 = scalar_lea.hbm %s13, %s1592
          %s1595 = sshll.u32 %s1580, 4
          %s1596 = int_to_ptr.vmem [resolvable:$true] %s1595
          %1598 = dma.vmem_to_hbm [thread:$0]  %s1596, 128, %s1593, %s1577
        $region76: #{tpu_custom_call.1} parent=71 // pred_fallthru
          _
        // Predicated region
        $region77: #{tpu_custom_call.1} parent=71 // pred_check
          %p1599 = pneg %p354
        $region78: #{tpu_custom_call.1} parent=71 // pred_check_branch
          %1601 = sbr.rel (%p1599) target = $region80
        $region79: #{tpu_custom_call.1} parent=71 // pred_region
          %s1603 = ssub.s32 128, 128
          %1604 = vsyncadd %s1582, %s1603
          %s1605 = smul.addr %s32, 128
          %s1606 = scalar_lea.hbm %s14, %s1605
          %s1608 = sshll.u32 %s1585, 4
          %s1609 = int_to_ptr.vmem [resolvable:$true] %s1608
          %1611 = dma.vmem_to_hbm [thread:$0]  %s1609, 128, %s1606, %s1582
        $region80: #{tpu_custom_call.1} parent=71 // pred_fallthru
          _
      $region72: #{tpu_custom_call.1} parent=5 // pred_fallthru
        _
      %p1612 = scmp.le.s32.totalorder 2, %s27
      // Predicated region
      $region81: #{tpu_custom_call.1} parent=5 // pred_check
        %p1613 = pneg %p1612
      $region82: #{tpu_custom_call.1} parent=5 // pred_check_branch
        %1615 = sbr.rel (%p1613) target = $region84
      $region83: #{tpu_custom_call.1} parent=5 // pred_region
        %s1616 = ssub.s32 %s27, 2
        // Predicated region
        $region85: #{tpu_custom_call.1} parent=83 // pred_check
          %p1617 = pneg %p334
        $region86: #{tpu_custom_call.1} parent=83 // pred_check_branch
          %1619 = sbr.rel (%p1617) target = $region88
        $region87: #{tpu_custom_call.1} parent=83 // pred_region
          %s1620 = sand.u32 %s319, 1
          %s1621 = scalar_lea.sflag [#allocation3], %s1620
          %s1622 = sand.u32 %s319, 1
          %s1623 = smul.addr %s1622, 8
          %s1624 = scalar_lea.vmem [#allocation2], %s1623
          %1625 = dma.done %s1621, 128
        $region88: #{tpu_custom_call.1} parent=83 // pred_fallthru
          _
        // Predicated region
        $region89: #{tpu_custom_call.1} parent=83 // pred_check
          %p1626 = pneg %p360
        $region90: #{tpu_custom_call.1} parent=83 // pred_check_branch
          %1628 = sbr.rel (%p1626) target = $region92
        $region91: #{tpu_custom_call.1} parent=83 // pred_region
          %s1629 = sand.u32 %s345, 1
          %s1630 = scalar_lea.sflag [#allocation5], %s1629
          %s1631 = sand.u32 %s345, 1
          %s1632 = smul.addr %s1631, 8
          %s1633 = scalar_lea.vmem [#allocation4], %s1632
          %1634 = dma.done %s1630, 128
        $region92: #{tpu_custom_call.1} parent=83 // pred_fallthru
          _
      $region84: #{tpu_custom_call.1} parent=5 // pred_fallthru
        _
    $region6: #{tpu_custom_call.1} parent=1 // loop_footer
      %s31 = sadd.s32 1, %s27
    $region7: #{tpu_custom_call.1} parent=1 // loop_footer_branch
      %26 = sbr.rel target = $region3
    $region8: #{tpu_custom_call.1} parent=1 // loop_exit
      _
    %1635 = vsyncpa [#allocation3], 1
    %s1636 = scalar_lea.sflag [#allocation3], 1
    %1637 = vsyncpa %s1636, 1
    %1638 = vsyncpa [#allocation5], 1
    %s1639 = scalar_lea.sflag [#allocation5], 1
    %1640 = vsyncpa %s1639, 1

// kernel: tpu_custom_call.1
$region0: #{tpu_custom_call.1}
  #allocation0 [shape = 'u32[]', space=smem, size = 0x4, offset = 0x4, fixed_abs, tag = 'smem constant byte address 0x4 - core index']
  #allocation1 [shape = 'u32[144,128]{1,0:T(1,128)}', space=vmem, size = 0x12000, scoped, tag = 'internal scratch']
  %s0 = inlined_call_operand.vmem [shape: f32[2,8,32], index: 0, kind: input, shape index: {}]
  %s1 = inlined_call_operand.vmem [shape: f32[1,32], index: 1, kind: input, shape index: {}]
  %s2 = inlined_call_operand.vmem [shape: f32[1,32], index: 2, kind: input, shape index: {}]
  %s3 = inlined_call_operand.vmem [shape: f32[32,96], index: 3, kind: input, shape index: {}]
  %s4 = inlined_call_operand.vmem [shape: f32[1,96], index: 4, kind: input, shape index: {}]
  %s5 = inlined_call_operand.vmem [shape: f32[32,32], index: 5, kind: input, shape index: {}]
  %s6 = inlined_call_operand.vmem [shape: f32[1,32], index: 6, kind: input, shape index: {}]
  %s7 = inlined_call_operand.vmem [shape: f32[1,32], index: 7, kind: input, shape index: {}]
  %s8 = inlined_call_operand.vmem [shape: f32[1,32], index: 8, kind: input, shape index: {}]
  %s9 = inlined_call_operand.vmem [shape: f32[32,128], index: 9, kind: input, shape index: {}]
  %s10 = inlined_call_operand.vmem [shape: f32[1,128], index: 10, kind: input, shape index: {}]
  %s11 = inlined_call_operand.vmem [shape: f32[128,32], index: 11, kind: input, shape index: {}]
  %s12 = inlined_call_operand.vmem [shape: f32[1,32], index: 12, kind: input, shape index: {}]
  %s13 = inlined_call_operand.hbm [shape: f32[2,8,32], index: 13, kind: output, shape index: {0}]
  %s14 = inlined_call_operand.hbm [shape: f32[2,8,8], index: 14, kind: output, shape index: {1}]
  %15 = xla_tuple %s13, %s14
  %s16 = sld [smem:[#allocation0]]
  $region93: #{tpu_custom_call.1} parent=0
    _
  %s18 = ssub.s32 1, %s16
  %s19 = scalar_select 0, %s18, %s16
  $region1: #{tpu_custom_call.1} parent=0
    #allocation2 [shape = 'u8[8192]{0}', space=vmem, size = 0x2000, scoped, tag = 'output window, operand 0']
    #allocation3 [shape = 's32[2]{0}', space=sflag, size = 0x8, scoped, tag = 'scoped memory for tpu_custom_call.1']
    #allocation4 [shape = 'u8[8192]{0}', space=vmem, size = 0x2000, scoped, tag = 'output window, operand 1']
    #allocation5 [shape = 's32[2]{0}', space=sflag, size = 0x8, scoped, tag = 'scoped memory for tpu_custom_call.1']
    %20 = vsyncpa [#allocation3], 0
    %s21 = scalar_lea.sflag [#allocation3], 1
    %22 = vsyncpa %s21, 0
    %23 = vsyncpa [#allocation5], 0
    %s24 = scalar_lea.sflag [#allocation5], 1
    %25 = vsyncpa %s24, 0
    loop: start=0, step=1, limit=4
    $region2: #{tpu_custom_call.1} parent=1 // loop_pre_header
      _
    $region3: #{tpu_custom_call.1} parent=1 // loop_header
      %s27 = sphi 0, %s31
      %p28 = scmp.ge.s32.totalorder %s27, 4
      %s37 = sphi 0, %s39
      %s40 = sphi 0, %s37
      %s41 = sphi 0, %s40
      %s57 = sphi 0, %s41
      %s61 = sphi 0, %s61
      %s63 = sphi 0, %s61
      %s64 = sphi 0, %s63
      %s78 = sphi 0, %s64
      %s82 = sphi 0, %s82
      %s84 = sphi 0, %s82
      %s85 = sphi 0, %s84
      %s99 = sphi 0, %s85
      %s103 = sphi 0, %s103
      %s105 = sphi 0, %s103
      %s106 = sphi 0, %s105
      %s120 = sphi 0, %s106
      %s124 = sphi 0, %s124
      %s126 = sphi 0, %s124
      %s127 = sphi 0, %s126
      %s141 = sphi 0, %s127
      %s145 = sphi 0, %s145
      %s147 = sphi 0, %s145
      %s148 = sphi 0, %s147
      %s162 = sphi 0, %s148
      %s166 = sphi 0, %s166
      %s168 = sphi 0, %s166
      %s169 = sphi 0, %s168
      %s183 = sphi 0, %s169
      %s187 = sphi 0, %s187
      %s189 = sphi 0, %s187
      %s190 = sphi 0, %s189
      %s204 = sphi 0, %s190
      %s208 = sphi 0, %s208
      %s210 = sphi 0, %s208
      %s211 = sphi 0, %s210
      %s225 = sphi 0, %s211
      %s229 = sphi 0, %s229
      %s231 = sphi 0, %s229
      %s232 = sphi 0, %s231
      %s246 = sphi 0, %s232
      %s250 = sphi 0, %s250
      %s252 = sphi 0, %s250
      %s253 = sphi 0, %s252
      %s267 = sphi 0, %s253
      %s271 = sphi 0, %s271
      %s273 = sphi 0, %s271
      %s274 = sphi 0, %s273
      %s288 = sphi 0, %s274
      %s292 = sphi 0, %s292
      %s294 = sphi 0, %s292
      %s295 = sphi 0, %s294
      %s309 = sphi 0, %s295
      %s315 = sphi 0, %s317
      %s318 = sphi 0, %s315
      %s319 = sphi 0, %s318
      %s335 = sphi 0, %s319
      %s341 = sphi 0, %s343
      %s344 = sphi 0, %s341
      %s345 = sphi 0, %s344
      %s361 = sphi 0, %s345
    $region4: #{tpu_custom_call.1} parent=1 // loop_header_branch
      %30 = sbr.rel (%p28) target = $region8
    $region5: #{tpu_custom_call.1} parent=1 // loop_body
      %s32 = ssub.s32 %s27, 1
      %s33 = ssub.s32 %s27, 2
      %s34 = sadd.s32 %s27, 1
      %s35 = ssub.s32 %s27, %s34
      %p36 = scmp.eq.s32.totalorder %s35, 0
      %s38 = sadd.s32 %s37, 1
      %s39 = scalar_select %p36, %s37, %s38
      %p42 = pneg %p36
      %p43 = scmp.eq.s32.totalorder %s27, 1
      %p44 = por %p42, %p43
      %p45 = scmp.ne.s32.totalorder %s37, %s40
      %p46 = scmp.eq.s32.totalorder %s27, 0
      %p47 = por %p45, %p46
      %p48 = scmp.ne.s32.totalorder %s37, %s40
      %p49 = scmp.eq.s32.totalorder %s32, 1
      %p50 = por %p48, %p49
      %p51 = scmp.ne.s32.totalorder %s40, %s41
      %p52 = scmp.eq.s32.totalorder %s32, 0
      %p53 = por %p51, %p52
      %p54 = scmp.ne.s32.totalorder %s40, %s41
      %p55 = scmp.eq.s32.totalorder %s33, 1
      %p56 = por %p54, %p55
      %p58 = scmp.ne.s32.totalorder %s41, %s57
      %p59 = scmp.eq.s32.totalorder %s33, 0
      %p60 = por %p58, %p59
      %s62 = sadd.s32 %s61, 1
      %p65 = scmp.eq.s32.totalorder %s27, 1
      %p66 = scmp.ne.s32.totalorder %s61, %s63
      %p67 = scmp.eq.s32.totalorder %s27, 0
      %p68 = por %p66, %p67
      %p69 = scmp.ne.s32.totalorder %s61, %s63
      %p70 = scmp.eq.s32.totalorder %s32, 1
      %p71 = por %p69, %p70
      %p72 = scmp.ne.s32.totalorder %s63, %s64
      %p73 = scmp.eq.s32.totalorder %s32, 0
      %p74 = por %p72, %p73
      %p75 = scmp.ne.s32.totalorder %s63, %s64
      %p76 = scmp.eq.s32.totalorder %s33, 1
      %p77 = por %p75, %p76
      %p79 = scmp.ne.s32.totalorder %s64, %s78
      %p80 = scmp.eq.s32.totalorder %s33, 0
      %p81 = por %p79, %p80
      %s83 = sadd.s32 %s82, 1
      %p86 = scmp.eq.s32.totalorder %s27, 1
      %p87 = scmp.ne.s32.totalorder %s82, %s84
      %p88 = scmp.eq.s32.totalorder %s27, 0
      %p89 = por %p87, %p88
      %p90 = scmp.ne.s32.totalorder %s82, %s84
      %p91 = scmp.eq.s32.totalorder %s32, 1
      %p92 = por %p90, %p91
      %p93 = scmp.ne.s32.totalorder %s84, %s85
      %p94 = scmp.eq.s32.totalorder %s32, 0
      %p95 = por %p93, %p94
      %p96 = scmp.ne.s32.totalorder %s84, %s85
      %p97 = scmp.eq.s32.totalorder %s33, 1
      %p98 = por %p96, %p97
      %p100 = scmp.ne.s32.totalorder %s85, %s99
      %p101 = scmp.eq.s32.totalorder %s33, 0
      %p102 = por %p100, %p101
      %s104 = sadd.s32 %s103, 1
      %p107 = scmp.eq.s32.totalorder %s27, 1
      %p108 = scmp.ne.s32.totalorder %s103, %s105
      %p109 = scmp.eq.s32.totalorder %s27, 0
      %p110 = por %p108, %p109
      %p111 = scmp.ne.s32.totalorder %s103, %s105
      %p112 = scmp.eq.s32.totalorder %s32, 1
      %p113 = por %p111, %p112
      %p114 = scmp.ne.s32.totalorder %s105, %s106
      %p115 = scmp.eq.s32.totalorder %s32, 0
      %p116 = por %p114, %p115
      %p117 = scmp.ne.s32.totalorder %s105, %s106
      %p118 = scmp.eq.s32.totalorder %s33, 1
      %p119 = por %p117, %p118
      %p121 = scmp.ne.s32.totalorder %s106, %s120
      %p122 = scmp.eq.s32.totalorder %s33, 0
      %p123 = por %p121, %p122
      %s125 = sadd.s32 %s124, 1
      %p128 = scmp.eq.s32.totalorder %s27, 1
      %p129 = scmp.ne.s32.totalorder %s124, %s126
      %p130 = scmp.eq.s32.totalorder %s27, 0
      %p131 = por %p129, %p130
      %p132 = scmp.ne.s32.totalorder %s124, %s126
      %p133 = scmp.eq.s32.totalorder %s32, 1
      %p134 = por %p132, %p133
      %p135 = scmp.ne.s32.totalorder %s126, %s127
      %p136 = scmp.eq.s32.totalorder %s32, 0
      %p137 = por %p135, %p136
      %p138 = scmp.ne.s32.totalorder %s126, %s127
      %p139 = scmp.eq.s32.totalorder %s33, 1
      %p140 = por %p138, %p139
      %p142 = scmp.ne.s32.totalorder %s127, %s141
      %p143 = scmp.eq.s32.totalorder %s33, 0
      %p144 = por %p142, %p143
      %s146 = sadd.s32 %s145, 1
      %p149 = scmp.eq.s32.totalorder %s27, 1
      %p150 = scmp.ne.s32.totalorder %s145, %s147
      %p151 = scmp.eq.s32.totalorder %s27, 0
      %p152 = por %p150, %p151
      %p153 = scmp.ne.s32.totalorder %s145, %s147
      %p154 = scmp.eq.s32.totalorder %s32, 1
      %p155 = por %p153, %p154
      %p156 = scmp.ne.s32.totalorder %s147, %s148
      %p157 = scmp.eq.s32.totalorder %s32, 0
      %p158 = por %p156, %p157
      %p159 = scmp.ne.s32.totalorder %s147, %s148
      %p160 = scmp.eq.s32.totalorder %s33, 1
      %p161 = por %p159, %p160
      %p163 = scmp.ne.s32.totalorder %s148, %s162
      %p164 = scmp.eq.s32.totalorder %s33, 0
      %p165 = por %p163, %p164
      %s167 = sadd.s32 %s166, 1
      %p170 = scmp.eq.s32.totalorder %s27, 1
      %p171 = scmp.ne.s32.totalorder %s166, %s168
      %p172 = scmp.eq.s32.totalorder %s27, 0
      %p173 = por %p171, %p172
      %p174 = scmp.ne.s32.totalorder %s166, %s168
      %p175 = scmp.eq.s32.totalorder %s32, 1
      %p176 = por %p174, %p175
      %p177 = scmp.ne.s32.totalorder %s168, %s169
      %p178 = scmp.eq.s32.totalorder %s32, 0
      %p179 = por %p177, %p178
      %p180 = scmp.ne.s32.totalorder %s168, %s169
      %p181 = scmp.eq.s32.totalorder %s33, 1
      %p182 = por %p180, %p181
      %p184 = scmp.ne.s32.totalorder %s169, %s183
      %p185 = scmp.eq.s32.totalorder %s33, 0
      %p186 = por %p184, %p185
      %s188 = sadd.s32 %s187, 1
      %p191 = scmp.eq.s32.totalorder %s27, 1
      %p192 = scmp.ne.s32.totalorder %s187, %s189
      %p193 = scmp.eq.s32.totalorder %s27, 0
      %p194 = por %p192, %p193
      %p195 = scmp.ne.s32.totalorder %s187, %s189
      %p196 = scmp.eq.s32.totalorder %s32, 1
      %p197 = por %p195, %p196
      %p198 = scmp.ne.s32.totalorder %s189, %s190
      %p199 = scmp.eq.s32.totalorder %s32, 0
      %p200 = por %p198, %p199
      %p201 = scmp.ne.s32.totalorder %s189, %s190
      %p202 = scmp.eq.s32.totalorder %s33, 1
      %p203 = por %p201, %p202
      %p205 = scmp.ne.s32.totalorder %s190, %s204
      %p206 = scmp.eq.s32.totalorder %s33, 0
      %p207 = por %p205, %p206
      %s209 = sadd.s32 %s208, 1
      %p212 = scmp.eq.s32.totalorder %s27, 1
      %p213 = scmp.ne.s32.totalorder %s208, %s210
      %p214 = scmp.eq.s32.totalorder %s27, 0
      %p215 = por %p213, %p214
      %p216 = scmp.ne.s32.totalorder %s208, %s210
      %p217 = scmp.eq.s32.totalorder %s32, 1
      %p218 = por %p216, %p217
      %p219 = scmp.ne.s32.totalorder %s210, %s211
      %p220 = scmp.eq.s32.totalorder %s32, 0
      %p221 = por %p219, %p220
      %p222 = scmp.ne.s32.totalorder %s210, %s211
      %p223 = scmp.eq.s32.totalorder %s33, 1
      %p224 = por %p222, %p223
      %p226 = scmp.ne.s32.totalorder %s211, %s225
      %p227 = scmp.eq.s32.totalorder %s33, 0
      %p228 = por %p226, %p227
      %s230 = sadd.s32 %s229, 1
      %p233 = scmp.eq.s32.totalorder %s27, 1
      %p234 = scmp.ne.s32.totalorder %s229, %s231
      %p235 = scmp.eq.s32.totalorder %s27, 0
      %p236 = por %p234, %p235
      %p237 = scmp.ne.s32.totalorder %s229, %s231
      %p238 = scmp.eq.s32.totalorder %s32, 1
      %p239 = por %p237, %p238
      %p240 = scmp.ne.s32.totalorder %s231, %s232
      %p241 = scmp.eq.s32.totalorder %s32, 0
      %p242 = por %p240, %p241
      %p243 = scmp.ne.s32.totalorder %s231, %s232
      %p244 = scmp.eq.s32.totalorder %s33, 1
      %p245 = por %p243, %p244
      %p247 = scmp.ne.s32.totalorder %s232, %s246
      %p248 = scmp.eq.s32.totalorder %s33, 0
      %p249 = por %p247, %p248
      %s251 = sadd.s32 %s250, 1
      %p254 = scmp.eq.s32.totalorder %s27, 1
      %p255 = scmp.ne.s32.totalorder %s250, %s252
      %p256 = scmp.eq.s32.totalorder %s27, 0
      %p257 = por %p255, %p256
      %p258 = scmp.ne.s32.totalorder %s250, %s252
      %p259 = scmp.eq.s32.totalorder %s32, 1
      %p260 = por %p258, %p259
      %p261 = scmp.ne.s32.totalorder %s252, %s253
      %p262 = scmp.eq.s32.totalorder %s32, 0
      %p263 = por %p261, %p262
      %p264 = scmp.ne.s32.totalorder %s252, %s253
      %p265 = scmp.eq.s32.totalorder %s33, 1
      %p266 = por %p264, %p265
      %p268 = scmp.ne.s32.totalorder %s253, %s267
      %p269 = scmp.eq.s32.totalorder %s33, 0
      %p270 = por %p268, %p269
      %s272 = sadd.s32 %s271, 1
      %p275 = scmp.eq.s32.totalorder %s27, 1
      %p276 = scmp.ne.s32.totalorder %s271, %s273
      %p277 = scmp.eq.s32.totalorder %s27, 0
      %p278 = por %p276, %p277
      %p279 = scmp.ne.s32.totalorder %s271, %s273
      %p280 = scmp.eq.s32.totalorder %s32, 1
      %p281 = por %p279, %p280
      %p282 = scmp.ne.s32.totalorder %s273, %s274
      %p283 = scmp.eq.s32.totalorder %s32, 0
      %p284 = por %p282, %p283
      %p285 = scmp.ne.s32.totalorder %s273, %s274
      %p286 = scmp.eq.s32.totalorder %s33, 1
      %p287 = por %p285, %p286
      %p289 = scmp.ne.s32.totalorder %s274, %s288
      %p290 = scmp.eq.s32.totalorder %s33, 0
      %p291 = por %p289, %p290
      %s293 = sadd.s32 %s292, 1
      %p296 = scmp.eq.s32.totalorder %s27, 1
      %p297 = scmp.ne.s32.totalorder %s292, %s294
      %p298 = scmp.eq.s32.totalorder %s27, 0
      %p299 = por %p297, %p298
      %p300 = scmp.ne.s32.totalorder %s292, %s294
      %p301 = scmp.eq.s32.totalorder %s32, 1
      %p302 = por %p300, %p301
      %p303 = scmp.ne.s32.totalorder %s294, %s295
      %p304 = scmp.eq.s32.totalorder %s32, 0
      %p305 = por %p303, %p304
      %p306 = scmp.ne.s32.totalorder %s294, %s295
      %p307 = scmp.eq.s32.totalorder %s33, 1
      %p308 = por %p306, %p307
      %p310 = scmp.ne.s32.totalorder %s295, %s309
      %p311 = scmp.eq.s32.totalorder %s33, 0
      %p312 = por %p310, %p311
      %s313 = ssub.s32 %s27, %s34
      %p314 = scmp.eq.s32.totalorder %s313, 0
      %s316 = sadd.s32 %s315, 1
      %s317 = scalar_select %p314, %s315, %s316
      %p320 = pneg %p314
      %p321 = scmp.eq.s32.totalorder %s27, 1
      %p322 = por %p320, %p321
      %p323 = scmp.ne.s32.totalorder %s315, %s318
      %p324 = scmp.eq.s32.totalorder %s27, 0
      %p325 = por %p323, %p324
      %p326 = scmp.ne.s32.totalorder %s315, %s318
      %p327 = scmp.eq.s32.totalorder %s32, 1
      %p328 = por %p326, %p327
      %p329 = scmp.ne.s32.totalorder %s318, %s319
      %p330 = scmp.eq.s32.totalorder %s32, 0
      %p331 = por %p329, %p330
      %p332 = scmp.ne.s32.totalorder %s318, %s319
      %p333 = scmp.eq.s32.totalorder %s33, 1
      %p334 = por %p332, %p333
      %p336 = scmp.ne.s32.totalorder %s319, %s335
      %p337 = scmp.eq.s32.totalorder %s33, 0
      %p338 = por %p336, %p337
      %s339 = ssub.s32 %s27, %s34
      %p340 = scmp.eq.s32.totalorder %s339, 0
      %s342 = sadd.s32 %s341, 1
      %s343 = scalar_select %p340, %s341, %s342
      %p346 = pneg %p340
      %p347 = scmp.eq.s32.totalorder %s27, 1
      %p348 = por %p346, %p347
      %p349 = scmp.ne.s32.totalorder %s341, %s344
      %p350 = scmp.eq.s32.totalorder %s27, 0
      %p351 = por %p349, %p350
      %p352 = scmp.ne.s32.totalorder %s341, %s344
      %p353 = scmp.eq.s32.totalorder %s32, 1
      %p354 = por %p352, %p353
      %p355 = scmp.ne.s32.totalorder %s344, %s345
      %p356 = scmp.eq.s32.totalorder %s32, 0
      %p357 = por %p355, %p356
      %p358 = scmp.ne.s32.totalorder %s344, %s345
      %p359 = scmp.eq.s32.totalorder %s33, 1
      %p360 = por %p358, %p359
      %p362 = scmp.ne.s32.totalorder %s345, %s361
      %p363 = scmp.eq.s32.totalorder %s33, 0
      %p364 = por %p362, %p363
      %p365 = scmp.le.s32.totalorder 1, %s27
      %p366 = scmp.lt.s32.totalorder %s27, 3
      %p367 = pnand %p365, %p366
      %p368 = pneg %p367
      // Predicated region
      $region9: #{tpu_custom_call.1} parent=5 // pred_check
        _
      $region10: #{tpu_custom_call.1} parent=5 // pred_check_branch
        %370 = sbr.rel (%p367) target = $region12
      $region11: #{tpu_custom_call.1} parent=5 // pred_region
        %s371 = ssub.s32 %s27, 1
        // Predicated region
        $region13: #{tpu_custom_call.1} parent=11 // pred_check
          %p372 = pneg %p74
        $region14: #{tpu_custom_call.1} parent=11 // pred_check_branch
          %374 = sbr.rel (%p372) target = $region16
        $region15: #{tpu_custom_call.1} parent=11 // pred_region
          _
        $region16: #{tpu_custom_call.1} parent=11 // pred_fallthru
          _
        // Predicated region
        $region17: #{tpu_custom_call.1} parent=11 // pred_check
          %p375 = pneg %p95
        $region18: #{tpu_custom_call.1} parent=11 // pred_check_branch
          %377 = sbr.rel (%p375) target = $region20
        $region19: #{tpu_custom_call.1} parent=11 // pred_region
          _
        $region20: #{tpu_custom_call.1} parent=11 // pred_fallthru
          _
        // Predicated region
        $region21: #{tpu_custom_call.1} parent=11 // pred_check
          %p378 = pneg %p116
        $region22: #{tpu_custom_call.1} parent=11 // pred_check_branch
          %380 = sbr.rel (%p378) target = $region24
        $region23: #{tpu_custom_call.1} parent=11 // pred_region
          _
        $region24: #{tpu_custom_call.1} parent=11 // pred_fallthru
          _
        // Predicated region
        $region25: #{tpu_custom_call.1} parent=11 // pred_check
          %p381 = pneg %p137
        $region26: #{tpu_custom_call.1} parent=11 // pred_check_branch
          %383 = sbr.rel (%p381) target = $region28
        $region27: #{tpu_custom_call.1} parent=11 // pred_region
          _
        $region28: #{tpu_custom_call.1} parent=11 // pred_fallthru
          _
        // Predicated region
        $region29: #{tpu_custom_call.1} parent=11 // pred_check
          %p384 = pneg %p158
        $region30: #{tpu_custom_call.1} parent=11 // pred_check_branch
          %386 = sbr.rel (%p384) target = $region32
        $region31: #{tpu_custom_call.1} parent=11 // pred_region
          _
        $region32: #{tpu_custom_call.1} parent=11 // pred_fallthru
          _
        // Predicated region
        $region33: #{tpu_custom_call.1} parent=11 // pred_check
          %p387 = pneg %p179
        $region34: #{tpu_custom_call.1} parent=11 // pred_check_branch
          %389 = sbr.rel (%p387) target = $region36
        $region35: #{tpu_custom_call.1} parent=11 // pred_region
          _
        $region36: #{tpu_custom_call.1} parent=11 // pred_fallthru
          _
        // Predicated region
        $region37: #{tpu_custom_call.1} parent=11 // pred_check
          %p390 = pneg %p200
        $region38: #{tpu_custom_call.1} parent=11 // pred_check_branch
          %392 = sbr.rel (%p390) target = $region40
        $region39: #{tpu_custom_call.1} parent=11 // pred_region
          _
        $region40: #{tpu_custom_call.1} parent=11 // pred_fallthru
          _
        // Predicated region
        $region41: #{tpu_custom_call.1} parent=11 // pred_check
          %p393 = pneg %p221
        $region42: #{tpu_custom_call.1} parent=11 // pred_check_branch
          %395 = sbr.rel (%p393) target = $region44
        $region43: #{tpu_custom_call.1} parent=11 // pred_region
          _
        $region44: #{tpu_custom_call.1} parent=11 // pred_fallthru
          _
        // Predicated region
        $region45: #{tpu_custom_call.1} parent=11 // pred_check
          %p396 = pneg %p242
        $region46: #{tpu_custom_call.1} parent=11 // pred_check_branch
          %398 = sbr.rel (%p396) target = $region48
        $region47: #{tpu_custom_call.1} parent=11 // pred_region
          _
        $region48: #{tpu_custom_call.1} parent=11 // pred_fallthru
          _
        // Predicated region
        $region49: #{tpu_custom_call.1} parent=11 // pred_check
          %p399 = pneg %p263
        $region50: #{tpu_custom_call.1} parent=11 // pred_check_branch
          %401 = sbr.rel (%p399) target = $region52
        $region51: #{tpu_custom_call.1} parent=11 // pred_region
          _
        $region52: #{tpu_custom_call.1} parent=11 // pred_fallthru
          _
        // Predicated region
        $region53: #{tpu_custom_call.1} parent=11 // pred_check
          %p402 = pneg %p284
        $region54: #{tpu_custom_call.1} parent=11 // pred_check_branch
          %404 = sbr.rel (%p402) target = $region56
        $region55: #{tpu_custom_call.1} parent=11 // pred_region
          _
        $region56: #{tpu_custom_call.1} parent=11 // pred_fallthru
          _
        // Predicated region
        $region57: #{tpu_custom_call.1} parent=11 // pred_check
          %p405 = pneg %p305
        $region58: #{tpu_custom_call.1} parent=11 // pred_check_branch
          %407 = sbr.rel (%p405) target = $region60
        $region59: #{tpu_custom_call.1} parent=11 // pred_region
          _
        $region60: #{tpu_custom_call.1} parent=11 // pred_fallthru
          _
      $region12: #{tpu_custom_call.1} parent=5 // pred_fallthru
        _
      %p408 = scmp.lt.s32.totalorder %s27, 2
      // Predicated region
      $region61: #{tpu_custom_call.1} parent=5 // pred_check
        %p409 = pneg %p408
      $region62: #{tpu_custom_call.1} parent=5 // pred_check_branch
        %411 = sbr.rel (%p409) target = $region64
      $region63: #{tpu_custom_call.1} parent=5 // pred_region
        // Predicated region
        $region65: #{tpu_custom_call.1} parent=63 // pred_check
          %p412 = pneg %p47
        $region66: #{tpu_custom_call.1} parent=63 // pred_check_branch
          %414 = sbr.rel (%p412) target = $region68
        $region67: #{tpu_custom_call.1} parent=63 // pred_region
          %p415 = scmp.lt.s32.totalorder %s27, 1
          %s416 = scalar_select %p415, %s27, 1
          %s417 = smul.addr %s416, 8
          %s418 = scalar_lea.vmem %s0, %s417
        $region68: #{tpu_custom_call.1} parent=63 // pred_fallthru
          _
      $region64: #{tpu_custom_call.1} parent=5 // pred_fallthru
        _
      %p419 = scmp.le.s32.totalorder 1, %s27
      %p420 = scmp.lt.s32.totalorder %s27, 3
      %p421 = pnand %p419, %p420
      %p422 = pneg %p421
      // Predicated region
      $region69: #{tpu_custom_call.1} parent=5 // pred_check
        _
      $region70: #{tpu_custom_call.1} parent=5 // pred_check_branch
        %424 = sbr.rel (%p421) target = $region72
      $region71: #{tpu_custom_call.1} parent=5 // pred_region
        %s425 = ssub.s32 %s27, 1
        %p426 = scmp.lt.s32.totalorder %s32, 1
        %s427 = scalar_select %p426, %s32, 1
        %s428 = smul.addr %s427, 8
        %s429 = scalar_lea.vmem %s0, %s428
        %p430 = pneg %p53
        %p431 = pneg %p50
        %p432 = pneg %p74
        %p433 = pneg %p71
        %p434 = pneg %p95
        %p435 = pneg %p92
        %p436 = pneg %p116
        %p437 = pneg %p113
        %p438 = pneg %p137
        %p439 = pneg %p134
        %p440 = pneg %p158
        %p441 = pneg %p155
        %p442 = pneg %p179
        %p443 = pneg %p176
        %p444 = pneg %p200
        %p445 = pneg %p197
        %p446 = pneg %p221
        %p447 = pneg %p218
        %p448 = pneg %p242
        %p449 = pneg %p239
        %p450 = pneg %p263
        %p451 = pneg %p260
        %p452 = pneg %p284
        %p453 = pneg %p281
        %p454 = pneg %p305
        %p455 = pneg %p302
        %p456 = pneg %p331
        %p457 = pneg %p328
        %s458 = sand.u32 %s318, 1
        %s459 = scalar_lea.sflag [#allocation3], %s458
        %s460 = sand.u32 %s318, 1
        %s461 = smul.addr %s460, 8
        %s462 = scalar_lea.vmem [#allocation2], %s461
        %p463 = pneg %p357
        %p464 = pneg %p354
        %s465 = sand.u32 %s344, 1
        %s466 = scalar_lea.sflag [#allocation5], %s465
        %s467 = sand.u32 %s344, 1
        %s468 = smul.addr %s467, 8
        %s469 = scalar_lea.vmem [#allocation4], %s468
        %p470 = scmp.lt.s32.totalorder %s32, 1
        %s471 = scalar_select %p470, %s32, 1
        %s472 = smul.addr %s471, 8
        %s473 = scalar_lea.vmem %s0, %s472
        %v474 = vld [vmem:[%s473] sm:$0xff]
        %vm475 = vcmask 261120
        %v476 = vsel %vm475, %v474, 0.0
        %477 = vadd.xlane.f32.xlu0 %v476
        %v478 = vpop.xlane.xlu0 %477
        %v479 = vrcp.pop 32.0
        %v480 = vmul.f32 %v478, %v479
        %v481 = vsub.f32 %v474, %v480
        %v482 = vmul.f32 %v481, %v481
        %v483 = vsel %vm475, %v482, 0.0
        %484 = vadd.xlane.f32.xlu0 %v483
        %v485 = vpop.xlane.xlu0 %484
        %v486 = vmul.f32 %v485, %v479
        %v487 = vadd.f32 %v486, 1e-05
        %v488 = vrsqrt.pop %v487
        %v489 = vmul.f32 %v481, %v488
        %v490 = vld [vmem:[%s1] sm:$0x1]
        %v492 = vlaneseq
        %v493 = vshrl.u32 %v492, 7
        %v494 = vsub.s32 0, %v493
        %v495 = vrot.slane %v490, %v494
        %v497 = vmul.f32 %v489, %v495
        %v498 = vld [vmem:[%s2] sm:$0x1]
        %v500 = vlaneseq
        %v501 = vshrl.u32 %v500, 7
        %v502 = vsub.s32 0, %v501
        %v503 = vrot.slane %v498, %v502
        %v505 = vadd.f32 %v497, %v503
        %v506 = vld [vmem:[%s3] sm:$0xff]
        %v507 = vld [vmem:[%s3 + $0x8] sm:$0xff]
        %v508 = vld [vmem:[%s3 + $0x10] sm:$0xff]
        %v509 = vld [vmem:[%s3 + $0x18] sm:$0xff]
        %v510 = vld [vmem:[%s4] sm:$0x1]
        %v512 = vlaneseq
        %v513 = vshrl.u32 %v512, 7
        %v514 = vsub.s32 0, %v513
        %v515 = vrot.slane %v510, %v514
        %v518 = vsel %vm475, %v505, 0
        %520 = vmatprep.subr.mxu0 0.0
        %521 = vmatpush1.msra.mxu0 %v506
        %522 = vmatprep.subr.mxu0 0.0
        %523 = vmatpush1.msra.mxu0 %v507
        %524 = vmatprep.subr.mxu0 0.0
        %525 = vmatpush1.msra.mxu0 %v508
        %526 = vmatprep.subr.mxu0 0.0
        %527 = vmatpush1.msra.mxu0 %v509
        %528 = vmatprep.subr.mxu0 0.0
        %529 = vmatpush1.msra.mxu0 0.0
        %530 = vmatprep.subr.mxu0 0.0
        %531 = vmatpush1.msra.mxu0 0.0
        %532 = vmatprep.subr.mxu0 0.0
        %533 = vmatpush1.msra.mxu0 0.0
        %534 = vmatprep.subr.mxu0 0.0
        %535 = vmatpush1.msra.mxu0 0.0
        %536 = vmatprep.subr.mxu0 0.0
        %537 = vmatpush1.msra.mxu0 0.0
        %538 = vmatprep.subr.mxu0 0.0
        %539 = vmatpush1.msra.mxu0 0.0
        %540 = vmatprep.subr.mxu0 0.0
        %541 = vmatpush1.msra.mxu0 0.0
        %542 = vmatprep.subr.mxu0 0.0
        %543 = vmatpush1.msra.mxu0 0.0
        %544 = vmatprep.subr.mxu0 0.0
        %545 = vmatpush1.msra.mxu0 0.0
        %546 = vmatprep.subr.mxu0 0.0
        %547 = vmatpush1.msra.mxu0 0.0
        %548 = vmatprep.subr.mxu0 0.0
        %549 = vmatpush1.msra.mxu0 0.0
        %550 = vmatprep.subr.mxu0 0.0
        %551 = vmatpush1.msra.mxu0 0.0
        %552 = vmatprep.subr.mxu0 0.0
        %553 = vmatpush1.msra.mxu0 0.0
        %554 = vmatprep.subr.mxu0 0.0
        %555 = vmatpush1.msra.mxu0 0.0
        %556 = vmatprep.subr.mxu0 0.0
        %557 = vmatpush1.msra.mxu0 0.0
        %558 = vmatprep.subr.mxu0 0.0
        %559 = vmatpush1.msra.mxu0 0.0
        %560 = vmatprep.subr.mxu0 0.0
        %561 = vmatpush1.msra.mxu0 0.0
        %562 = vmatprep.subr.mxu0 0.0
        %563 = vmatpush1.msra.mxu0 0.0
        %564 = vmatprep.subr.mxu0 0.0
        %565 = vmatpush1.msra.mxu0 0.0
        %566 = vmatprep.subr.mxu0 0.0
        %567 = vmatpush1.msra.mxu0 0.0
        %568 = vmatprep.subr.mxu0 0.0
        %569 = vmatpush1.msra.mxu0 0.0
        %570 = vmatprep.subr.mxu0 0.0
        %571 = vmatpush1.msra.mxu0 0.0
        %572 = vmatprep.subr.mxu0 0.0
        %573 = vmatpush1.msra.mxu0 0.0
        %574 = vmatprep.subr.mxu0 0.0
        %575 = vmatpush1.msra.mxu0 0.0
        %576 = vmatprep.subr.mxu0 0.0
        %577 = vmatpush1.msra.mxu0 0.0
        %578 = vmatprep.subr.mxu0 0.0
        %579 = vmatpush1.msra.mxu0 0.0
        %580 = vmatprep.subr.mxu0 0.0
        %581 = vmatpush1.msra.mxu0 0.0
        %582 = vmatprep.subr.mxu0 0.0
        %583 = vmatpush1.msra.mxu0 0.0
        %584 = vmatprep.mubr.f32.mxu0 0.0
        %585 = vmatmul.mubr.f32.gmra.mrb[0].mxu0 %v518
        %v586 = vpop.f32.mrb[0].mxu0
        %v587 = vadd.f32 %v515, %v586
        %v588 = vpop.f32.mrb[0].mxu0
        %589 = vdwg.mxu0
        %v590 = vmul.f32 %v587, 0.35355338
        %592 = vrot.lane.b32.xlu0 %v587, 96
        %v593 = vpop.permute.xlu0 %592
        %vm594 = vcmask 64512
        %v596 = vsel %vm594, %v590, 0
        %v598 = vsel %vm594, %v593, 0
        %600 = vmatprep.subr.mxu0 0.0
        %601 = vmatpush1.xpose.msra.mxu0 %v598
        %602 = vmatprep.subr.mxu0 0.0
        %603 = vmatpush1.xpose.msra.mxu0 0.0
        %604 = vmatprep.subr.mxu0 0.0
        %605 = vmatpush1.xpose.msra.mxu0 0.0
        %606 = vmatprep.subr.mxu0 0.0
        %607 = vmatpush1.xpose.msra.mxu0 0.0
        %608 = vmatprep.subr.mxu0 0.0
        %609 = vmatpush1.xpose.msra.mxu0 0.0
        %610 = vmatprep.subr.mxu0 0.0
        %611 = vmatpush1.xpose.msra.mxu0 0.0
        %612 = vmatprep.subr.mxu0 0.0
        %613 = vmatpush1.xpose.msra.mxu0 0.0
        %614 = vmatprep.subr.mxu0 0.0
        %615 = vmatpush1.xpose.msra.mxu0 0.0
        %616 = vmatprep.subr.mxu0 0.0
        %617 = vmatpush1.xpose.msra.mxu0 0.0
        %618 = vmatprep.subr.mxu0 0.0
        %619 = vmatpush1.xpose.msra.mxu0 0.0
        %620 = vmatprep.subr.mxu0 0.0
        %621 = vmatpush1.xpose.msra.mxu0 0.0
        %622 = vmatprep.subr.mxu0 0.0
        %623 = vmatpush1.xpose.msra.mxu0 0.0
        %624 = vmatprep.subr.mxu0 0.0
        %625 = vmatpush1.xpose.msra.mxu0 0.0
        %626 = vmatprep.subr.mxu0 0.0
        %627 = vmatpush1.xpose.msra.mxu0 0.0
        %628 = vmatprep.subr.mxu0 0.0
        %629 = vmatpush1.xpose.msra.mxu0 0.0
        %630 = vmatprep.subr.mxu0 0.0
        %631 = vmatpush1.xpose.msra.mxu0 0.0
        %632 = vmatprep.subr.mxu0 0.0
        %633 = vmatpush1.xpose.msra.mxu0 0.0
        %634 = vmatprep.subr.mxu0 0.0
        %635 = vmatpush1.xpose.msra.mxu0 0.0
        %636 = vmatprep.subr.mxu0 0.0
        %637 = vmatpush1.xpose.msra.mxu0 0.0
        %638 = vmatprep.subr.mxu0 0.0
        %639 = vmatpush1.xpose.msra.mxu0 0.0
        %640 = vmatprep.subr.mxu0 0.0
        %641 = vmatpush1.xpose.msra.mxu0 0.0
        %642 = vmatprep.subr.mxu0 0.0
        %643 = vmatpush1.xpose.msra.mxu0 0.0
        %644 = vmatprep.subr.mxu0 0.0
        %645 = vmatpush1.xpose.msra.mxu0 0.0
        %646 = vmatprep.subr.mxu0 0.0
        %647 = vmatpush1.xpose.msra.mxu0 0.0
        %648 = vmatprep.subr.mxu0 0.0
        %649 = vmatpush1.xpose.msra.mxu0 0.0
        %650 = vmatprep.subr.mxu0 0.0
        %651 = vmatpush1.xpose.msra.mxu0 0.0
        %652 = vmatprep.subr.mxu0 0.0
        %653 = vmatpush1.xpose.msra.mxu0 0.0
        %654 = vmatprep.subr.mxu0 0.0
        %655 = vmatpush1.xpose.msra.mxu0 0.0
        %656 = vmatprep.subr.mxu0 0.0
        %657 = vmatpush1.xpose.msra.mxu0 0.0
        %658 = vmatprep.subr.mxu0 0.0
        %659 = vmatpush1.xpose.msra.mxu0 0.0
        %660 = vmatprep.subr.mxu0 0.0
        %661 = vmatpush1.xpose.msra.mxu0 0.0
        %662 = vmatprep.subr.mxu0 0.0
        %663 = vmatpush1.xpose.msra.mxu0 0.0
        %664 = vmatprep.mubr.f32.mxu0 0.0
        %665 = vmatmul.mubr.f32.gmra.mrb[0].mxu0 %v596
        %v666 = vpop.f32.mrb[0].mxu0
        %v667 = vadd.f32 0.0, %v666
        %v668 = vpop.f32.mrb[0].mxu0
        %669 = vdwg.mxu0
        %v670 = vsel %vm594, %v667, -inf
        %671 = vmax.xlane.f32.xlu0 %v670
        %v672 = vpop.xlane.xlu0 %671
        %v673 = vsub.f32 %v667, %v672
        %v674 = vmul.f32 %v673, 1.442695
        %v675 = vpow.pop %v674
        %v676 = vsel %vm594, %v675, 0.0
        %677 = vadd.xlane.f32.xlu0 %v676
        %v678 = vpop.xlane.xlu0 %677
        %v679 = vrcp.pop %v678
        %v680 = vmul.f32 %v675, %v679
        %v681 = vadd.f32 %v680, 0.0
        %682 = vrot.lane.b32.xlu0 %v587, 64
        %v683 = vpop.permute.xlu0 %682
        %v686 = vsel %vm594, %v680, 0
        %688 = vmatprep.subr.mxu0 0.0
        %689 = vmatpush1.msra.mxu0 %v683
        %690 = vmatprep.subr.mxu0 0.0
        %691 = vmatpush1.msra.mxu0 0.0
        %692 = vmatprep.subr.mxu0 0.0
        %693 = vmatpush1.msra.mxu0 0.0
        %694 = vmatprep.subr.mxu0 0.0
        %695 = vmatpush1.msra.mxu0 0.0
        %696 = vmatprep.subr.mxu0 0.0
        %697 = vmatpush1.msra.mxu0 0.0
        %698 = vmatprep.subr.mxu0 0.0
        %699 = vmatpush1.msra.mxu0 0.0
        %700 = vmatprep.subr.mxu0 0.0
        %701 = vmatpush1.msra.mxu0 0.0
        %702 = vmatprep.subr.mxu0 0.0
        %703 = vmatpush1.msra.mxu0 0.0
        %704 = vmatprep.subr.mxu0 0.0
        %705 = vmatpush1.msra.mxu0 0.0
        %706 = vmatprep.subr.mxu0 0.0
        %707 = vmatpush1.msra.mxu0 0.0
        %708 = vmatprep.subr.mxu0 0.0
        %709 = vmatpush1.msra.mxu0 0.0
        %710 = vmatprep.subr.mxu0 0.0
        %711 = vmatpush1.msra.mxu0 0.0
        %712 = vmatprep.subr.mxu0 0.0
        %713 = vmatpush1.msra.mxu0 0.0
        %714 = vmatprep.subr.mxu0 0.0
        %715 = vmatpush1.msra.mxu0 0.0
        %716 = vmatprep.subr.mxu0 0.0
        %717 = vmatpush1.msra.mxu0 0.0
        %718 = vmatprep.subr.mxu0 0.0
        %719 = vmatpush1.msra.mxu0 0.0
        %720 = vmatprep.subr.mxu0 0.0
        %721 = vmatpush1.msra.mxu0 0.0
        %722 = vmatprep.subr.mxu0 0.0
        %723 = vmatpush1.msra.mxu0 0.0
        %724 = vmatprep.subr.mxu0 0.0
        %725 = vmatpush1.msra.mxu0 0.0
        %726 = vmatprep.subr.mxu0 0.0
        %727 = vmatpush1.msra.mxu0 0.0
        %728 = vmatprep.subr.mxu0 0.0
        %729 = vmatpush1.msra.mxu0 0.0
        %730 = vmatprep.subr.mxu0 0.0
        %731 = vmatpush1.msra.mxu0 0.0
        %732 = vmatprep.subr.mxu0 0.0
        %733 = vmatpush1.msra.mxu0 0.0
        %734 = vmatprep.subr.mxu0 0.0
        %735 = vmatpush1.msra.mxu0 0.0
        %736 = vmatprep.subr.mxu0 0.0
        %737 = vmatpush1.msra.mxu0 0.0
        %738 = vmatprep.subr.mxu0 0.0
        %739 = vmatpush1.msra.mxu0 0.0
        %740 = vmatprep.subr.mxu0 0.0
        %741 = vmatpush1.msra.mxu0 0.0
        %742 = vmatprep.subr.mxu0 0.0
        %743 = vmatpush1.msra.mxu0 0.0
        %744 = vmatprep.subr.mxu0 0.0
        %745 = vmatpush1.msra.mxu0 0.0
        %746 = vmatprep.subr.mxu0 0.0
        %747 = vmatpush1.msra.mxu0 0.0
        %748 = vmatprep.subr.mxu0 0.0
        %749 = vmatpush1.msra.mxu0 0.0
        %750 = vmatprep.subr.mxu0 0.0
        %751 = vmatpush1.msra.mxu0 0.0
        %752 = vmatprep.mubr.f32.mxu0 0.0
        %753 = vmatmul.mubr.f32.gmra.mrb[0].mxu0 %v686
        %v754 = vpop.f32.mrb[0].mxu0
        %v755 = vadd.f32 0.0, %v754
        %v756 = vpop.f32.mrb[0].mxu0
        %757 = vdwg.mxu0
        %758 = vrot.lane.b32.xlu0 %v590, 120
        %v759 = vpop.permute.xlu0 %758
        %760 = vrot.lane.b32.xlu0 %v587, 88
        %v761 = vpop.permute.xlu0 %760
        %v762 = vsel %vm594, %v759, 0
        %v764 = vsel %vm594, %v761, 0
        %766 = vmatprep.subr.mxu0 0.0
        %767 = vmatpush1.xpose.msra.mxu0 %v764
        %768 = vmatprep.subr.mxu0 0.0
        %769 = vmatpush1.xpose.msra.mxu0 0.0
        %770 = vmatprep.subr.mxu0 0.0
        %771 = vmatpush1.xpose.msra.mxu0 0.0
        %772 = vmatprep.subr.mxu0 0.0
        %773 = vmatpush1.xpose.msra.mxu0 0.0
        %774 = vmatprep.subr.mxu0 0.0
        %775 = vmatpush1.xpose.msra.mxu0 0.0
        %776 = vmatprep.subr.mxu0 0.0
        %777 = vmatpush1.xpose.msra.mxu0 0.0
        %778 = vmatprep.subr.mxu0 0.0
        %779 = vmatpush1.xpose.msra.mxu0 0.0
        %780 = vmatprep.subr.mxu0 0.0
        %781 = vmatpush1.xpose.msra.mxu0 0.0
        %782 = vmatprep.subr.mxu0 0.0
        %783 = vmatpush1.xpose.msra.mxu0 0.0
        %784 = vmatprep.subr.mxu0 0.0
        %785 = vmatpush1.xpose.msra.mxu0 0.0
        %786 = vmatprep.subr.mxu0 0.0
        %787 = vmatpush1.xpose.msra.mxu0 0.0
        %788 = vmatprep.subr.mxu0 0.0
        %789 = vmatpush1.xpose.msra.mxu0 0.0
        %790 = vmatprep.subr.mxu0 0.0
        %791 = vmatpush1.xpose.msra.mxu0 0.0
        %792 = vmatprep.subr.mxu0 0.0
        %793 = vmatpush1.xpose.msra.mxu0 0.0
        %794 = vmatprep.subr.mxu0 0.0
        %795 = vmatpush1.xpose.msra.mxu0 0.0
        %796 = vmatprep.subr.mxu0 0.0
        %797 = vmatpush1.xpose.msra.mxu0 0.0
        %798 = vmatprep.subr.mxu0 0.0
        %799 = vmatpush1.xpose.msra.mxu0 0.0
        %800 = vmatprep.subr.mxu0 0.0
        %801 = vmatpush1.xpose.msra.mxu0 0.0
        %802 = vmatprep.subr.mxu0 0.0
        %803 = vmatpush1.xpose.msra.mxu0 0.0
        %804 = vmatprep.subr.mxu0 0.0
        %805 = vmatpush1.xpose.msra.mxu0 0.0
        %806 = vmatprep.subr.mxu0 0.0
        %807 = vmatpush1.xpose.msra.mxu0 0.0
        %808 = vmatprep.subr.mxu0 0.0
        %809 = vmatpush1.xpose.msra.mxu0 0.0
        %810 = vmatprep.subr.mxu0 0.0
        %811 = vmatpush1.xpose.msra.mxu0 0.0
        %812 = vmatprep.subr.mxu0 0.0
        %813 = vmatpush1.xpose.msra.mxu0 0.0
        %814 = vmatprep.subr.mxu0 0.0
        %815 = vmatpush1.xpose.msra.mxu0 0.0
        %816 = vmatprep.subr.mxu0 0.0
        %817 = vmatpush1.xpose.msra.mxu0 0.0
        %818 = vmatprep.subr.mxu0 0.0
        %819 = vmatpush1.xpose.msra.mxu0 0.0
        %820 = vmatprep.subr.mxu0 0.0
        %821 = vmatpush1.xpose.msra.mxu0 0.0
        %822 = vmatprep.subr.mxu0 0.0
        %823 = vmatpush1.xpose.msra.mxu0 0.0
        %824 = vmatprep.subr.mxu0 0.0
        %825 = vmatpush1.xpose.msra.mxu0 0.0
        %826 = vmatprep.subr.mxu0 0.0
        %827 = vmatpush1.xpose.msra.mxu0 0.0
        %828 = vmatprep.subr.mxu0 0.0
        %829 = vmatpush1.xpose.msra.mxu0 0.0
        %830 = vmatprep.mubr.f32.mxu0 0.0
        %831 = vmatmul.mubr.f32.gmra.mrb[0].mxu0 %v762
        %v832 = vpop.f32.mrb[0].mxu0
        %v833 = vadd.f32 0.0, %v832
        %v834 = vpop.f32.mrb[0].mxu0
        %835 = vdwg.mxu0
        %v836 = vsel %vm594, %v833, -inf
        %837 = vmax.xlane.f32.xlu0 %v836
        %v838 = vpop.xlane.xlu0 %837
        %v839 = vsub.f32 %v833, %v838
        %v840 = vmul.f32 %v839, 1.442695
        %v841 = vpow.pop %v840
        %v842 = vsel %vm594, %v841, 0.0
        %843 = vadd.xlane.f32.xlu0 %v842
        %v844 = vpop.xlane.xlu0 %843
        %v845 = vrcp.pop %v844
        %v846 = vmul.f32 %v841, %v845
        %v847 = vadd.f32 %v681, %v846
        %848 = vrot.lane.b32.xlu0 %v587, 56
        %v849 = vpop.permute.xlu0 %848
        %v852 = vsel %vm594, %v846, 0
        %854 = vmatprep.subr.mxu0 0.0
        %855 = vmatpush1.msra.mxu0 %v849
        %856 = vmatprep.subr.mxu0 0.0
        %857 = vmatpush1.msra.mxu0 0.0
        %858 = vmatprep.subr.mxu0 0.0
        %859 = vmatpush1.msra.mxu0 0.0
        %860 = vmatprep.subr.mxu0 0.0
        %861 = vmatpush1.msra.mxu0 0.0
        %862 = vmatprep.subr.mxu0 0.0
        %863 = vmatpush1.msra.mxu0 0.0
        %864 = vmatprep.subr.mxu0 0.0
        %865 = vmatpush1.msra.mxu0 0.0
        %866 = vmatprep.subr.mxu0 0.0
        %867 = vmatpush1.msra.mxu0 0.0
        %868 = vmatprep.subr.mxu0 0.0
        %869 = vmatpush1.msra.mxu0 0.0
        %870 = vmatprep.subr.mxu0 0.0
        %871 = vmatpush1.msra.mxu0 0.0
        %872 = vmatprep.subr.mxu0 0.0
        %873 = vmatpush1.msra.mxu0 0.0
        %874 = vmatprep.subr.mxu0 0.0
        %875 = vmatpush1.msra.mxu0 0.0
        %876 = vmatprep.subr.mxu0 0.0
        %877 = vmatpush1.msra.mxu0 0.0
        %878 = vmatprep.subr.mxu0 0.0
        %879 = vmatpush1.msra.mxu0 0.0
        %880 = vmatprep.subr.mxu0 0.0
        %881 = vmatpush1.msra.mxu0 0.0
        %882 = vmatprep.subr.mxu0 0.0
        %883 = vmatpush1.msra.mxu0 0.0
        %884 = vmatprep.subr.mxu0 0.0
        %885 = vmatpush1.msra.mxu0 0.0
        %886 = vmatprep.subr.mxu0 0.0
        %887 = vmatpush1.msra.mxu0 0.0
        %888 = vmatprep.subr.mxu0 0.0
        %889 = vmatpush1.msra.mxu0 0.0
        %890 = vmatprep.subr.mxu0 0.0
        %891 = vmatpush1.msra.mxu0 0.0
        %892 = vmatprep.subr.mxu0 0.0
        %893 = vmatpush1.msra.mxu0 0.0
        %894 = vmatprep.subr.mxu0 0.0
        %895 = vmatpush1.msra.mxu0 0.0
        %896 = vmatprep.subr.mxu0 0.0
        %897 = vmatpush1.msra.mxu0 0.0
        %898 = vmatprep.subr.mxu0 0.0
        %899 = vmatpush1.msra.mxu0 0.0
        %900 = vmatprep.subr.mxu0 0.0
        %901 = vmatpush1.msra.mxu0 0.0
        %902 = vmatprep.subr.mxu0 0.0
        %903 = vmatpush1.msra.mxu0 0.0
        %904 = vmatprep.subr.mxu0 0.0
        %905 = vmatpush1.msra.mxu0 0.0
        %906 = vmatprep.subr.mxu0 0.0
        %907 = vmatpush1.msra.mxu0 0.0
        %908 = vmatprep.subr.mxu0 0.0
        %909 = vmatpush1.msra.mxu0 0.0
        %910 = vmatprep.subr.mxu0 0.0
        %911 = vmatpush1.msra.mxu0 0.0
        %912 = vmatprep.subr.mxu0 0.0
        %913 = vmatpush1.msra.mxu0 0.0
        %914 = vmatprep.subr.mxu0 0.0
        %915 = vmatpush1.msra.mxu0 0.0
        %916 = vmatprep.subr.mxu0 0.0
        %917 = vmatpush1.msra.mxu0 0.0
        %918 = vmatprep.mubr.f32.mxu0 0.0
        %919 = vmatmul.mubr.f32.gmra.mrb[0].mxu0 %v852
        %v920 = vpop.f32.mrb[0].mxu0
        %v921 = vadd.f32 0.0, %v920
        %v922 = vpop.f32.mrb[0].mxu0
        %923 = vdwg.mxu0
        %924 = vrot.lane.b32.xlu0 %v590, 112
        %v925 = vpop.permute.xlu0 %924
        %926 = vrot.lane.b32.xlu0 %v587, 80
        %v927 = vpop.permute.xlu0 %926
        %v928 = vsel %vm594, %v925, 0
        %v930 = vsel %vm594, %v927, 0
        %932 = vmatprep.subr.mxu0 0.0
        %933 = vmatpush1.xpose.msra.mxu0 %v930
        %934 = vmatprep.subr.mxu0 0.0
        %935 = vmatpush1.xpose.msra.mxu0 0.0
        %936 = vmatprep.subr.mxu0 0.0
        %937 = vmatpush1.xpose.msra.mxu0 0.0
        %938 = vmatprep.subr.mxu0 0.0
        %939 = vmatpush1.xpose.msra.mxu0 0.0
        %940 = vmatprep.subr.mxu0 0.0
        %941 = vmatpush1.xpose.msra.mxu0 0.0
        %942 = vmatprep.subr.mxu0 0.0
        %943 = vmatpush1.xpose.msra.mxu0 0.0
        %944 = vmatprep.subr.mxu0 0.0
        %945 = vmatpush1.xpose.msra.mxu0 0.0
        %946 = vmatprep.subr.mxu0 0.0
        %947 = vmatpush1.xpose.msra.mxu0 0.0
        %948 = vmatprep.subr.mxu0 0.0
        %949 = vmatpush1.xpose.msra.mxu0 0.0
        %950 = vmatprep.subr.mxu0 0.0
        %951 = vmatpush1.xpose.msra.mxu0 0.0
        %952 = vmatprep.subr.mxu0 0.0
        %953 = vmatpush1.xpose.msra.mxu0 0.0
        %954 = vmatprep.subr.mxu0 0.0
        %955 = vmatpush1.xpose.msra.mxu0 0.0
        %956 = vmatprep.subr.mxu0 0.0
        %957 = vmatpush1.xpose.msra.mxu0 0.0
        %958 = vmatprep.subr.mxu0 0.0
        %959 = vmatpush1.xpose.msra.mxu0 0.0
        %960 = vmatprep.subr.mxu0 0.0
        %961 = vmatpush1.xpose.msra.mxu0 0.0
        %962 = vmatprep.subr.mxu0 0.0
        %963 = vmatpush1.xpose.msra.mxu0 0.0
        %964 = vmatprep.subr.mxu0 0.0
        %965 = vmatpush1.xpose.msra.mxu0 0.0
        %966 = vmatprep.subr.mxu0 0.0
        %967 = vmatpush1.xpose.msra.mxu0 0.0
        %968 = vmatprep.subr.mxu0 0.0
        %969 = vmatpush1.xpose.msra.mxu0 0.0
        %970 = vmatprep.subr.mxu0 0.0
        %971 = vmatpush1.xpose.msra.mxu0 0.0
        %972 = vmatprep.subr.mxu0 0.0
        %973 = vmatpush1.xpose.msra.mxu0 0.0
        %974 = vmatprep.subr.mxu0 0.0
        %975 = vmatpush1.xpose.msra.mxu0 0.0
        %976 = vmatprep.subr.mxu0 0.0
        %977 = vmatpush1.xpose.msra.mxu0 0.0
        %978 = vmatprep.subr.mxu0 0.0
        %979 = vmatpush1.xpose.msra.mxu0 0.0
        %980 = vmatprep.subr.mxu0 0.0
        %981 = vmatpush1.xpose.msra.mxu0 0.0
        %982 = vmatprep.subr.mxu0 0.0
        %983 = vmatpush1.xpose.msra.mxu0 0.0
        %984 = vmatprep.subr.mxu0 0.0
        %985 = vmatpush1.xpose.msra.mxu0 0.0
        %986 = vmatprep.subr.mxu0 0.0
        %987 = vmatpush1.xpose.msra.mxu0 0.0
        %988 = vmatprep.subr.mxu0 0.0
        %989 = vmatpush1.xpose.msra.mxu0 0.0
        %990 = vmatprep.subr.mxu0 0.0
        %991 = vmatpush1.xpose.msra.mxu0 0.0
        %992 = vmatprep.subr.mxu0 0.0
        %993 = vmatpush1.xpose.msra.mxu0 0.0
        %994 = vmatprep.subr.mxu0 0.0
        %995 = vmatpush1.xpose.msra.mxu0 0.0
        %996 = vmatprep.mubr.f32.mxu0 0.0
        %997 = vmatmul.mubr.f32.gmra.mrb[0].mxu0 %v928
        %v998 = vpop.f32.mrb[0].mxu0
        %v999 = vadd.f32 0.0, %v998
        %v1000 = vpop.f32.mrb[0].mxu0
        %1001 = vdwg.mxu0
        %v1002 = vsel %vm594, %v999, -inf
        %1003 = vmax.xlane.f32.xlu0 %v1002
        %v1004 = vpop.xlane.xlu0 %1003
        %v1005 = vsub.f32 %v999, %v1004
        %v1006 = vmul.f32 %v1005, 1.442695
        %v1007 = vpow.pop %v1006
        %v1008 = vsel %vm594, %v1007, 0.0
        %1009 = vadd.xlane.f32.xlu0 %v1008
        %v1010 = vpop.xlane.xlu0 %1009
        %v1011 = vrcp.pop %v1010
        %v1012 = vmul.f32 %v1007, %v1011
        %v1013 = vadd.f32 %v847, %v1012
        %1014 = vrot.lane.b32.xlu0 %v587, 48
        %v1015 = vpop.permute.xlu0 %1014
        %v1018 = vsel %vm594, %v1012, 0
        %1020 = vmatprep.subr.mxu0 0.0
        %1021 = vmatpush1.msra.mxu0 %v1015
        %1022 = vmatprep.subr.mxu0 0.0
        %1023 = vmatpush1.msra.mxu0 0.0
        %1024 = vmatprep.subr.mxu0 0.0
        %1025 = vmatpush1.msra.mxu0 0.0
        %1026 = vmatprep.subr.mxu0 0.0
        %1027 = vmatpush1.msra.mxu0 0.0
        %1028 = vmatprep.subr.mxu0 0.0
        %1029 = vmatpush1.msra.mxu0 0.0
        %1030 = vmatprep.subr.mxu0 0.0
        %1031 = vmatpush1.msra.mxu0 0.0
        %1032 = vmatprep.subr.mxu0 0.0
        %1033 = vmatpush1.msra.mxu0 0.0
        %1034 = vmatprep.subr.mxu0 0.0
        %1035 = vmatpush1.msra.mxu0 0.0
        %1036 = vmatprep.subr.mxu0 0.0
        %1037 = vmatpush1.msra.mxu0 0.0
        %1038 = vmatprep.subr.mxu0 0.0
        %1039 = vmatpush1.msra.mxu0 0.0
        %1040 = vmatprep.subr.mxu0 0.0
        %1041 = vmatpush1.msra.mxu0 0.0
        %1042 = vmatprep.subr.mxu0 0.0
        %1043 = vmatpush1.msra.mxu0 0.0
        %1044 = vmatprep.subr.mxu0 0.0
        %1045 = vmatpush1.msra.mxu0 0.0
        %1046 = vmatprep.subr.mxu0 0.0
        %1047 = vmatpush1.msra.mxu0 0.0
        %1048 = vmatprep.subr.mxu0 0.0
        %1049 = vmatpush1.msra.mxu0 0.0
        %1050 = vmatprep.subr.mxu0 0.0
        %1051 = vmatpush1.msra.mxu0 0.0
        %1052 = vmatprep.subr.mxu0 0.0
        %1053 = vmatpush1.msra.mxu0 0.0
        %1054 = vmatprep.subr.mxu0 0.0
        %1055 = vmatpush1.msra.mxu0 0.0
        %1056 = vmatprep.subr.mxu0 0.0
        %1057 = vmatpush1.msra.mxu0 0.0
        %1058 = vmatprep.subr.mxu0 0.0
        %1059 = vmatpush1.msra.mxu0 0.0
        %1060 = vmatprep.subr.mxu0 0.0
        %1061 = vmatpush1.msra.mxu0 0.0
        %1062 = vmatprep.subr.mxu0 0.0
        %1063 = vmatpush1.msra.mxu0 0.0
        %1064 = vmatprep.subr.mxu0 0.0
        %1065 = vmatpush1.msra.mxu0 0.0
        %1066 = vmatprep.subr.mxu0 0.0
        %1067 = vmatpush1.msra.mxu0 0.0
        %1068 = vmatprep.subr.mxu0 0.0
        %1069 = vmatpush1.msra.mxu0 0.0
        %1070 = vmatprep.subr.mxu0 0.0
        %1071 = vmatpush1.msra.mxu0 0.0
        %1072 = vmatprep.subr.mxu0 0.0
        %1073 = vmatpush1.msra.mxu0 0.0
        %1074 = vmatprep.subr.mxu0 0.0
        %1075 = vmatpush1.msra.mxu0 0.0
        %1076 = vmatprep.subr.mxu0 0.0
        %1077 = vmatpush1.msra.mxu0 0.0
        %1078 = vmatprep.subr.mxu0 0.0
        %1079 = vmatpush1.msra.mxu0 0.0
        %1080 = vmatprep.subr.mxu0 0.0
        %1081 = vmatpush1.msra.mxu0 0.0
        %1082 = vmatprep.subr.mxu0 0.0
        %1083 = vmatpush1.msra.mxu0 0.0
        %1084 = vmatprep.mubr.f32.mxu0 0.0
        %1085 = vmatmul.mubr.f32.gmra.mrb[0].mxu0 %v1018
        %v1086 = vpop.f32.mrb[0].mxu0
        %v1087 = vadd.f32 0.0, %v1086
        %v1088 = vpop.f32.mrb[0].mxu0
        %1089 = vdwg.mxu0
        %1090 = vrot.lane.b32.xlu0 %v590, 104
        %v1091 = vpop.permute.xlu0 %1090
        %1092 = vrot.lane.b32.xlu0 %v587, 72
        %v1093 = vpop.permute.xlu0 %1092
        %v1094 = vsel %vm594, %v1091, 0
        %v1096 = vsel %vm594, %v1093, 0
        %1098 = vmatprep.subr.mxu0 0.0
        %1099 = vmatpush1.xpose.msra.mxu0 %v1096
        %1100 = vmatprep.subr.mxu0 0.0
        %1101 = vmatpush1.xpose.msra.mxu0 0.0
        %1102 = vmatprep.subr.mxu0 0.0
        %1103 = vmatpush1.xpose.msra.mxu0 0.0
        %1104 = vmatprep.subr.mxu0 0.0
        %1105 = vmatpush1.xpose.msra.mxu0 0.0
        %1106 = vmatprep.subr.mxu0 0.0
        %1107 = vmatpush1.xpose.msra.mxu0 0.0
        %1108 = vmatprep.subr.mxu0 0.0
        %1109 = vmatpush1.xpose.msra.mxu0 0.0
        %1110 = vmatprep.subr.mxu0 0.0
        %1111 = vmatpush1.xpose.msra.mxu0 0.0
        %1112 = vmatprep.subr.mxu0 0.0
        %1113 = vmatpush1.xpose.msra.mxu0 0.0
        %1114 = vmatprep.subr.mxu0 0.0
        %1115 = vmatpush1.xpose.msra.mxu0 0.0
        %1116 = vmatprep.subr.mxu0 0.0
        %1117 = vmatpush1.xpose.msra.mxu0 0.0
        %1118 = vmatprep.subr.mxu0 0.0
        %1119 = vmatpush1.xpose.msra.mxu0 0.0
        %1120 = vmatprep.subr.mxu0 0.0
        %1121 = vmatpush1.xpose.msra.mxu0 0.0
        %1122 = vmatprep.subr.mxu0 0.0
        %1123 = vmatpush1.xpose.msra.mxu0 0.0
        %1124 = vmatprep.subr.mxu0 0.0
        %1125 = vmatpush1.xpose.msra.mxu0 0.0
        %1126 = vmatprep.subr.mxu0 0.0
        %1127 = vmatpush1.xpose.msra.mxu0 0.0
        %1128 = vmatprep.subr.mxu0 0.0
        %1129 = vmatpush1.xpose.msra.mxu0 0.0
        %1130 = vmatprep.subr.mxu0 0.0
        %1131 = vmatpush1.xpose.msra.mxu0 0.0
        %1132 = vmatprep.subr.mxu0 0.0
        %1133 = vmatpush1.xpose.msra.mxu0 0.0
        %1134 = vmatprep.subr.mxu0 0.0
        %1135 = vmatpush1.xpose.msra.mxu0 0.0
        %1136 = vmatprep.subr.mxu0 0.0
        %1137 = vmatpush1.xpose.msra.mxu0 0.0
        %1138 = vmatprep.subr.mxu0 0.0
        %1139 = vmatpush1.xpose.msra.mxu0 0.0
        %1140 = vmatprep.subr.mxu0 0.0
        %1141 = vmatpush1.xpose.msra.mxu0 0.0
        %1142 = vmatprep.subr.mxu0 0.0
        %1143 = vmatpush1.xpose.msra.mxu0 0.0
        %1144 = vmatprep.subr.mxu0 0.0
        %1145 = vmatpush1.xpose.msra.mxu0 0.0
        %1146 = vmatprep.subr.mxu0 0.0
        %1147 = vmatpush1.xpose.msra.mxu0 0.0
        %1148 = vmatprep.subr.mxu0 0.0
        %1149 = vmatpush1.xpose.msra.mxu0 0.0
        %1150 = vmatprep.subr.mxu0 0.0
        %1151 = vmatpush1.xpose.msra.mxu0 0.0
        %1152 = vmatprep.subr.mxu0 0.0
        %1153 = vmatpush1.xpose.msra.mxu0 0.0
        %1154 = vmatprep.subr.mxu0 0.0
        %1155 = vmatpush1.xpose.msra.mxu0 0.0
        %1156 = vmatprep.subr.mxu0 0.0
        %1157 = vmatpush1.xpose.msra.mxu0 0.0
        %1158 = vmatprep.subr.mxu0 0.0
        %1159 = vmatpush1.xpose.msra.mxu0 0.0
        %1160 = vmatprep.subr.mxu0 0.0
        %1161 = vmatpush1.xpose.msra.mxu0 0.0
        %1162 = vmatprep.mubr.f32.mxu0 0.0
        %1163 = vmatmul.mubr.f32.gmra.mrb[0].mxu0 %v1094
        %v1164 = vpop.f32.mrb[0].mxu0
        %v1165 = vadd.f32 0.0, %v1164
        %v1166 = vpop.f32.mrb[0].mxu0
        %1167 = vdwg.mxu0
        %v1168 = vsel %vm594, %v1165, -inf
        %1169 = vmax.xlane.f32.xlu0 %v1168
        %v1170 = vpop.xlane.xlu0 %1169
        %v1171 = vsub.f32 %v1165, %v1170
        %v1172 = vmul.f32 %v1171, 1.442695
        %v1173 = vpow.pop %v1172
        %v1174 = vsel %vm594, %v1173, 0.0
        %1175 = vadd.xlane.f32.xlu0 %v1174
        %v1176 = vpop.xlane.xlu0 %1175
        %v1177 = vrcp.pop %v1176
        %v1178 = vmul.f32 %v1173, %v1177
        %v1179 = vadd.f32 %v1013, %v1178
        %1180 = vrot.lane.b32.xlu0 %v587, 40
        %v1181 = vpop.permute.xlu0 %1180
        %v1184 = vsel %vm594, %v1178, 0
        %1186 = vmatprep.subr.mxu0 0.0
        %1187 = vmatpush1.msra.mxu0 %v1181
        %1188 = vmatprep.subr.mxu0 0.0
        %1189 = vmatpush1.msra.mxu0 0.0
        %1190 = vmatprep.subr.mxu0 0.0
        %1191 = vmatpush1.msra.mxu0 0.0
        %1192 = vmatprep.subr.mxu0 0.0
        %1193 = vmatpush1.msra.mxu0 0.0
        %1194 = vmatprep.subr.mxu0 0.0
        %1195 = vmatpush1.msra.mxu0 0.0
        %1196 = vmatprep.subr.mxu0 0.0
        %1197 = vmatpush1.msra.mxu0 0.0
        %1198 = vmatprep.subr.mxu0 0.0
        %1199 = vmatpush1.msra.mxu0 0.0
        %1200 = vmatprep.subr.mxu0 0.0
        %1201 = vmatpush1.msra.mxu0 0.0
        %1202 = vmatprep.subr.mxu0 0.0
        %1203 = vmatpush1.msra.mxu0 0.0
        %1204 = vmatprep.subr.mxu0 0.0
        %1205 = vmatpush1.msra.mxu0 0.0
        %1206 = vmatprep.subr.mxu0 0.0
        %1207 = vmatpush1.msra.mxu0 0.0
        %1208 = vmatprep.subr.mxu0 0.0
        %1209 = vmatpush1.msra.mxu0 0.0
        %1210 = vmatprep.subr.mxu0 0.0
        %1211 = vmatpush1.msra.mxu0 0.0
        %1212 = vmatprep.subr.mxu0 0.0
        %1213 = vmatpush1.msra.mxu0 0.0
        %1214 = vmatprep.subr.mxu0 0.0
        %1215 = vmatpush1.msra.mxu0 0.0
        %1216 = vmatprep.subr.mxu0 0.0
        %1217 = vmatpush1.msra.mxu0 0.0
        %1218 = vmatprep.subr.mxu0 0.0
        %1219 = vmatpush1.msra.mxu0 0.0
        %1220 = vmatprep.subr.mxu0 0.0
        %1221 = vmatpush1.msra.mxu0 0.0
        %1222 = vmatprep.subr.mxu0 0.0
        %1223 = vmatpush1.msra.mxu0 0.0
        %1224 = vmatprep.subr.mxu0 0.0
        %1225 = vmatpush1.msra.mxu0 0.0
        %1226 = vmatprep.subr.mxu0 0.0
        %1227 = vmatpush1.msra.mxu0 0.0
        %1228 = vmatprep.subr.mxu0 0.0
        %1229 = vmatpush1.msra.mxu0 0.0
        %1230 = vmatprep.subr.mxu0 0.0
        %1231 = vmatpush1.msra.mxu0 0.0
        %1232 = vmatprep.subr.mxu0 0.0
        %1233 = vmatpush1.msra.mxu0 0.0
        %1234 = vmatprep.subr.mxu0 0.0
        %1235 = vmatpush1.msra.mxu0 0.0
        %1236 = vmatprep.subr.mxu0 0.0
        %1237 = vmatpush1.msra.mxu0 0.0
        %1238 = vmatprep.subr.mxu0 0.0
        %1239 = vmatpush1.msra.mxu0 0.0
        %1240 = vmatprep.subr.mxu0 0.0
        %1241 = vmatpush1.msra.mxu0 0.0
        %1242 = vmatprep.subr.mxu0 0.0
        %1243 = vmatpush1.msra.mxu0 0.0
        %1244 = vmatprep.subr.mxu0 0.0
        %1245 = vmatpush1.msra.mxu0 0.0
        %1246 = vmatprep.subr.mxu0 0.0
        %1247 = vmatpush1.msra.mxu0 0.0
        %1248 = vmatprep.subr.mxu0 0.0
        %1249 = vmatpush1.msra.mxu0 0.0
        %1250 = vmatprep.mubr.f32.mxu0 0.0
        %1251 = vmatmul.mubr.f32.gmra.mrb[0].mxu0 %v1184
        %v1252 = vpop.f32.mrb[0].mxu0
        %v1253 = vadd.f32 0.0, %v1252
        %v1254 = vpop.f32.mrb[0].mxu0
        %1255 = vdwg.mxu0
        %1257 = vrot.lane.b32.xlu0 %v921, 8
        %v1258 = vpop.permute.xlu0 %1257
        %1261 = vrot.lane.b32.xlu0 %v1087, 16
        %v1262 = vpop.permute.xlu0 %1261
        %1265 = vrot.lane.b32.xlu0 %v1253, 24
        %v1266 = vpop.permute.xlu0 %1265
        %v1268 = vsel %vm594, %v755, %v1258
        %vm1269 = vcmask 130048
        %v1270 = vsel %vm1269, %v1268, %v1262
        %vm1271 = vcmask 195584
        %v1272 = vsel %vm1271, %v1270, %v1266
        %v1273 = vld [vmem:[%s5] sm:$0xff]
        %v1274 = vld [vmem:[%s5 + $0x8] sm:$0xff]
        %v1275 = vld [vmem:[%s5 + $0x10] sm:$0xff]
        %v1276 = vld [vmem:[%s5 + $0x18] sm:$0xff]
        %v1277 = vld [vmem:[%s6] sm:$0x1]
        %v1279 = vlaneseq
        %v1280 = vshrl.u32 %v1279, 7
        %v1281 = vsub.s32 0, %v1280
        %v1282 = vrot.slane %v1277, %v1281
        %v1285 = vsel %vm475, %v1272, 0
        %1287 = vmatprep.subr.mxu0 0.0
        %1288 = vmatpush1.msra.mxu0 %v1273
        %1289 = vmatprep.subr.mxu0 0.0
        %1290 = vmatpush1.msra.mxu0 %v1274
        %1291 = vmatprep.subr.mxu0 0.0
        %1292 = vmatpush1.msra.mxu0 %v1275
        %1293 = vmatprep.subr.mxu0 0.0
        %1294 = vmatpush1.msra.mxu0 %v1276
        %1295 = vmatprep.subr.mxu0 0.0
        %1296 = vmatpush1.msra.mxu0 0.0
        %1297 = vmatprep.subr.mxu0 0.0
        %1298 = vmatpush1.msra.mxu0 0.0
        %1299 = vmatprep.subr.mxu0 0.0
        %1300 = vmatpush1.msra.mxu0 0.0
        %1301 = vmatprep.subr.mxu0 0.0
        %1302 = vmatpush1.msra.mxu0 0.0
        %1303 = vmatprep.subr.mxu0 0.0
        %1304 = vmatpush1.msra.mxu0 0.0
        %1305 = vmatprep.subr.mxu0 0.0
        %1306 = vmatpush1.msra.mxu0 0.0
        %1307 = vmatprep.subr.mxu0 0.0
        %1308 = vmatpush1.msra.mxu0 0.0
        %1309 = vmatprep.subr.mxu0 0.0
        %1310 = vmatpush1.msra.mxu0 0.0
        %1311 = vmatprep.subr.mxu0 0.0
        %1312 = vmatpush1.msra.mxu0 0.0
        %1313 = vmatprep.subr.mxu0 0.0
        %1314 = vmatpush1.msra.mxu0 0.0
        %1315 = vmatprep.subr.mxu0 0.0
        %1316 = vmatpush1.msra.mxu0 0.0
        %1317 = vmatprep.subr.mxu0 0.0
        %1318 = vmatpush1.msra.mxu0 0.0
        %1319 = vmatprep.subr.mxu0 0.0
        %1320 = vmatpush1.msra.mxu0 0.0
        %1321 = vmatprep.subr.mxu0 0.0
        %1322 = vmatpush1.msra.mxu0 0.0
        %1323 = vmatprep.subr.mxu0 0.0
        %1324 = vmatpush1.msra.mxu0 0.0
        %1325 = vmatprep.subr.mxu0 0.0
        %1326 = vmatpush1.msra.mxu0 0.0
        %1327 = vmatprep.subr.mxu0 0.0
        %1328 = vmatpush1.msra.mxu0 0.0
        %1329 = vmatprep.subr.mxu0 0.0
        %1330 = vmatpush1.msra.mxu0 0.0
        %1331 = vmatprep.subr.mxu0 0.0
        %1332 = vmatpush1.msra.mxu0 0.0
        %1333 = vmatprep.subr.mxu0 0.0
        %1334 = vmatpush1.msra.mxu0 0.0
        %1335 = vmatprep.subr.mxu0 0.0
        %1336 = vmatpush1.msra.mxu0 0.0
        %1337 = vmatprep.subr.mxu0 0.0
        %1338 = vmatpush1.msra.mxu0 0.0
        %1339 = vmatprep.subr.mxu0 0.0
        %1340 = vmatpush1.msra.mxu0 0.0
        %1341 = vmatprep.subr.mxu0 0.0
        %1342 = vmatpush1.msra.mxu0 0.0
        %1343 = vmatprep.subr.mxu0 0.0
        %1344 = vmatpush1.msra.mxu0 0.0
        %1345 = vmatprep.subr.mxu0 0.0
        %1346 = vmatpush1.msra.mxu0 0.0
        %1347 = vmatprep.subr.mxu0 0.0
        %1348 = vmatpush1.msra.mxu0 0.0
        %1349 = vmatprep.subr.mxu0 0.0
        %1350 = vmatpush1.msra.mxu0 0.0
        %1351 = vmatprep.mubr.f32.mxu0 0.0
        %1352 = vmatmul.mubr.f32.gmra.mrb[0].mxu0 %v1285
        %v1353 = vpop.f32.mrb[0].mxu0
        %v1354 = vadd.f32 %v1282, %v1353
        %v1355 = vpop.f32.mrb[0].mxu0
        %1356 = vdwg.mxu0
        %v1357 = vadd.f32 %v474, %v1354
        %v1358 = vsel %vm475, %v1357, 0.0
        %1359 = vadd.xlane.f32.xlu0 %v1358
        %v1360 = vpop.xlane.xlu0 %1359
        %v1361 = vmul.f32 %v1360, %v479
        %v1362 = vsub.f32 %v1357, %v1361
        %v1363 = vmul.f32 %v1362, %v1362
        %v1364 = vsel %vm475, %v1363, 0.0
        %1365 = vadd.xlane.f32.xlu0 %v1364
        %v1366 = vpop.xlane.xlu0 %1365
        %v1367 = vmul.f32 %v1366, %v479
        %v1368 = vadd.f32 %v1367, 1e-05
        %v1369 = vrsqrt.pop %v1368
        %v1370 = vmul.f32 %v1362, %v1369
        %v1371 = vld [vmem:[%s7] sm:$0x1]
        %v1373 = vlaneseq
        %v1374 = vshrl.u32 %v1373, 7
        %v1375 = vsub.s32 0, %v1374
        %v1376 = vrot.slane %v1371, %v1375
        %v1378 = vmul.f32 %v1370, %v1376
        %v1379 = vld [vmem:[%s8] sm:$0x1]
        %v1381 = vlaneseq
        %v1382 = vshrl.u32 %v1381, 7
        %v1383 = vsub.s32 0, %v1382
        %v1384 = vrot.slane %v1379, %v1383
        %v1386 = vadd.f32 %v1378, %v1384
        %v1387 = vld [vmem:[%s9] sm:$0xff]
        %v1388 = vld [vmem:[%s9 + $0x8] sm:$0xff]
        %v1389 = vld [vmem:[%s9 + $0x10] sm:$0xff]
        %v1390 = vld [vmem:[%s9 + $0x18] sm:$0xff]
        %v1391 = vld [vmem:[%s10] sm:$0x1]
        %v1393 = vlaneseq
        %v1394 = vshrl.u32 %v1393, 7
        %v1395 = vsub.s32 0, %v1394
        %v1396 = vrot.slane %v1391, %v1395
        %v1399 = vsel %vm475, %v1386, 0
        %1401 = vmatprep.subr.mxu0 0.0
        %1402 = vmatpush1.msra.mxu0 %v1387
        %1403 = vmatprep.subr.mxu0 0.0
        %1404 = vmatpush1.msra.mxu0 %v1388
        %1405 = vmatprep.subr.mxu0 0.0
        %1406 = vmatpush1.msra.mxu0 %v1389
        %1407 = vmatprep.subr.mxu0 0.0
        %1408 = vmatpush1.msra.mxu0 %v1390
        %1409 = vmatprep.subr.mxu0 0.0
        %1410 = vmatpush1.msra.mxu0 0.0
        %1411 = vmatprep.subr.mxu0 0.0
        %1412 = vmatpush1.msra.mxu0 0.0
        %1413 = vmatprep.subr.mxu0 0.0
        %1414 = vmatpush1.msra.mxu0 0.0
        %1415 = vmatprep.subr.mxu0 0.0
        %1416 = vmatpush1.msra.mxu0 0.0
        %1417 = vmatprep.subr.mxu0 0.0
        %1418 = vmatpush1.msra.mxu0 0.0
        %1419 = vmatprep.subr.mxu0 0.0
        %1420 = vmatpush1.msra.mxu0 0.0
        %1421 = vmatprep.subr.mxu0 0.0
        %1422 = vmatpush1.msra.mxu0 0.0
        %1423 = vmatprep.subr.mxu0 0.0
        %1424 = vmatpush1.msra.mxu0 0.0
        %1425 = vmatprep.subr.mxu0 0.0
        %1426 = vmatpush1.msra.mxu0 0.0
        %1427 = vmatprep.subr.mxu0 0.0
        %1428 = vmatpush1.msra.mxu0 0.0
        %1429 = vmatprep.subr.mxu0 0.0
        %1430 = vmatpush1.msra.mxu0 0.0
        %1431 = vmatprep.subr.mxu0 0.0
        %1432 = vmatpush1.msra.mxu0 0.0
        %1433 = vmatprep.subr.mxu0 0.0
        %1434 = vmatpush1.msra.mxu0 0.0
        %1435 = vmatprep.subr.mxu0 0.0
        %1436 = vmatpush1.msra.mxu0 0.0
        %1437 = vmatprep.subr.mxu0 0.0
        %1438 = vmatpush1.msra.mxu0 0.0
        %1439 = vmatprep.subr.mxu0 0.0
        %1440 = vmatpush1.msra.mxu0 0.0
        %1441 = vmatprep.subr.mxu0 0.0
        %1442 = vmatpush1.msra.mxu0 0.0
        %1443 = vmatprep.subr.mxu0 0.0
        %1444 = vmatpush1.msra.mxu0 0.0
        %1445 = vmatprep.subr.mxu0 0.0
        %1446 = vmatpush1.msra.mxu0 0.0
        %1447 = vmatprep.subr.mxu0 0.0
        %1448 = vmatpush1.msra.mxu0 0.0
        %1449 = vmatprep.subr.mxu0 0.0
        %1450 = vmatpush1.msra.mxu0 0.0
        %1451 = vmatprep.subr.mxu0 0.0
        %1452 = vmatpush1.msra.mxu0 0.0
        %1453 = vmatprep.subr.mxu0 0.0
        %1454 = vmatpush1.msra.mxu0 0.0
        %1455 = vmatprep.subr.mxu0 0.0
        %1456 = vmatpush1.msra.mxu0 0.0
        %1457 = vmatprep.subr.mxu0 0.0
        %1458 = vmatpush1.msra.mxu0 0.0
        %1459 = vmatprep.subr.mxu0 0.0
        %1460 = vmatpush1.msra.mxu0 0.0
        %1461 = vmatprep.subr.mxu0 0.0
        %1462 = vmatpush1.msra.mxu0 0.0
        %1463 = vmatprep.subr.mxu0 0.0
        %1464 = vmatpush1.msra.mxu0 0.0
        %1465 = vmatprep.mubr.f32.mxu0 0.0
        %1466 = vmatmul.mubr.f32.gmra.mrb[0].mxu0 %v1399
        %v1467 = vpop.f32.mrb[0].mxu0
        %v1468 = vadd.f32 %v1396, %v1467
        %v1469 = vpop.f32.mrb[0].mxu0
        %1470 = vdwg.mxu0
        %v1471 = vmul.f32 %v1468, 1.702
        %v1472 = vxor.u32 %v1471, 2147483648
        %v1473 = vmul.f32 %v1472, 1.442695
        %v1474 = vpow.pop %v1473
        %v1475 = vadd.f32 %v1474, 1.0
        %v1476 = vrcp.pop %v1475
        %v1477 = vmul.f32 1.0, %v1476
        %v1478 = vmul.f32 %v1468, %v1477
        %v1479 = vld [vmem:[%s11] sm:$0xff]
        %v1480 = vld [vmem:[%s11 + $0x8] sm:$0xff]
        %v1481 = vld [vmem:[%s11 + $0x10] sm:$0xff]
        %v1482 = vld [vmem:[%s11 + $0x18] sm:$0xff]
        %v1483 = vld [vmem:[%s11 + $0x20] sm:$0xff]
        %v1484 = vld [vmem:[%s11 + $0x28] sm:$0xff]
        %v1485 = vld [vmem:[%s11 + $0x30] sm:$0xff]
        %v1486 = vld [vmem:[%s11 + $0x38] sm:$0xff]
        %v1487 = vld [vmem:[%s11 + $0x40] sm:$0xff]
        %v1488 = vld [vmem:[%s11 + $0x48] sm:$0xff]
        %v1489 = vld [vmem:[%s11 + $0x50] sm:$0xff]
        %v1490 = vld [vmem:[%s11 + $0x58] sm:$0xff]
        %v1491 = vld [vmem:[%s11 + $0x60] sm:$0xff]
        %v1492 = vld [vmem:[%s11 + $0x68] sm:$0xff]
        %v1493 = vld [vmem:[%s11 + $0x70] sm:$0xff]
        %v1494 = vld [vmem:[%s11 + $0x78] sm:$0xff]
        %v1495 = vld [vmem:[%s12] sm:$0x1]
        %v1497 = vlaneseq
        %v1498 = vshrl.u32 %v1497, 7
        %v1499 = vsub.s32 0, %v1498
        %v1500 = vrot.slane %v1495, %v1499
        %1502 = vmatprep.subr.mxu0 0.0
        %1503 = vmatpush1.msra.mxu0 %v1479
        %1504 = vmatprep.subr.mxu0 0.0
        %1505 = vmatpush1.msra.mxu0 %v1480
        %1506 = vmatprep.subr.mxu0 0.0
        %1507 = vmatpush1.msra.mxu0 %v1481
        %1508 = vmatprep.subr.mxu0 0.0
        %1509 = vmatpush1.msra.mxu0 %v1482
        %1510 = vmatprep.subr.mxu0 0.0
        %1511 = vmatpush1.msra.mxu0 %v1483
        %1512 = vmatprep.subr.mxu0 0.0
        %1513 = vmatpush1.msra.mxu0 %v1484
        %1514 = vmatprep.subr.mxu0 0.0
        %1515 = vmatpush1.msra.mxu0 %v1485
        %1516 = vmatprep.subr.mxu0 0.0
        %1517 = vmatpush1.msra.mxu0 %v1486
        %1518 = vmatprep.subr.mxu0 0.0
        %1519 = vmatpush1.msra.mxu0 %v1487
        %1520 = vmatprep.subr.mxu0 0.0
        %1521 = vmatpush1.msra.mxu0 %v1488
        %1522 = vmatprep.subr.mxu0 0.0
        %1523 = vmatpush1.msra.mxu0 %v1489
        %1524 = vmatprep.subr.mxu0 0.0
        %1525 = vmatpush1.msra.mxu0 %v1490
        %1526 = vmatprep.subr.mxu0 0.0
        %1527 = vmatpush1.msra.mxu0 %v1491
        %1528 = vmatprep.subr.mxu0 0.0
        %1529 = vmatpush1.msra.mxu0 %v1492
        %1530 = vmatprep.subr.mxu0 0.0
        %1531 = vmatpush1.msra.mxu0 %v1493
        %1532 = vmatprep.subr.mxu0 0.0
        %1533 = vmatpush1.msra.mxu0 %v1494
        %1534 = vmatprep.subr.mxu0 0.0
        %1535 = vmatpush1.msra.mxu0 0.0
        %1536 = vmatprep.subr.mxu0 0.0
        %1537 = vmatpush1.msra.mxu0 0.0
        %1538 = vmatprep.subr.mxu0 0.0
        %1539 = vmatpush1.msra.mxu0 0.0
        %1540 = vmatprep.subr.mxu0 0.0
        %1541 = vmatpush1.msra.mxu0 0.0
        %1542 = vmatprep.subr.mxu0 0.0
        %1543 = vmatpush1.msra.mxu0 0.0
        %1544 = vmatprep.subr.mxu0 0.0
        %1545 = vmatpush1.msra.mxu0 0.0
        %1546 = vmatprep.subr.mxu0 0.0
        %1547 = vmatpush1.msra.mxu0 0.0
        %1548 = vmatprep.subr.mxu0 0.0
        %1549 = vmatpush1.msra.mxu0 0.0
        %1550 = vmatprep.subr.mxu0 0.0
        %1551 = vmatpush1.msra.mxu0 0.0
        %1552 = vmatprep.subr.mxu0 0.0
        %1553 = vmatpush1.msra.mxu0 0.0
        %1554 = vmatprep.subr.mxu0 0.0
        %1555 = vmatpush1.msra.mxu0 0.0
        %1556 = vmatprep.subr.mxu0 0.0
        %1557 = vmatpush1.msra.mxu0 0.0
        %1558 = vmatprep.subr.mxu0 0.0
        %1559 = vmatpush1.msra.mxu0 0.0
        %1560 = vmatprep.subr.mxu0 0.0
        %1561 = vmatpush1.msra.mxu0 0.0
        %1562 = vmatprep.subr.mxu0 0.0
        %1563 = vmatpush1.msra.mxu0 0.0
        %1564 = vmatprep.subr.mxu0 0.0
        %1565 = vmatpush1.msra.mxu0 0.0
        %1566 = vmatprep.mubr.f32.mxu0 0.0
        %1567 = vmatmul.mubr.f32.gmra.mrb[0].mxu0 %v1478
        %v1568 = vpop.f32.mrb[0].mxu0
        %v1569 = vadd.f32 %v1500, %v1568
        %v1570 = vpop.f32.mrb[0].mxu0
        %1571 = vdwg.mxu0
        %v1572 = vadd.f32 %v1357, %v1569
        %1573 = vst.msk [vmem:[%s462] sm:$0xff] %vm475, %v1572
        %v1574 = vmul.f32 %v1179, 0.25
        %1575 = vst.msk [vmem:[%s469] sm:$0xff] %vm594, %v1574
        %s1576 = sand.u32 %s318, 1
        %s1577 = scalar_lea.sflag [#allocation3], %s1576
        %s1578 = sand.u32 %s318, 1
        %s1579 = smul.addr %s1578, 8
        %s1580 = scalar_lea.vmem [#allocation2], %s1579
        %s1581 = sand.u32 %s344, 1
        %s1582 = scalar_lea.sflag [#allocation5], %s1581
        %s1583 = sand.u32 %s344, 1
        %s1584 = smul.addr %s1583, 8
        %s1585 = scalar_lea.vmem [#allocation4], %s1584
        // Predicated region
        $region73: #{tpu_custom_call.1} parent=71 // pred_check
          %p1586 = pneg %p328
        $region74: #{tpu_custom_call.1} parent=71 // pred_check_branch
          %1588 = sbr.rel (%p1586) target = $region76
        $region75: #{tpu_custom_call.1} parent=71 // pred_region
          %s1590 = ssub.s32 128, 128
          %1591 = vsyncadd %s1577, %s1590
          %s1592 = smul.addr %s32, 128
          %s1593 = scalar_lea.hbm %s13, %s1592
          %s1595 = sshll.u32 %s1580, 4
          %s1596 = int_to_ptr.vmem [resolvable:$true] %s1595
          %1598 = dma.vmem_to_hbm [thread:$0]  %s1596, 128, %s1593, %s1577
        $region76: #{tpu_custom_call.1} parent=71 // pred_fallthru
          _
        // Predicated region
        $region77: #{tpu_custom_call.1} parent=71 // pred_check
          %p1599 = pneg %p354
        $region78: #{tpu_custom_call.1} parent=71 // pred_check_branch
          %1601 = sbr.rel (%p1599) target = $region80
        $region79: #{tpu_custom_call.1} parent=71 // pred_region
          %s1603 = ssub.s32 128, 128
          %1604 = vsyncadd %s1582, %s1603
          %s1605 = smul.addr %s32, 128
          %s1606 = scalar_lea.hbm %s14, %s1605
          %s1608 = sshll.u32 %s1585, 4
          %s1609 = int_to_ptr.vmem [resolvable:$true] %s1608
          %1611 = dma.vmem_to_hbm [thread:$0]  %s1609, 128, %s1606, %s1582
        $region80: #{tpu_custom_call.1} parent=71 // pred_fallthru
          _
      $region72: #{tpu_custom_call.1} parent=5 // pred_fallthru
        _
      %p1612 = scmp.le.s32.totalorder 2, %s27
      // Predicated region
      $region81: #{tpu_custom_call.1} parent=5 // pred_check
        %p1613 = pneg %p1612
      $region82: #{tpu_custom_call.1} parent=5 // pred_check_branch
        %1615 = sbr.rel (%p1613) target = $region84
      $region83: #{tpu_custom_call.1} parent=5 // pred_region
        %s1616 = ssub.s32 %s27, 2
        // Predicated region
        $region85: #{tpu_custom_call.1} parent=83 // pred_check
          %p1617 = pneg %p334
        $region86: #{tpu_custom_call.1} parent=83 // pred_check_branch
          %1619 = sbr.rel (%p1617) target = $region88
        $region87: #{tpu_custom_call.1} parent=83 // pred_region
          %s1620 = sand.u32 %s319, 1
          %s1621 = scalar_lea.sflag [#allocation3], %s1620
          %s1622 = sand.u32 %s319, 1
          %s1623 = smul.addr %s1622, 8
          %s1624 = scalar_lea.vmem [#allocation2], %s1623
          %1625 = dma.done %s1621, 128
        $region88: #{tpu_custom_call.1} parent=83 // pred_fallthru
          _
        // Predicated region
        $region89: #{tpu_custom_call.1} parent=83 // pred_check
          %p1626 = pneg %p360
        $region90: #{tpu_custom_call.1} parent=83 // pred_check_branch
          %1628 = sbr.rel (%p1626) target = $region92
        $region91: #{tpu_custom_call.1} parent=83 // pred_region
          %s1629 = sand.u32 %s345, 1
          %s1630 = scalar_lea.sflag [#allocation5], %s1629
          %s1631 = sand.u32 %s345, 1
          %s1632 = smul.addr %s1631, 8
          %s1633 = scalar_lea.vmem [#allocation4], %s1632
          %1634 = dma.done %s1630, 128
        $region92: #{tpu_custom_call.1} parent=83 // pred_fallthru
          _
      $region84: #{tpu_custom_call.1} parent=5 // pred_fallthru
        _
    $region6: #{tpu_custom_call.1} parent=1 // loop_footer
      %s31 = sadd.s32 1, %s27
    $region7: #{tpu_custom_call.1} parent=1 // loop_footer_branch
      %26 = sbr.rel target = $region3
    $region8: #{tpu_custom_call.1} parent=1 // loop_exit
      _
    %1635 = vsyncpa [#allocation3], 1
    %s1636 = scalar_lea.sflag [#allocation3], 1
    %1637 = vsyncpa %s1636, 1
    %1638 = vsyncpa [#allocation5], 1
    %s1639 = scalar_lea.sflag [#allocation5], 1
    %1640 = vsyncpa %s1639, 1

</llo_original>
